<compile_context>
chip_gen: v6e
topology: v6e:2x2x1
jax: 0.10.0
libtpu: 0.0.40
codegen_flags: <defaults>
</compile_context>

<pallas_src>
import functools
import math

import jax
import jax.numpy as jnp
import numpy as np
from jax import lax
from jax.experimental import pallas as pl
from jax.experimental.pallas import tpu as pltpu

_SUB_ROWS = 16         # sublane rows per inner-loop step (bf16-tile aligned)
_MAX_ROWS_TILE = 512   # upper bound for auto tile selection


def _round_up(a, b):
    return ((a + b - 1) // b) * b


def _pe_kernel(x_ref, o_ref, *, freqs, logscale, span):
    """x_ref: (rows_tile, lanes) input scalars (lane-dense).
       o_ref: (1 + 2F, rows_tile, lanes) feature-major output."""
    rows_tile = x_ref.shape[0]
    n_sub = rows_tile // _SUB_ROWS
    nf = len(freqs)
    out_dtype = o_ref.dtype

    def body(i, carry):
        r0 = pl.multiple_of(i * _SUB_ROWS, _SUB_ROWS)
        rs = pl.ds(r0, _SUB_ROWS)
        x = x_ref[rs, :].astype(jnp.float32)

        # identity feature
        o_ref[0, rs, :] = x.astype(out_dtype)

        if logscale:
            s = None
            c = None
            for k in range(nf):
                if k % span == 0:
                    # anchor: exact power-of-two scaling, 2 transcendentals
                    xk = x if freqs[k] == 1.0 else freqs[k] * x
                    s = jnp.sin(xk)
                    c = jnp.cos(xk)
                o_ref[1 + 2 * k, rs, :] = s.astype(out_dtype)
                o_ref[2 + 2 * k, rs, :] = c.astype(out_dtype)
                if (k + 1 < nf) and ((k + 1) % span != 0):
                    # double-angle recurrence (VPU only): 4 ops per octave
                    u = 2.0 * s
                    s, c = u * c, 1.0 - u * s
        else:
            # linspace frequencies have a constant step Delta -> angle-addition
            # recurrence: sin((f+D)x) = s*cD + c*sD ; cos((f+D)x) = c*cD - s*sD
            sd = None
            cd = None
            if nf > 1 and span > 1:
                xd = (freqs[1] - freqs[0]) * x
                sd = jnp.sin(xd)
                cd = jnp.cos(xd)
            s = None
            c = None
            for k in range(nf):
                if k % span == 0:
                    xk = x if freqs[k] == 1.0 else freqs[k] * x
                    s = jnp.sin(xk)
                    c = jnp.cos(xk)
                o_ref[1 + 2 * k, rs, :] = s.astype(out_dtype)
                o_ref[2 + 2 * k, rs, :] = c.astype(out_dtype)
                if (k + 1 < nf) and ((k + 1) % span != 0):
                    s, c = s * cd + c * sd, c * cd - s * sd
        return carry

    lax.fori_loop(0, n_sub, body, 0)


def nerf_embedding(x, num_freqs, logscale=True, *, out_dtype=None,
                   layout="interleaved", rows_tile=None, lanes=512,
                   recurrence_span=4):
    """Pallas equivalent of Embedding(num_freqs, logscale).forward(x).

    layout="interleaved" (default): channels-last, identical to the PyTorch
        module:  out[..., j*C + c] = feature_j(x[..., c]).
    layout="feature_major": shape (1+2F, *x.shape); skips the wrapper-side
        transpose (~2x output HBM traffic) for consumers that can accept it.
    out_dtype: output dtype (default x.dtype); bf16 halves the writeback.
    recurrence_span: re-anchor sin/cos every N frequencies (4 default; v7x may
        use 5 if the downstream tolerance allows).
    """
    x = jnp.asarray(x)
    if x.ndim < 1:
        raise ValueError("input must have at least a channel dimension")
    if lanes % 128 != 0:
        raise ValueError("lanes must be a multiple of 128")
    if rows_tile is not None and (rows_tile % _SUB_ROWS != 0 or rows_tile <= 0):
        raise ValueError(f"rows_tile must be a positive multiple of {_SUB_ROWS}")
    if layout not in ("interleaved", "feature_major"):
        raise ValueError("layout must be 'interleaved' or 'feature_major'")
    if recurrence_span < 1:
        raise ValueError("recurrence_span must be >= 1")

    orig_shape = x.shape
    out_dtype = jnp.dtype(out_dtype if out_dtype is not None else x.dtype)
    C = orig_shape[-1]
    n_feat = 1 + 2 * num_freqs

    if logscale:
        freqs = tuple(float(2.0 ** k) for k in range(num_freqs))
    else:
        freqs = tuple(float(f) for f in
                      np.linspace(1.0, 2.0 ** (num_freqs - 1), num_freqs))

    # ---- flatten everything to a lane-dense 2-D slab (rows, lanes) -----------
    E = math.prod(orig_shape)
    rows = pl.cdiv(E, lanes)

    # ---- generation-aware tile selection -------------------------------------
    try:
        vmem_phys = int(pltpu.get_tpu_info().vmem_capacity_bytes)
    except Exception:
        vmem_phys = 64 * 2 ** 20          # v7x per-TC (smallest) — safe everywhere
    in_isz = jnp.dtype(x.dtype).itemsize
    out_isz = out_dtype.itemsize
    per_row_bytes = lanes * (in_isz + n_feat * out_isz)
    vmem_budget = int(0.45 * vmem_phys)   # double-buffered in+out must fit here
    max_rows_vmem = max(_SUB_ROWS,
                        (vmem_budget // (2 * per_row_bytes)) // _SUB_ROWS * _SUB_ROWS)
    # ensure >= 2 grid steps when there is enough work (v7x has 2 TensorCores)
    half_rows = _round_up(max(pl.cdiv(rows, 2), 1), _SUB_ROWS)
    requested = rows_tile if rows_tile is not None else _MAX_ROWS_TILE
    rows_tile = max(_SUB_ROWS, min(requested, max_rows_vmem, half_rows))

    rows_p = _round_up(max(rows, 1), rows_tile)
    Ep = rows_p * lanes
    x_flat = jnp.ravel(x)                 # keep original dtype; kernel casts on load
    if Ep != E:
        x_flat = jnp.pad(x_flat, (0, Ep - E))
    x2d = x_flat.reshape(rows_p, lanes)

    grid = (rows_p // rows_tile,)

    # vmem limit sized from the actual block bytes (not a fixed 32 MiB cap)
    need = 2 * rows_tile * per_row_bytes
    vmem_limit = int(min(0.7 * vmem_phys, need + max(need // 4, 2 * 2 ** 20)))

    out3 = pl.pallas_call(
        functools.partial(_pe_kernel, freqs=freqs, logscale=logscale,
                          span=recurrence_span),
        out_shape=jax.ShapeDtypeStruct((n_feat, rows_p, lanes), out_dtype),
        grid_spec=pltpu.PrefetchScalarGridSpec(
            num_scalar_prefetch=0,
            grid=grid,
            in_specs=[pl.BlockSpec((rows_tile, lanes), lambda i: (i, 0))],
            out_specs=pl.BlockSpec((n_feat, rows_tile, lanes),
                                   lambda i: (0, i, 0)),
        ),
        compiler_params=pltpu.CompilerParams(
            dimension_semantics=("parallel",),   # shards across v7x's 2 TCs
            vmem_limit_bytes=vmem_limit,
        ),
    )(x2d)

    out_flat = out3.reshape(n_feat, Ep)
    if Ep != E:
        out_flat = out_flat[:, :E]

    if layout == "feature_major":
        # out[j, ..., c] = feature_j(x[..., c]); no channels-last transpose.
        return out_flat.reshape((n_feat,) + orig_shape)

    # Restore channels-last interleaving: out[..., j*C + c] = feature_j(x[..., c])
    # (single full read+write of the output — the dominant extra HBM cost; use
    # layout="feature_major" or fuse into the consumer matmul to avoid it).
    N = E // C
    out = out_flat.reshape(n_feat, N, C)
    out = jnp.transpose(out, (1, 0, 2)).reshape(orig_shape[:-1] + (n_feat * C,))
    return out


def nerf_embedding_ref(x, num_freqs, logscale=True):
    """Pure-JAX reference matching the PyTorch module."""
    x = jnp.asarray(x, jnp.float32)
    if logscale:
        freqs = 2.0 ** np.arange(num_freqs, dtype=np.float32)
    else:
        freqs = np.linspace(1.0, 2.0 ** (num_freqs - 1), num_freqs,
                            dtype=np.float32)
    outs = [x]
    for f in freqs:
        outs.append(jnp.sin(f * x))
        outs.append(jnp.cos(f * x))
    return jnp.concatenate(outs, axis=-1)


if __name__ == "__main__":
    key = jax.random.PRNGKey(0)
    # NeRF-style xyz coordinates: [batch, samples, 3]
    x = jax.random.normal(key, (2, 2048, 3), dtype=jnp.float32)

    # 1) default NeRF xyz encoding (F=10, logscale), auto tile selection
    out = jax.block_until_ready(nerf_embedding(x, num_freqs=10, logscale=True))
    ref = jax.block_until_ready(nerf_embedding_ref(x, num_freqs=10, logscale=True))
    assert out.shape == (2, 2048, 63), out.shape
    np.testing.assert_allclose(np.asarray(out), np.asarray(ref),
                               atol=2e-3, rtol=0)

    # 2) non-logscale path (angle-addition recurrence) + small explicit tiles
    #    to exercise a multi-step grid, F=4
    out2 = jax.block_until_ready(
        nerf_embedding(x, num_freqs=4, logscale=False, rows_tile=16, lanes=128))
    ref2 = jax.block_until_ready(nerf_embedding_ref(x, num_freqs=4, logscale=False))
    assert out2.shape == (2, 2048, 27), out2.shape
    np.testing.assert_allclose(np.asarray(out2), np.asarray(ref2),
                               atol=5e-4, rtol=0)

    # 3) bf16 output (halves HBM writeback) + feature-major layout (skips the
    #    channels-last transpose for consumers that can accept it)
    out3 = jax.block_until_ready(
        nerf_embedding(x, num_freqs=10, logscale=True,
                       out_dtype=jnp.bfloat16, layout="feature_major"))
    assert out3.shape == (21, 2, 2048, 3), out3.shape
    out3_il = np.asarray(
        jnp.transpose(out3.astype(jnp.float32), (1, 2, 0, 3)).reshape(2, 2048, 63))
    np.testing.assert_allclose(out3_il, np.asarray(ref), atol=2e-2, rtol=0)

    print("KERNEL_OK")
</pallas_src>

<mosaic_0001>
module attributes {stable_mosaic.version = 11 : i64} {
  func.func @_pe_kernel(%arg0: i32, %arg1: memref<16x512xf32, #tpu.memory_space<vmem>>, %arg2: memref<21x16x512xf32, #tpu.memory_space<vmem>>) attributes {dimension_semantics = [#tpu.dimension_semantics<parallel>], iteration_bounds = array<i64: 2>, scalar_prefetch = 0 : i64, scratch_operands = 0 : i64, tpu.core_type = #tpu.core_type<tc>, window_params = [{transform_indices = @transform_0, window_bounds = array<i64: 16, 512>}, {transform_indices = @transform_1, window_bounds = array<i64: 21, 16, 512>}]} {
    %c0_i32 = arith.constant 0 : i32
    %c16_i32 = arith.constant 16 : i32
    %0 = arith.muli %c0_i32, %c16_i32 : i32
    %1 = tpu.assume_multiple %0, 16 : i32
    %2 = arith.index_cast %1 : i32 to index
    %c0 = arith.constant 0 : index
    %3 = vector.load %arg1[%2, %c0] : memref<16x512xf32, #tpu.memory_space<vmem>>, vector<16x512xf32>
    %c0_0 = arith.constant 0 : index
    %4 = arith.index_cast %1 : i32 to index
    %c0_1 = arith.constant 0 : index
    %5 = vector.load %arg2[%c0_0, %4, %c0_1] : memref<21x16x512xf32, #tpu.memory_space<vmem>>, vector<1x16x512xf32>
    %6 = vector.shape_cast %5 : vector<1x16x512xf32> to vector<16x512xf32>
    %7 = vector.shape_cast %3 : vector<16x512xf32> to vector<1x16x512xf32>
    tpu.vector_store %arg2[%c0_0, %4, %c0_1], %7 {strides = array<i32>} : memref<21x16x512xf32, #tpu.memory_space<vmem>>, vector<1x16x512xf32>,
    %8 = math.sin %3 : vector<16x512xf32>
    %9 = math.cos %3 : vector<16x512xf32>
    %c1 = arith.constant 1 : index
    %10 = arith.index_cast %1 : i32 to index
    %c0_2 = arith.constant 0 : index
    %11 = vector.load %arg2[%c1, %10, %c0_2] : memref<21x16x512xf32, #tpu.memory_space<vmem>>, vector<1x16x512xf32>
    %12 = vector.shape_cast %11 : vector<1x16x512xf32> to vector<16x512xf32>
    %13 = vector.shape_cast %8 : vector<16x512xf32> to vector<1x16x512xf32>
    tpu.vector_store %arg2[%c1, %10, %c0_2], %13 {strides = array<i32>} : memref<21x16x512xf32, #tpu.memory_space<vmem>>, vector<1x16x512xf32>,
    %c2 = arith.constant 2 : index
    %14 = arith.index_cast %1 : i32 to index
    %c0_3 = arith.constant 0 : index
    %15 = vector.load %arg2[%c2, %14, %c0_3] : memref<21x16x512xf32, #tpu.memory_space<vmem>>, vector<1x16x512xf32>
    %16 = vector.shape_cast %15 : vector<1x16x512xf32> to vector<16x512xf32>
    %17 = vector.shape_cast %9 : vector<16x512xf32> to vector<1x16x512xf32>
    tpu.vector_store %arg2[%c2, %14, %c0_3], %17 {strides = array<i32>} : memref<21x16x512xf32, #tpu.memory_space<vmem>>, vector<1x16x512xf32>,
    %cst = arith.constant 2.000000e+00 : f32
    %18 = vector.broadcast %cst : f32 to vector<16x512xf32>
    %19 = arith.mulf %18, %8 : vector<16x512xf32>
    %20 = arith.mulf %19, %9 : vector<16x512xf32>
    %21 = arith.mulf %19, %8 : vector<16x512xf32>
    %cst_4 = arith.constant 1.000000e+00 : f32
    %22 = vector.broadcast %cst_4 : f32 to vector<16x512xf32>
    %23 = arith.subf %22, %21 : vector<16x512xf32>
    %c3 = arith.constant 3 : index
    %24 = arith.index_cast %1 : i32 to index
    %c0_5 = arith.constant 0 : index
    %25 = vector.load %arg2[%c3, %24, %c0_5] : memref<21x16x512xf32, #tpu.memory_space<vmem>>, vector<1x16x512xf32>
    %26 = vector.shape_cast %25 : vector<1x16x512xf32> to vector<16x512xf32>
    %27 = vector.shape_cast %20 : vector<16x512xf32> to vector<1x16x512xf32>
    tpu.vector_store %arg2[%c3, %24, %c0_5], %27 {strides = array<i32>} : memref<21x16x512xf32, #tpu.memory_space<vmem>>, vector<1x16x512xf32>,
    %c4 = arith.constant 4 : index
    %28 = arith.index_cast %1 : i32 to index
    %c0_6 = arith.constant 0 : index
    %29 = vector.load %arg2[%c4, %28, %c0_6] : memref<21x16x512xf32, #tpu.memory_space<vmem>>, vector<1x16x512xf32>
    %30 = vector.shape_cast %29 : vector<1x16x512xf32> to vector<16x512xf32>
    %31 = vector.shape_cast %23 : vector<16x512xf32> to vector<1x16x512xf32>
    tpu.vector_store %arg2[%c4, %28, %c0_6], %31 {strides = array<i32>} : memref<21x16x512xf32, #tpu.memory_space<vmem>>, vector<1x16x512xf32>,
    %cst_7 = arith.constant 2.000000e+00 : f32
    %32 = vector.broadcast %cst_7 : f32 to vector<16x512xf32>
    %33 = arith.mulf %32, %20 : vector<16x512xf32>
    %34 = arith.mulf %33, %23 : vector<16x512xf32>
    %35 = arith.mulf %33, %20 : vector<16x512xf32>
    %cst_8 = arith.constant 1.000000e+00 : f32
    %36 = vector.broadcast %cst_8 : f32 to vector<16x512xf32>
    %37 = arith.subf %36, %35 : vector<16x512xf32>
    %c5 = arith.constant 5 : index
    %38 = arith.index_cast %1 : i32 to index
    %c0_9 = arith.constant 0 : index
    %39 = vector.load %arg2[%c5, %38, %c0_9] : memref<21x16x512xf32, #tpu.memory_space<vmem>>, vector<1x16x512xf32>
    %40 = vector.shape_cast %39 : vector<1x16x512xf32> to vector<16x512xf32>
    %41 = vector.shape_cast %34 : vector<16x512xf32> to vector<1x16x512xf32>
    tpu.vector_store %arg2[%c5, %38, %c0_9], %41 {strides = array<i32>} : memref<21x16x512xf32, #tpu.memory_space<vmem>>, vector<1x16x512xf32>,
    %c6 = arith.constant 6 : index
    %42 = arith.index_cast %1 : i32 to index
    %c0_10 = arith.constant 0 : index
    %43 = vector.load %arg2[%c6, %42, %c0_10] : memref<21x16x512xf32, #tpu.memory_space<vmem>>, vector<1x16x512xf32>
    %44 = vector.shape_cast %43 : vector<1x16x512xf32> to vector<16x512xf32>
    %45 = vector.shape_cast %37 : vector<16x512xf32> to vector<1x16x512xf32>
    tpu.vector_store %arg2[%c6, %42, %c0_10], %45 {strides = array<i32>} : memref<21x16x512xf32, #tpu.memory_space<vmem>>, vector<1x16x512xf32>,
    %cst_11 = arith.constant 2.000000e+00 : f32
    %46 = vector.broadcast %cst_11 : f32 to vector<16x512xf32>
    %47 = arith.mulf %46, %34 : vector<16x512xf32>
    %48 = arith.mulf %47, %37 : vector<16x512xf32>
    %49 = arith.mulf %47, %34 : vector<16x512xf32>
    %cst_12 = arith.constant 1.000000e+00 : f32
    %50 = vector.broadcast %cst_12 : f32 to vector<16x512xf32>
    %51 = arith.subf %50, %49 : vector<16x512xf32>
    %c7 = arith.constant 7 : index
    %52 = arith.index_cast %1 : i32 to index
    %c0_13 = arith.constant 0 : index
    %53 = vector.load %arg2[%c7, %52, %c0_13] : memref<21x16x512xf32, #tpu.memory_space<vmem>>, vector<1x16x512xf32>
    %54 = vector.shape_cast %53 : vector<1x16x512xf32> to vector<16x512xf32>
    %55 = vector.shape_cast %48 : vector<16x512xf32> to vector<1x16x512xf32>
    tpu.vector_store %arg2[%c7, %52, %c0_13], %55 {strides = array<i32>} : memref<21x16x512xf32, #tpu.memory_space<vmem>>, vector<1x16x512xf32>,
    %c8 = arith.constant 8 : index
    %56 = arith.index_cast %1 : i32 to index
    %c0_14 = arith.constant 0 : index
    %57 = vector.load %arg2[%c8, %56, %c0_14] : memref<21x16x512xf32, #tpu.memory_space<vmem>>, vector<1x16x512xf32>
    %58 = vector.shape_cast %57 : vector<1x16x512xf32> to vector<16x512xf32>
    %59 = vector.shape_cast %51 : vector<16x512xf32> to vector<1x16x512xf32>
    tpu.vector_store %arg2[%c8, %56, %c0_14], %59 {strides = array<i32>} : memref<21x16x512xf32, #tpu.memory_space<vmem>>, vector<1x16x512xf32>,
    %cst_15 = arith.constant 1.600000e+01 : f32
    %60 = vector.broadcast %cst_15 : f32 to vector<16x512xf32>
    %61 = arith.mulf %60, %3 : vector<16x512xf32>
    %62 = math.sin %61 : vector<16x512xf32>
    %63 = math.cos %61 : vector<16x512xf32>
    %c9 = arith.constant 9 : index
    %64 = arith.index_cast %1 : i32 to index
    %c0_16 = arith.constant 0 : index
    %65 = vector.load %arg2[%c9, %64, %c0_16] : memref<21x16x512xf32, #tpu.memory_space<vmem>>, vector<1x16x512xf32>
    %66 = vector.shape_cast %65 : vector<1x16x512xf32> to vector<16x512xf32>
    %67 = vector.shape_cast %62 : vector<16x512xf32> to vector<1x16x512xf32>
    tpu.vector_store %arg2[%c9, %64, %c0_16], %67 {strides = array<i32>} : memref<21x16x512xf32, #tpu.memory_space<vmem>>, vector<1x16x512xf32>,
    %c10 = arith.constant 10 : index
    %68 = arith.index_cast %1 : i32 to index
    %c0_17 = arith.constant 0 : index
    %69 = vector.load %arg2[%c10, %68, %c0_17] : memref<21x16x512xf32, #tpu.memory_space<vmem>>, vector<1x16x512xf32>
    %70 = vector.shape_cast %69 : vector<1x16x512xf32> to vector<16x512xf32>
    %71 = vector.shape_cast %63 : vector<16x512xf32> to vector<1x16x512xf32>
    tpu.vector_store %arg2[%c10, %68, %c0_17], %71 {strides = array<i32>} : memref<21x16x512xf32, #tpu.memory_space<vmem>>, vector<1x16x512xf32>,
    %cst_18 = arith.constant 2.000000e+00 : f32
    %72 = vector.broadcast %cst_18 : f32 to vector<16x512xf32>
    %73 = arith.mulf %72, %62 : vector<16x512xf32>
    %74 = arith.mulf %73, %63 : vector<16x512xf32>
    %75 = arith.mulf %73, %62 : vector<16x512xf32>
    %cst_19 = arith.constant 1.000000e+00 : f32
    %76 = vector.broadcast %cst_19 : f32 to vector<16x512xf32>
    %77 = arith.subf %76, %75 : vector<16x512xf32>
    %c11 = arith.constant 11 : index
    %78 = arith.index_cast %1 : i32 to index
    %c0_20 = arith.constant 0 : index
    %79 = vector.load %arg2[%c11, %78, %c0_20] : memref<21x16x512xf32, #tpu.memory_space<vmem>>, vector<1x16x512xf32>
    %80 = vector.shape_cast %79 : vector<1x16x512xf32> to vector<16x512xf32>
    %81 = vector.shape_cast %74 : vector<16x512xf32> to vector<1x16x512xf32>
    tpu.vector_store %arg2[%c11, %78, %c0_20], %81 {strides = array<i32>} : memref<21x16x512xf32, #tpu.memory_space<vmem>>, vector<1x16x512xf32>,
    %c12 = arith.constant 12 : index
    %82 = arith.index_cast %1 : i32 to index
    %c0_21 = arith.constant 0 : index
    %83 = vector.load %arg2[%c12, %82, %c0_21] : memref<21x16x512xf32, #tpu.memory_space<vmem>>, vector<1x16x512xf32>
    %84 = vector.shape_cast %83 : vector<1x16x512xf32> to vector<16x512xf32>
    %85 = vector.shape_cast %77 : vector<16x512xf32> to vector<1x16x512xf32>
    tpu.vector_store %arg2[%c12, %82, %c0_21], %85 {strides = array<i32>} : memref<21x16x512xf32, #tpu.memory_space<vmem>>, vector<1x16x512xf32>,
    %cst_22 = arith.constant 2.000000e+00 : f32
    %86 = vector.broadcast %cst_22 : f32 to vector<16x512xf32>
    %87 = arith.mulf %86, %74 : vector<16x512xf32>
    %88 = arith.mulf %87, %77 : vector<16x512xf32>
    %89 = arith.mulf %87, %74 : vector<16x512xf32>
    %cst_23 = arith.constant 1.000000e+00 : f32
    %90 = vector.broadcast %cst_23 : f32 to vector<16x512xf32>
    %91 = arith.subf %90, %89 : vector<16x512xf32>
    %c13 = arith.constant 13 : index
    %92 = arith.index_cast %1 : i32 to index
    %c0_24 = arith.constant 0 : index
    %93 = vector.load %arg2[%c13, %92, %c0_24] : memref<21x16x512xf32, #tpu.memory_space<vmem>>, vector<1x16x512xf32>
    %94 = vector.shape_cast %93 : vector<1x16x512xf32> to vector<16x512xf32>
    %95 = vector.shape_cast %88 : vector<16x512xf32> to vector<1x16x512xf32>
    tpu.vector_store %arg2[%c13, %92, %c0_24], %95 {strides = array<i32>} : memref<21x16x512xf32, #tpu.memory_space<vmem>>, vector<1x16x512xf32>,
    %c14 = arith.constant 14 : index
    %96 = arith.index_cast %1 : i32 to index
    %c0_25 = arith.constant 0 : index
    %97 = vector.load %arg2[%c14, %96, %c0_25] : memref<21x16x512xf32, #tpu.memory_space<vmem>>, vector<1x16x512xf32>
    %98 = vector.shape_cast %97 : vector<1x16x512xf32> to vector<16x512xf32>
    %99 = vector.shape_cast %91 : vector<16x512xf32> to vector<1x16x512xf32>
    tpu.vector_store %arg2[%c14, %96, %c0_25], %99 {strides = array<i32>} : memref<21x16x512xf32, #tpu.memory_space<vmem>>, vector<1x16x512xf32>,
    %cst_26 = arith.constant 2.000000e+00 : f32
    %100 = vector.broadcast %cst_26 : f32 to vector<16x512xf32>
    %101 = arith.mulf %100, %88 : vector<16x512xf32>
    %102 = arith.mulf %101, %91 : vector<16x512xf32>
    %103 = arith.mulf %101, %88 : vector<16x512xf32>
    %cst_27 = arith.constant 1.000000e+00 : f32
    %104 = vector.broadcast %cst_27 : f32 to vector<16x512xf32>
    %105 = arith.subf %104, %103 : vector<16x512xf32>
    %c15 = arith.constant 15 : index
    %106 = arith.index_cast %1 : i32 to index
    %c0_28 = arith.constant 0 : index
    %107 = vector.load %arg2[%c15, %106, %c0_28] : memref<21x16x512xf32, #tpu.memory_space<vmem>>, vector<1x16x512xf32>
    %108 = vector.shape_cast %107 : vector<1x16x512xf32> to vector<16x512xf32>
    %109 = vector.shape_cast %102 : vector<16x512xf32> to vector<1x16x512xf32>
    tpu.vector_store %arg2[%c15, %106, %c0_28], %109 {strides = array<i32>} : memref<21x16x512xf32, #tpu.memory_space<vmem>>, vector<1x16x512xf32>,
    %c16 = arith.constant 16 : index
    %110 = arith.index_cast %1 : i32 to index
    %c0_29 = arith.constant 0 : index
    %111 = vector.load %arg2[%c16, %110, %c0_29] : memref<21x16x512xf32, #tpu.memory_space<vmem>>, vector<1x16x512xf32>
    %112 = vector.shape_cast %111 : vector<1x16x512xf32> to vector<16x512xf32>
    %113 = vector.shape_cast %105 : vector<16x512xf32> to vector<1x16x512xf32>
    tpu.vector_store %arg2[%c16, %110, %c0_29], %113 {strides = array<i32>} : memref<21x16x512xf32, #tpu.memory_space<vmem>>, vector<1x16x512xf32>,
    %cst_30 = arith.constant 2.560000e+02 : f32
    %114 = vector.broadcast %cst_30 : f32 to vector<16x512xf32>
    %115 = arith.mulf %114, %3 : vector<16x512xf32>
    %116 = math.sin %115 : vector<16x512xf32>
    %117 = math.cos %115 : vector<16x512xf32>
    %c17 = arith.constant 17 : index
    %118 = arith.index_cast %1 : i32 to index
    %c0_31 = arith.constant 0 : index
    %119 = vector.load %arg2[%c17, %118, %c0_31] : memref<21x16x512xf32, #tpu.memory_space<vmem>>, vector<1x16x512xf32>
    %120 = vector.shape_cast %119 : vector<1x16x512xf32> to vector<16x512xf32>
    %121 = vector.shape_cast %116 : vector<16x512xf32> to vector<1x16x512xf32>
    tpu.vector_store %arg2[%c17, %118, %c0_31], %121 {strides = array<i32>} : memref<21x16x512xf32, #tpu.memory_space<vmem>>, vector<1x16x512xf32>,
    %c18 = arith.constant 18 : index
    %122 = arith.index_cast %1 : i32 to index
    %c0_32 = arith.constant 0 : index
    %123 = vector.load %arg2[%c18, %122, %c0_32] : memref<21x16x512xf32, #tpu.memory_space<vmem>>, vector<1x16x512xf32>
    %124 = vector.shape_cast %123 : vector<1x16x512xf32> to vector<16x512xf32>
    %125 = vector.shape_cast %117 : vector<16x512xf32> to vector<1x16x512xf32>
    tpu.vector_store %arg2[%c18, %122, %c0_32], %125 {strides = array<i32>} : memref<21x16x512xf32, #tpu.memory_space<vmem>>, vector<1x16x512xf32>,
    %cst_33 = arith.constant 2.000000e+00 : f32
    %126 = vector.broadcast %cst_33 : f32 to vector<16x512xf32>
    %127 = arith.mulf %126, %116 : vector<16x512xf32>
    %128 = arith.mulf %127, %117 : vector<16x512xf32>
    %129 = arith.mulf %127, %116 : vector<16x512xf32>
    %cst_34 = arith.constant 1.000000e+00 : f32
    %130 = vector.broadcast %cst_34 : f32 to vector<16x512xf32>
    %131 = arith.subf %130, %129 : vector<16x512xf32>
    %c19 = arith.constant 19 : index
    %132 = arith.index_cast %1 : i32 to index
    %c0_35 = arith.constant 0 : index
    %133 = vector.load %arg2[%c19, %132, %c0_35] : memref<21x16x512xf32, #tpu.memory_space<vmem>>, vector<1x16x512xf32>
    %134 = vector.shape_cast %133 : vector<1x16x512xf32> to vector<16x512xf32>
    %135 = vector.shape_cast %128 : vector<16x512xf32> to vector<1x16x512xf32>
    tpu.vector_store %arg2[%c19, %132, %c0_35], %135 {strides = array<i32>} : memref<21x16x512xf32, #tpu.memory_space<vmem>>, vector<1x16x512xf32>,
    %c20 = arith.constant 20 : index
    %136 = arith.index_cast %1 : i32 to index
    %c0_36 = arith.constant 0 : index
    %137 = vector.load %arg2[%c20, %136, %c0_36] : memref<21x16x512xf32, #tpu.memory_space<vmem>>, vector<1x16x512xf32>
    %138 = vector.shape_cast %137 : vector<1x16x512xf32> to vector<16x512xf32>
    %139 = vector.shape_cast %131 : vector<16x512xf32> to vector<1x16x512xf32>
    tpu.vector_store %arg2[%c20, %136, %c0_36], %139 {strides = array<i32>} : memref<21x16x512xf32, #tpu.memory_space<vmem>>, vector<1x16x512xf32>,
    %c1_i32 = arith.constant 1 : i32
    return
  }
  func.func @transform_0(%arg0: i32) -> (i32, i32) {
    %c0_i32 = arith.constant 0 : i32
    %c0_i32_0 = arith.constant 0 : i32
    return %arg0, %c0_i32 : i32, i32
  }
  func.func @transform_1(%arg0: i32) -> (i32, i32, i32) {
    %c0_i32 = arith.constant 0 : i32
    %c0_i32_0 = arith.constant 0 : i32
    %c0_i32_1 = arith.constant 0 : i32
    return %c0_i32, %arg0, %c0_i32_0 : i32, i32, i32
  }
}

</mosaic_0001>

<llo_original>
// kernel: tpu_custom_call.1
$region0: #{tpu_custom_call.1}
  #allocation0 [shape = 'u32[]', space=smem, size = 0x4, offset = 0x4, fixed_abs, tag = 'smem constant byte address 0x4 - core index']
  #allocation1 [shape = 'u32[144,128]{1,0:T(1,128)}', space=vmem, size = 0x12000, scoped, tag = 'internal scratch']
  #allocation6 [shape = 's32[]', space=sflag, size = 0x4, offset = 0, fixed_abs, tag = 'sflag constant byte address 0x0 - dummy sync flag']
  %s0 = inlined_call_operand.hbm [shape: f32[32,512], index: 0, kind: input, shape index: {}]
  %s1 = inlined_call_operand.hbm [shape: f32[21,32,512], index: 1, kind: output, shape index: {}]
  %s2 = sld [smem:[#allocation0]]
  $region41: #{tpu_custom_call.1} parent=0
    _
  %s4 = ssub.s32 1, %s2
  %s5 = scalar_select 0, %s4, %s2
  $region1: #{tpu_custom_call.1} parent=0
    #allocation2 [shape = 'u8[65536]{0}', space=vmem, size = 0x10000, scoped, tag = 'input window, operand 0']
    #allocation3 [shape = 's32[2]{0}', space=sflag, size = 0x8, scoped, tag = 'scoped memory for tpu_custom_call.1']
    #allocation4 [shape = 's32[2]{0}', space=sflag, size = 0x8, scoped, tag = 'scoped memory for tpu_custom_call.1']
    #allocation5 [shape = 'u8[1376256]{0}', space=vmem, size = 0x150000, scoped, tag = 'output window, operand 0']
    %6 = vsyncpa [#allocation3], 0
    %s7 = scalar_lea.sflag [#allocation3], 1
    %8 = vsyncpa %s7, 0
    %9 = vsyncpa [#allocation4], 0
    %s10 = scalar_lea.sflag [#allocation4], 1
    %11 = vsyncpa %s10, 0
    loop: start=0, step=1, limit=4
    $region2: #{tpu_custom_call.1} parent=1 // loop_pre_header
      _
    $region3: #{tpu_custom_call.1} parent=1 // loop_header
      %s13 = sphi 0, %s17
      %p14 = scmp.ge.s32.totalorder %s13, 4
      %s23 = sphi 0, %s25
      %s26 = sphi 0, %s23
      %s27 = sphi 0, %s26
      %s43 = sphi 0, %s27
      %s49 = sphi 0, %s51
      %s52 = sphi 0, %s49
      %s53 = sphi 0, %s52
      %s69 = sphi 0, %s53
    $region4: #{tpu_custom_call.1} parent=1 // loop_header_branch
      %16 = sbr.rel (%p14) target = $region8
    $region5: #{tpu_custom_call.1} parent=1 // loop_body
      %s18 = ssub.s32 %s13, 1
      %s19 = ssub.s32 %s13, 2
      %s20 = sadd.s32 %s13, 1
      %s21 = ssub.s32 %s13, %s20
      %p22 = scmp.eq.s32.totalorder %s21, 0
      %s24 = sadd.s32 %s23, 1
      %s25 = scalar_select %p22, %s23, %s24
      %p28 = pneg %p22
      %p29 = scmp.eq.s32.totalorder %s13, 1
      %p30 = por %p28, %p29
      %p31 = scmp.ne.s32.totalorder %s23, %s26
      %p32 = scmp.eq.s32.totalorder %s13, 0
      %p33 = por %p31, %p32
      %p34 = scmp.ne.s32.totalorder %s23, %s26
      %p35 = scmp.eq.s32.totalorder %s18, 1
      %p36 = por %p34, %p35
      %p37 = scmp.ne.s32.totalorder %s26, %s27
      %p38 = scmp.eq.s32.totalorder %s18, 0
      %p39 = por %p37, %p38
      %p40 = scmp.ne.s32.totalorder %s26, %s27
      %p41 = scmp.eq.s32.totalorder %s19, 1
      %p42 = por %p40, %p41
      %p44 = scmp.ne.s32.totalorder %s27, %s43
      %p45 = scmp.eq.s32.totalorder %s19, 0
      %p46 = por %p44, %p45
      %s47 = ssub.s32 %s13, %s20
      %p48 = scmp.eq.s32.totalorder %s47, 0
      %s50 = sadd.s32 %s49, 1
      %s51 = scalar_select %p48, %s49, %s50
      %p54 = pneg %p48
      %p55 = scmp.eq.s32.totalorder %s13, 1
      %p56 = por %p54, %p55
      %p57 = scmp.ne.s32.totalorder %s49, %s52
      %p58 = scmp.eq.s32.totalorder %s13, 0
      %p59 = por %p57, %p58
      %p60 = scmp.ne.s32.totalorder %s49, %s52
      %p61 = scmp.eq.s32.totalorder %s18, 1
      %p62 = por %p60, %p61
      %p63 = scmp.ne.s32.totalorder %s52, %s53
      %p64 = scmp.eq.s32.totalorder %s18, 0
      %p65 = por %p63, %p64
      %p66 = scmp.ne.s32.totalorder %s52, %s53
      %p67 = scmp.eq.s32.totalorder %s19, 1
      %p68 = por %p66, %p67
      %p70 = scmp.ne.s32.totalorder %s53, %s69
      %p71 = scmp.eq.s32.totalorder %s19, 0
      %p72 = por %p70, %p71
      %p73 = scmp.le.s32.totalorder 1, %s13
      %p74 = scmp.lt.s32.totalorder %s13, 3
      %p75 = pnand %p73, %p74
      %p76 = pneg %p75
      // Predicated region
      $region9: #{tpu_custom_call.1} parent=5 // pred_check
        _
      $region10: #{tpu_custom_call.1} parent=5 // pred_check_branch
        %78 = sbr.rel (%p75) target = $region12
      $region11: #{tpu_custom_call.1} parent=5 // pred_region
        %s79 = ssub.s32 %s13, 1
      $region12: #{tpu_custom_call.1} parent=5 // pred_fallthru
        _
      %p80 = scmp.lt.s32.totalorder %s13, 2
      // Predicated region
      $region13: #{tpu_custom_call.1} parent=5 // pred_check
        %p81 = pneg %p80
      $region14: #{tpu_custom_call.1} parent=5 // pred_check_branch
        %83 = sbr.rel (%p81) target = $region16
      $region15: #{tpu_custom_call.1} parent=5 // pred_region
        // Predicated region
        $region17: #{tpu_custom_call.1} parent=15 // pred_check
          %p84 = pneg %p33
        $region18: #{tpu_custom_call.1} parent=15 // pred_check_branch
          %86 = sbr.rel (%p84) target = $region20
        $region19: #{tpu_custom_call.1} parent=15 // pred_region
          %s87 = sand.u32 %s23, 1
          %s88 = scalar_lea.sflag [#allocation3], %s87
          %s89 = sand.u32 %s23, 1
          %s90 = smul.addr %s89, 64
          %s91 = scalar_lea.vmem [#allocation2], %s90
          %s92 = smul.u32 2, %s13
          %s94 = ssub.s32 1024, 1024
          %95 = vsyncadd %s88, %s94
          %s96 = smul.addr %s92, 4
          %s97 = smul.addr %s96, 128
          %s98 = scalar_lea.hbm %s0, %s97
          %s99 = sshll.u32 %s91, 4
          %s100 = int_to_ptr.vmem [resolvable:$true] %s99
          %105 = dma.hbm_to_vmem [thread:$0]  %s98, 1024, %s100, %s88, 512, 512, 32
        $region20: #{tpu_custom_call.1} parent=15 // pred_fallthru
          _
      $region16: #{tpu_custom_call.1} parent=5 // pred_fallthru
        _
      %p106 = scmp.le.s32.totalorder 1, %s13
      %p107 = scmp.lt.s32.totalorder %s13, 3
      %p108 = pnand %p106, %p107
      %p109 = pneg %p108
      // Predicated region
      $region21: #{tpu_custom_call.1} parent=5 // pred_check
        _
      $region22: #{tpu_custom_call.1} parent=5 // pred_check_branch
        %111 = sbr.rel (%p108) target = $region24
      $region23: #{tpu_custom_call.1} parent=5 // pred_region
        %s112 = ssub.s32 %s13, 1
        %s113 = sand.u32 %s26, 1
        %s114 = scalar_lea.sflag [#allocation3], %s113
        %s115 = sand.u32 %s26, 1
        %s116 = smul.addr %s115, 64
        %s117 = scalar_lea.vmem [#allocation2], %s116
        // Predicated region
        $region25: #{tpu_custom_call.1} parent=23 // pred_check
          %p118 = pneg %p39
        $region26: #{tpu_custom_call.1} parent=23 // pred_check_branch
          %120 = sbr.rel (%p118) target = $region28
        $region27: #{tpu_custom_call.1} parent=23 // pred_region
          %121 = dma.done %s114, 1024
        $region28: #{tpu_custom_call.1} parent=23 // pred_fallthru
          _
        %s122 = sand.u32 %s26, 1
        %s123 = scalar_lea.sflag [#allocation3], %s122
        %s124 = sand.u32 %s26, 1
        %s125 = smul.addr %s124, 64
        %s126 = scalar_lea.vmem [#allocation2], %s125
        %p127 = pneg %p39
        %p128 = pneg %p36
        %p129 = pneg %p65
        %p130 = pneg %p62
        %s131 = sand.u32 %s52, 1
        %s132 = scalar_lea.sflag [#allocation4], %s131
        %s133 = sand.u32 %s52, 1
        %s134 = smul.addr %s133, 1344
        %s135 = scalar_lea.vmem [#allocation5], %s134
        %s136 = smul.u32 2, %s18
        %s137 = smul.u32 2, %s18
        %s138 = smul.u32 0, 4
        %s139 = smul.addr %s138, 8
        %s140 = scalar_lea.vmem %s117, %s139 [#allocation2]
        %v141 = vld [vmem:[%s140] sm:$0xff]
        %v142 = vld [vmem:[%s140 + $0x8] sm:$0xff]
        %v143 = vld [vmem:[%s140 + $0x10] sm:$0xff]
        %v144 = vld [vmem:[%s140 + $0x18] sm:$0xff]
        %v145 = vld [vmem:[%s140 + $0x20] sm:$0xff]
        %v146 = vld [vmem:[%s140 + $0x28] sm:$0xff]
        %v147 = vld [vmem:[%s140 + $0x30] sm:$0xff]
        %v148 = vld [vmem:[%s140 + $0x38] sm:$0xff]
        %s149 = smul.addr %s138, 8
        %s150 = scalar_lea.vmem %s135, %s149 [#allocation5]
        %151 = vst [vmem:[%s150] sm:$0xff] %v141
        %152 = vst [vmem:[%s150 + $0x8] sm:$0xff] %v142
        %153 = vst [vmem:[%s150 + $0x10] sm:$0xff] %v143
        %154 = vst [vmem:[%s150 + $0x18] sm:$0xff] %v144
        %155 = vst [vmem:[%s150 + $0x20] sm:$0xff] %v145
        %156 = vst [vmem:[%s150 + $0x28] sm:$0xff] %v146
        %157 = vst [vmem:[%s150 + $0x30] sm:$0xff] %v147
        %158 = vst [vmem:[%s150 + $0x38] sm:$0xff] %v148
        %v159 = vand.u32 2147483647, %v141
        %vm160 = vcmp.le.f32.partialorder %v159, 0.7853982
        %vm161 = vcmp.lt.s32.totalorder %v141, 0
        %v162 = vand.u32 %v141, 2139095040
        %v163 = vshrl.u32 %v162, 23
        %v164 = vsub.s32 %v163, 127
        %v165 = vand.u32 2147483647, %v141
        %v166 = vand.u32 %v165, 8388607
        %v167 = vor.u32 %v166, 8388608
        %v168 = vsub.s32 0, %v167
        %v169 = vadd.s32 %v164, 1
        %vm170 = vcmp.gt.s32.totalorder %v169, 0
        %v171 = vsel %vm170, %v169, 0
        %v172 = vshrl.u32 %v171, 5
        %v173 = vand.u32 %v171, 31
        %v174 = vsub.s32 32, %v173
        %v175 = vshrl.u32 683565275, %v174
        %v176 = vshll.u32 683565275, %v173
        %v177 = vshrl.u32 2475754826, %v174
        %v178 = vor.u32 %v176, %v177
        %v179 = vshll.u32 2475754826, %v173
        %v180 = vshrl.u32 2131351028, %v174
        %v181 = vor.u32 %v179, %v180
        %v182 = vshll.u32 2131351028, %v173
        %v183 = vshrl.u32 2102212464, %v174
        %v184 = vor.u32 %v182, %v183
        %v185 = vshll.u32 2102212464, %v173
        %v186 = vshrl.u32 920167782, %v174
        %v187 = vor.u32 %v185, %v186
        %v188 = vshll.u32 920167782, %v173
        %v189 = vshrl.u32 1326507024, %v174
        %v190 = vor.u32 %v188, %v189
        %vm191 = vcmp.lt.s32.totalorder %v172, 1
        %vm192 = vcmp.lt.s32.totalorder %v172, 2
        %vm193 = vcmp.lt.s32.totalorder %v172, 3
        %vm194 = vcmp.lt.s32.totalorder %v172, 4
        %v195 = vsel %vm191, %v175, %v178
        %v196 = vsel %vm194, %v184, 2102212464
        %v197 = vsel %vm193, %v181, %v196
        %v198 = vsel %vm192, %v195, %v197
        %v199 = vsel %vm191, %v178, %v181
        %v200 = vsel %vm194, %v187, 920167782
        %v201 = vsel %vm193, %v184, %v200
        %v202 = vsel %vm192, %v199, %v201
        %v203 = vsel %vm191, %v181, %v184
        %v204 = vsel %vm194, %v190, 1326507024
        %v205 = vsel %vm193, %v187, %v204
        %v206 = vsel %vm192, %v203, %v205
        %v207 = vshll.u32 %v167, 8
        %v208 = vmul.u32.u64.compose %v207, %v206
        %v209 = vextract.low.u32 %v208
        %v210 = vextract.high.u32 %v208
        %v211 = vmul.u32.u64.compose %v207, %v202
        %v212 = vextract.low.u32 %v211
        %v213 = vextract.high.u32 %v211
        %v214 = vmul.u32 %v207, %v198
        %v215 = vadd.s32 %v210, %v212
        %vm216 = vc.u32 %v210, %v212
        %v217 = vadd.s32 %v213, 1
        %v218 = vsel %vm216, %v217, %v213
        %v219 = vadd.s32 %v214, %v218
        %v220 = vadd.s32 %v219, 536870912
        %v221 = vshrl.u32 %v220, 30
        %v222 = vshll.u32 %v221, 30
        %v223 = vsub.s32 %v219, %v222
        %vm224 = vcmp.lt.s32.totalorder %v223, 0
        %v225 = vsub.s32 0, %v223
        %v226 = vsel %vm224, %v225, %v223
        %v227 = vclz %v226
        %v228 = vsub.s32 %v227, 2
        %vm229 = vcmp.gt.s32.totalorder 0, %v228
        %v230 = vsel %vm229, 0, %v228
        %v231 = vsub.s32 32, %v230
        %v232 = vshll.u32 %v223, %v230
        %v233 = vshrl.u32 %v215, %v231
        %v234 = vor.u32 %v232, %v233
        %v235 = vsub.s32 4294967266, %v230
        %v236 = vadd.s32 %v235, 127
        %v237 = vshll.u32 %v236, 23
        %v238 = vor.u32 4788187, %v237
        %v239 = vand.u32 2147483647, %v238
        %v241 = vcvt.s32.f32 %v234
        %v242 = vmul.f32 %v241, %v239
        %v243 = vxor.u32 %v242, 2147483648
        %v244 = vsel %vm161, %v243, %v242
        %v245 = vsub.s32 4, %v221
        %v246 = vsel %vm161, %v245, %v221
        %v247 = vsel %vm160, %v141, %v244
        %v248 = vsel %vm160, 0, %v246
        %v249 = vcosq.f32.pop %v247
        %v250 = vsinq.f32.pop %v247
        %vm251 = vweird.f32 %v141
        %v252 = vadd.s32 %v248, 3
        %v253 = vand.u32 %v252, 3
        %vm254 = vcmp.lt.s32.totalorder %v253, 2
        %vm255 = vcmp.eq.s32.totalorder %v253, 0
        %v256 = vxor.u32 %v250, 2147483648
        %v257 = vsel %vm255, %v249, %v256
        %vm258 = vcmp.eq.s32.totalorder %v253, 2
        %v259 = vxor.u32 %v249, 2147483648
        %v260 = vsel %vm258, %v259, %v250
        %v261 = vsel %vm254, %v257, %v260
        %v262 = vsel %vm251, nan, %v261
        %v263 = vand.u32 2147483647, %v142
        %vm264 = vcmp.le.f32.partialorder %v263, 0.7853982
        %vm265 = vcmp.lt.s32.totalorder %v142, 0
        %v266 = vand.u32 %v142, 2139095040
        %v267 = vshrl.u32 %v266, 23
        %v268 = vsub.s32 %v267, 127
        %v269 = vand.u32 2147483647, %v142
        %v270 = vand.u32 %v269, 8388607
        %v271 = vor.u32 %v270, 8388608
        %v272 = vsub.s32 0, %v271
        %v273 = vadd.s32 %v268, 1
        %vm274 = vcmp.gt.s32.totalorder %v273, 0
        %v275 = vsel %vm274, %v273, 0
        %v276 = vshrl.u32 %v275, 5
        %v277 = vand.u32 %v275, 31
        %v278 = vsub.s32 32, %v277
        %v279 = vshrl.u32 683565275, %v278
        %v280 = vshll.u32 683565275, %v277
        %v281 = vshrl.u32 2475754826, %v278
        %v282 = vor.u32 %v280, %v281
        %v283 = vshll.u32 2475754826, %v277
        %v284 = vshrl.u32 2131351028, %v278
        %v285 = vor.u32 %v283, %v284
        %v286 = vshll.u32 2131351028, %v277
        %v287 = vshrl.u32 2102212464, %v278
        %v288 = vor.u32 %v286, %v287
        %v289 = vshll.u32 2102212464, %v277
        %v290 = vshrl.u32 920167782, %v278
        %v291 = vor.u32 %v289, %v290
        %v292 = vshll.u32 920167782, %v277
        %v293 = vshrl.u32 1326507024, %v278
        %v294 = vor.u32 %v292, %v293
        %vm295 = vcmp.lt.s32.totalorder %v276, 1
        %vm296 = vcmp.lt.s32.totalorder %v276, 2
        %vm297 = vcmp.lt.s32.totalorder %v276, 3
        %vm298 = vcmp.lt.s32.totalorder %v276, 4
        %v299 = vsel %vm295, %v279, %v282
        %v300 = vsel %vm298, %v288, 2102212464
        %v301 = vsel %vm297, %v285, %v300
        %v302 = vsel %vm296, %v299, %v301
        %v303 = vsel %vm295, %v282, %v285
        %v304 = vsel %vm298, %v291, 920167782
        %v305 = vsel %vm297, %v288, %v304
        %v306 = vsel %vm296, %v303, %v305
        %v307 = vsel %vm295, %v285, %v288
        %v308 = vsel %vm298, %v294, 1326507024
        %v309 = vsel %vm297, %v291, %v308
        %v310 = vsel %vm296, %v307, %v309
        %v311 = vshll.u32 %v271, 8
        %v312 = vmul.u32.u64.compose %v311, %v310
        %v313 = vextract.low.u32 %v312
        %v314 = vextract.high.u32 %v312
        %v315 = vmul.u32.u64.compose %v311, %v306
        %v316 = vextract.low.u32 %v315
        %v317 = vextract.high.u32 %v315
        %v318 = vmul.u32 %v311, %v302
        %v319 = vadd.s32 %v314, %v316
        %vm320 = vc.u32 %v314, %v316
        %v321 = vadd.s32 %v317, 1
        %v322 = vsel %vm320, %v321, %v317
        %v323 = vadd.s32 %v318, %v322
        %v324 = vadd.s32 %v323, 536870912
        %v325 = vshrl.u32 %v324, 30
        %v326 = vshll.u32 %v325, 30
        %v327 = vsub.s32 %v323, %v326
        %vm328 = vcmp.lt.s32.totalorder %v327, 0
        %v329 = vsub.s32 0, %v327
        %v330 = vsel %vm328, %v329, %v327
        %v331 = vclz %v330
        %v332 = vsub.s32 %v331, 2
        %vm333 = vcmp.gt.s32.totalorder 0, %v332
        %v334 = vsel %vm333, 0, %v332
        %v335 = vsub.s32 32, %v334
        %v336 = vshll.u32 %v327, %v334
        %v337 = vshrl.u32 %v319, %v335
        %v338 = vor.u32 %v336, %v337
        %v339 = vsub.s32 4294967266, %v334
        %v340 = vadd.s32 %v339, 127
        %v341 = vshll.u32 %v340, 23
        %v342 = vor.u32 4788187, %v341
        %v343 = vand.u32 2147483647, %v342
        %v345 = vcvt.s32.f32 %v338
        %v346 = vmul.f32 %v345, %v343
        %v347 = vxor.u32 %v346, 2147483648
        %v348 = vsel %vm265, %v347, %v346
        %v349 = vsub.s32 4, %v325
        %v350 = vsel %vm265, %v349, %v325
        %v351 = vsel %vm264, %v142, %v348
        %v352 = vsel %vm264, 0, %v350
        %v353 = vcosq.f32.pop %v351
        %v354 = vsinq.f32.pop %v351
        %vm355 = vweird.f32 %v142
        %v356 = vadd.s32 %v352, 3
        %v357 = vand.u32 %v356, 3
        %vm358 = vcmp.lt.s32.totalorder %v357, 2
        %vm359 = vcmp.eq.s32.totalorder %v357, 0
        %v360 = vxor.u32 %v354, 2147483648
        %v361 = vsel %vm359, %v353, %v360
        %vm362 = vcmp.eq.s32.totalorder %v357, 2
        %v363 = vxor.u32 %v353, 2147483648
        %v364 = vsel %vm362, %v363, %v354
        %v365 = vsel %vm358, %v361, %v364
        %v366 = vsel %vm355, nan, %v365
        %v367 = vand.u32 2147483647, %v143
        %vm368 = vcmp.le.f32.partialorder %v367, 0.7853982
        %vm369 = vcmp.lt.s32.totalorder %v143, 0
        %v370 = vand.u32 %v143, 2139095040
        %v371 = vshrl.u32 %v370, 23
        %v372 = vsub.s32 %v371, 127
        %v373 = vand.u32 2147483647, %v143
        %v374 = vand.u32 %v373, 8388607
        %v375 = vor.u32 %v374, 8388608
        %v376 = vsub.s32 0, %v375
        %v377 = vadd.s32 %v372, 1
        %vm378 = vcmp.gt.s32.totalorder %v377, 0
        %v379 = vsel %vm378, %v377, 0
        %v380 = vshrl.u32 %v379, 5
        %v381 = vand.u32 %v379, 31
        %v382 = vsub.s32 32, %v381
        %v383 = vshrl.u32 683565275, %v382
        %v384 = vshll.u32 683565275, %v381
        %v385 = vshrl.u32 2475754826, %v382
        %v386 = vor.u32 %v384, %v385
        %v387 = vshll.u32 2475754826, %v381
        %v388 = vshrl.u32 2131351028, %v382
        %v389 = vor.u32 %v387, %v388
        %v390 = vshll.u32 2131351028, %v381
        %v391 = vshrl.u32 2102212464, %v382
        %v392 = vor.u32 %v390, %v391
        %v393 = vshll.u32 2102212464, %v381
        %v394 = vshrl.u32 920167782, %v382
        %v395 = vor.u32 %v393, %v394
        %v396 = vshll.u32 920167782, %v381
        %v397 = vshrl.u32 1326507024, %v382
        %v398 = vor.u32 %v396, %v397
        %vm399 = vcmp.lt.s32.totalorder %v380, 1
        %vm400 = vcmp.lt.s32.totalorder %v380, 2
        %vm401 = vcmp.lt.s32.totalorder %v380, 3
        %vm402 = vcmp.lt.s32.totalorder %v380, 4
        %v403 = vsel %vm399, %v383, %v386
        %v404 = vsel %vm402, %v392, 2102212464
        %v405 = vsel %vm401, %v389, %v404
        %v406 = vsel %vm400, %v403, %v405
        %v407 = vsel %vm399, %v386, %v389
        %v408 = vsel %vm402, %v395, 920167782
        %v409 = vsel %vm401, %v392, %v408
        %v410 = vsel %vm400, %v407, %v409
        %v411 = vsel %vm399, %v389, %v392
        %v412 = vsel %vm402, %v398, 1326507024
        %v413 = vsel %vm401, %v395, %v412
        %v414 = vsel %vm400, %v411, %v413
        %v415 = vshll.u32 %v375, 8
        %v416 = vmul.u32.u64.compose %v415, %v414
        %v417 = vextract.low.u32 %v416
        %v418 = vextract.high.u32 %v416
        %v419 = vmul.u32.u64.compose %v415, %v410
        %v420 = vextract.low.u32 %v419
        %v421 = vextract.high.u32 %v419
        %v422 = vmul.u32 %v415, %v406
        %v423 = vadd.s32 %v418, %v420
        %vm424 = vc.u32 %v418, %v420
        %v425 = vadd.s32 %v421, 1
        %v426 = vsel %vm424, %v425, %v421
        %v427 = vadd.s32 %v422, %v426
        %v428 = vadd.s32 %v427, 536870912
        %v429 = vshrl.u32 %v428, 30
        %v430 = vshll.u32 %v429, 30
        %v431 = vsub.s32 %v427, %v430
        %vm432 = vcmp.lt.s32.totalorder %v431, 0
        %v433 = vsub.s32 0, %v431
        %v434 = vsel %vm432, %v433, %v431
        %v435 = vclz %v434
        %v436 = vsub.s32 %v435, 2
        %vm437 = vcmp.gt.s32.totalorder 0, %v436
        %v438 = vsel %vm437, 0, %v436
        %v439 = vsub.s32 32, %v438
        %v440 = vshll.u32 %v431, %v438
        %v441 = vshrl.u32 %v423, %v439
        %v442 = vor.u32 %v440, %v441
        %v443 = vsub.s32 4294967266, %v438
        %v444 = vadd.s32 %v443, 127
        %v445 = vshll.u32 %v444, 23
        %v446 = vor.u32 4788187, %v445
        %v447 = vand.u32 2147483647, %v446
        %v449 = vcvt.s32.f32 %v442
        %v450 = vmul.f32 %v449, %v447
        %v451 = vxor.u32 %v450, 2147483648
        %v452 = vsel %vm369, %v451, %v450
        %v453 = vsub.s32 4, %v429
        %v454 = vsel %vm369, %v453, %v429
        %v455 = vsel %vm368, %v143, %v452
        %v456 = vsel %vm368, 0, %v454
        %v457 = vcosq.f32.pop %v455
        %v458 = vsinq.f32.pop %v455
        %vm459 = vweird.f32 %v143
        %v460 = vadd.s32 %v456, 3
        %v461 = vand.u32 %v460, 3
        %vm462 = vcmp.lt.s32.totalorder %v461, 2
        %vm463 = vcmp.eq.s32.totalorder %v461, 0
        %v464 = vxor.u32 %v458, 2147483648
        %v465 = vsel %vm463, %v457, %v464
        %vm466 = vcmp.eq.s32.totalorder %v461, 2
        %v467 = vxor.u32 %v457, 2147483648
        %v468 = vsel %vm466, %v467, %v458
        %v469 = vsel %vm462, %v465, %v468
        %v470 = vsel %vm459, nan, %v469
        %v471 = vand.u32 2147483647, %v144
        %vm472 = vcmp.le.f32.partialorder %v471, 0.7853982
        %vm473 = vcmp.lt.s32.totalorder %v144, 0
        %v474 = vand.u32 %v144, 2139095040
        %v475 = vshrl.u32 %v474, 23
        %v476 = vsub.s32 %v475, 127
        %v477 = vand.u32 2147483647, %v144
        %v478 = vand.u32 %v477, 8388607
        %v479 = vor.u32 %v478, 8388608
        %v480 = vsub.s32 0, %v479
        %v481 = vadd.s32 %v476, 1
        %vm482 = vcmp.gt.s32.totalorder %v481, 0
        %v483 = vsel %vm482, %v481, 0
        %v484 = vshrl.u32 %v483, 5
        %v485 = vand.u32 %v483, 31
        %v486 = vsub.s32 32, %v485
        %v487 = vshrl.u32 683565275, %v486
        %v488 = vshll.u32 683565275, %v485
        %v489 = vshrl.u32 2475754826, %v486
        %v490 = vor.u32 %v488, %v489
        %v491 = vshll.u32 2475754826, %v485
        %v492 = vshrl.u32 2131351028, %v486
        %v493 = vor.u32 %v491, %v492
        %v494 = vshll.u32 2131351028, %v485
        %v495 = vshrl.u32 2102212464, %v486
        %v496 = vor.u32 %v494, %v495
        %v497 = vshll.u32 2102212464, %v485
        %v498 = vshrl.u32 920167782, %v486
        %v499 = vor.u32 %v497, %v498
        %v500 = vshll.u32 920167782, %v485
        %v501 = vshrl.u32 1326507024, %v486
        %v502 = vor.u32 %v500, %v501
        %vm503 = vcmp.lt.s32.totalorder %v484, 1
        %vm504 = vcmp.lt.s32.totalorder %v484, 2
        %vm505 = vcmp.lt.s32.totalorder %v484, 3
        %vm506 = vcmp.lt.s32.totalorder %v484, 4
        %v507 = vsel %vm503, %v487, %v490
        %v508 = vsel %vm506, %v496, 2102212464
        %v509 = vsel %vm505, %v493, %v508
        %v510 = vsel %vm504, %v507, %v509
        %v511 = vsel %vm503, %v490, %v493
        %v512 = vsel %vm506, %v499, 920167782
        %v513 = vsel %vm505, %v496, %v512
        %v514 = vsel %vm504, %v511, %v513
        %v515 = vsel %vm503, %v493, %v496
        %v516 = vsel %vm506, %v502, 1326507024
        %v517 = vsel %vm505, %v499, %v516
        %v518 = vsel %vm504, %v515, %v517
        %v519 = vshll.u32 %v479, 8
        %v520 = vmul.u32.u64.compose %v519, %v518
        %v521 = vextract.low.u32 %v520
        %v522 = vextract.high.u32 %v520
        %v523 = vmul.u32.u64.compose %v519, %v514
        %v524 = vextract.low.u32 %v523
        %v525 = vextract.high.u32 %v523
        %v526 = vmul.u32 %v519, %v510
        %v527 = vadd.s32 %v522, %v524
        %vm528 = vc.u32 %v522, %v524
        %v529 = vadd.s32 %v525, 1
        %v530 = vsel %vm528, %v529, %v525
        %v531 = vadd.s32 %v526, %v530
        %v532 = vadd.s32 %v531, 536870912
        %v533 = vshrl.u32 %v532, 30
        %v534 = vshll.u32 %v533, 30
        %v535 = vsub.s32 %v531, %v534
        %vm536 = vcmp.lt.s32.totalorder %v535, 0
        %v537 = vsub.s32 0, %v535
        %v538 = vsel %vm536, %v537, %v535
        %v539 = vclz %v538
        %v540 = vsub.s32 %v539, 2
        %vm541 = vcmp.gt.s32.totalorder 0, %v540
        %v542 = vsel %vm541, 0, %v540
        %v543 = vsub.s32 32, %v542
        %v544 = vshll.u32 %v535, %v542
        %v545 = vshrl.u32 %v527, %v543
        %v546 = vor.u32 %v544, %v545
        %v547 = vsub.s32 4294967266, %v542
        %v548 = vadd.s32 %v547, 127
        %v549 = vshll.u32 %v548, 23
        %v550 = vor.u32 4788187, %v549
        %v551 = vand.u32 2147483647, %v550
        %v553 = vcvt.s32.f32 %v546
        %v554 = vmul.f32 %v553, %v551
        %v555 = vxor.u32 %v554, 2147483648
        %v556 = vsel %vm473, %v555, %v554
        %v557 = vsub.s32 4, %v533
        %v558 = vsel %vm473, %v557, %v533
        %v559 = vsel %vm472, %v144, %v556
        %v560 = vsel %vm472, 0, %v558
        %v561 = vcosq.f32.pop %v559
        %v562 = vsinq.f32.pop %v559
        %vm563 = vweird.f32 %v144
        %v564 = vadd.s32 %v560, 3
        %v565 = vand.u32 %v564, 3
        %vm566 = vcmp.lt.s32.totalorder %v565, 2
        %vm567 = vcmp.eq.s32.totalorder %v565, 0
        %v568 = vxor.u32 %v562, 2147483648
        %v569 = vsel %vm567, %v561, %v568
        %vm570 = vcmp.eq.s32.totalorder %v565, 2
        %v571 = vxor.u32 %v561, 2147483648
        %v572 = vsel %vm570, %v571, %v562
        %v573 = vsel %vm566, %v569, %v572
        %v574 = vsel %vm563, nan, %v573
        %v575 = vand.u32 2147483647, %v145
        %vm576 = vcmp.le.f32.partialorder %v575, 0.7853982
        %vm577 = vcmp.lt.s32.totalorder %v145, 0
        %v578 = vand.u32 %v145, 2139095040
        %v579 = vshrl.u32 %v578, 23
        %v580 = vsub.s32 %v579, 127
        %v581 = vand.u32 2147483647, %v145
        %v582 = vand.u32 %v581, 8388607
        %v583 = vor.u32 %v582, 8388608
        %v584 = vsub.s32 0, %v583
        %v585 = vadd.s32 %v580, 1
        %vm586 = vcmp.gt.s32.totalorder %v585, 0
        %v587 = vsel %vm586, %v585, 0
        %v588 = vshrl.u32 %v587, 5
        %v589 = vand.u32 %v587, 31
        %v590 = vsub.s32 32, %v589
        %v591 = vshrl.u32 683565275, %v590
        %v592 = vshll.u32 683565275, %v589
        %v593 = vshrl.u32 2475754826, %v590
        %v594 = vor.u32 %v592, %v593
        %v595 = vshll.u32 2475754826, %v589
        %v596 = vshrl.u32 2131351028, %v590
        %v597 = vor.u32 %v595, %v596
        %v598 = vshll.u32 2131351028, %v589
        %v599 = vshrl.u32 2102212464, %v590
        %v600 = vor.u32 %v598, %v599
        %v601 = vshll.u32 2102212464, %v589
        %v602 = vshrl.u32 920167782, %v590
        %v603 = vor.u32 %v601, %v602
        %v604 = vshll.u32 920167782, %v589
        %v605 = vshrl.u32 1326507024, %v590
        %v606 = vor.u32 %v604, %v605
        %vm607 = vcmp.lt.s32.totalorder %v588, 1
        %vm608 = vcmp.lt.s32.totalorder %v588, 2
        %vm609 = vcmp.lt.s32.totalorder %v588, 3
        %vm610 = vcmp.lt.s32.totalorder %v588, 4
        %v611 = vsel %vm607, %v591, %v594
        %v612 = vsel %vm610, %v600, 2102212464
        %v613 = vsel %vm609, %v597, %v612
        %v614 = vsel %vm608, %v611, %v613
        %v615 = vsel %vm607, %v594, %v597
        %v616 = vsel %vm610, %v603, 920167782
        %v617 = vsel %vm609, %v600, %v616
        %v618 = vsel %vm608, %v615, %v617
        %v619 = vsel %vm607, %v597, %v600
        %v620 = vsel %vm610, %v606, 1326507024
        %v621 = vsel %vm609, %v603, %v620
        %v622 = vsel %vm608, %v619, %v621
        %v623 = vshll.u32 %v583, 8
        %v624 = vmul.u32.u64.compose %v623, %v622
        %v625 = vextract.low.u32 %v624
        %v626 = vextract.high.u32 %v624
        %v627 = vmul.u32.u64.compose %v623, %v618
        %v628 = vextract.low.u32 %v627
        %v629 = vextract.high.u32 %v627
        %v630 = vmul.u32 %v623, %v614
        %v631 = vadd.s32 %v626, %v628
        %vm632 = vc.u32 %v626, %v628
        %v633 = vadd.s32 %v629, 1
        %v634 = vsel %vm632, %v633, %v629
        %v635 = vadd.s32 %v630, %v634
        %v636 = vadd.s32 %v635, 536870912
        %v637 = vshrl.u32 %v636, 30
        %v638 = vshll.u32 %v637, 30
        %v639 = vsub.s32 %v635, %v638
        %vm640 = vcmp.lt.s32.totalorder %v639, 0
        %v641 = vsub.s32 0, %v639
        %v642 = vsel %vm640, %v641, %v639
        %v643 = vclz %v642
        %v644 = vsub.s32 %v643, 2
        %vm645 = vcmp.gt.s32.totalorder 0, %v644
        %v646 = vsel %vm645, 0, %v644
        %v647 = vsub.s32 32, %v646
        %v648 = vshll.u32 %v639, %v646
        %v649 = vshrl.u32 %v631, %v647
        %v650 = vor.u32 %v648, %v649
        %v651 = vsub.s32 4294967266, %v646
        %v652 = vadd.s32 %v651, 127
        %v653 = vshll.u32 %v652, 23
        %v654 = vor.u32 4788187, %v653
        %v655 = vand.u32 2147483647, %v654
        %v657 = vcvt.s32.f32 %v650
        %v658 = vmul.f32 %v657, %v655
        %v659 = vxor.u32 %v658, 2147483648
        %v660 = vsel %vm577, %v659, %v658
        %v661 = vsub.s32 4, %v637
        %v662 = vsel %vm577, %v661, %v637
        %v663 = vsel %vm576, %v145, %v660
        %v664 = vsel %vm576, 0, %v662
        %v665 = vcosq.f32.pop %v663
        %v666 = vsinq.f32.pop %v663
        %vm667 = vweird.f32 %v145
        %v668 = vadd.s32 %v664, 3
        %v669 = vand.u32 %v668, 3
        %vm670 = vcmp.lt.s32.totalorder %v669, 2
        %vm671 = vcmp.eq.s32.totalorder %v669, 0
        %v672 = vxor.u32 %v666, 2147483648
        %v673 = vsel %vm671, %v665, %v672
        %vm674 = vcmp.eq.s32.totalorder %v669, 2
        %v675 = vxor.u32 %v665, 2147483648
        %v676 = vsel %vm674, %v675, %v666
        %v677 = vsel %vm670, %v673, %v676
        %v678 = vsel %vm667, nan, %v677
        %v679 = vand.u32 2147483647, %v146
        %vm680 = vcmp.le.f32.partialorder %v679, 0.7853982
        %vm681 = vcmp.lt.s32.totalorder %v146, 0
        %v682 = vand.u32 %v146, 2139095040
        %v683 = vshrl.u32 %v682, 23
        %v684 = vsub.s32 %v683, 127
        %v685 = vand.u32 2147483647, %v146
        %v686 = vand.u32 %v685, 8388607
        %v687 = vor.u32 %v686, 8388608
        %v688 = vsub.s32 0, %v687
        %v689 = vadd.s32 %v684, 1
        %vm690 = vcmp.gt.s32.totalorder %v689, 0
        %v691 = vsel %vm690, %v689, 0
        %v692 = vshrl.u32 %v691, 5
        %v693 = vand.u32 %v691, 31
        %v694 = vsub.s32 32, %v693
        %v695 = vshrl.u32 683565275, %v694
        %v696 = vshll.u32 683565275, %v693
        %v697 = vshrl.u32 2475754826, %v694
        %v698 = vor.u32 %v696, %v697
        %v699 = vshll.u32 2475754826, %v693
        %v700 = vshrl.u32 2131351028, %v694
        %v701 = vor.u32 %v699, %v700
        %v702 = vshll.u32 2131351028, %v693
        %v703 = vshrl.u32 2102212464, %v694
        %v704 = vor.u32 %v702, %v703
        %v705 = vshll.u32 2102212464, %v693
        %v706 = vshrl.u32 920167782, %v694
        %v707 = vor.u32 %v705, %v706
        %v708 = vshll.u32 920167782, %v693
        %v709 = vshrl.u32 1326507024, %v694
        %v710 = vor.u32 %v708, %v709
        %vm711 = vcmp.lt.s32.totalorder %v692, 1
        %vm712 = vcmp.lt.s32.totalorder %v692, 2
        %vm713 = vcmp.lt.s32.totalorder %v692, 3
        %vm714 = vcmp.lt.s32.totalorder %v692, 4
        %v715 = vsel %vm711, %v695, %v698
        %v716 = vsel %vm714, %v704, 2102212464
        %v717 = vsel %vm713, %v701, %v716
        %v718 = vsel %vm712, %v715, %v717
        %v719 = vsel %vm711, %v698, %v701
        %v720 = vsel %vm714, %v707, 920167782
        %v721 = vsel %vm713, %v704, %v720
        %v722 = vsel %vm712, %v719, %v721
        %v723 = vsel %vm711, %v701, %v704
        %v724 = vsel %vm714, %v710, 1326507024
        %v725 = vsel %vm713, %v707, %v724
        %v726 = vsel %vm712, %v723, %v725
        %v727 = vshll.u32 %v687, 8
        %v728 = vmul.u32.u64.compose %v727, %v726
        %v729 = vextract.low.u32 %v728
        %v730 = vextract.high.u32 %v728
        %v731 = vmul.u32.u64.compose %v727, %v722
        %v732 = vextract.low.u32 %v731
        %v733 = vextract.high.u32 %v731
        %v734 = vmul.u32 %v727, %v718
        %v735 = vadd.s32 %v730, %v732
        %vm736 = vc.u32 %v730, %v732
        %v737 = vadd.s32 %v733, 1
        %v738 = vsel %vm736, %v737, %v733
        %v739 = vadd.s32 %v734, %v738
        %v740 = vadd.s32 %v739, 536870912
        %v741 = vshrl.u32 %v740, 30
        %v742 = vshll.u32 %v741, 30
        %v743 = vsub.s32 %v739, %v742
        %vm744 = vcmp.lt.s32.totalorder %v743, 0
        %v745 = vsub.s32 0, %v743
        %v746 = vsel %vm744, %v745, %v743
        %v747 = vclz %v746
        %v748 = vsub.s32 %v747, 2
        %vm749 = vcmp.gt.s32.totalorder 0, %v748
        %v750 = vsel %vm749, 0, %v748
        %v751 = vsub.s32 32, %v750
        %v752 = vshll.u32 %v743, %v750
        %v753 = vshrl.u32 %v735, %v751
        %v754 = vor.u32 %v752, %v753
        %v755 = vsub.s32 4294967266, %v750
        %v756 = vadd.s32 %v755, 127
        %v757 = vshll.u32 %v756, 23
        %v758 = vor.u32 4788187, %v757
        %v759 = vand.u32 2147483647, %v758
        %v761 = vcvt.s32.f32 %v754
        %v762 = vmul.f32 %v761, %v759
        %v763 = vxor.u32 %v762, 2147483648
        %v764 = vsel %vm681, %v763, %v762
        %v765 = vsub.s32 4, %v741
        %v766 = vsel %vm681, %v765, %v741
        %v767 = vsel %vm680, %v146, %v764
        %v768 = vsel %vm680, 0, %v766
        %v769 = vcosq.f32.pop %v767
        %v770 = vsinq.f32.pop %v767
        %vm771 = vweird.f32 %v146
        %v772 = vadd.s32 %v768, 3
        %v773 = vand.u32 %v772, 3
        %vm774 = vcmp.lt.s32.totalorder %v773, 2
        %vm775 = vcmp.eq.s32.totalorder %v773, 0
        %v776 = vxor.u32 %v770, 2147483648
        %v777 = vsel %vm775, %v769, %v776
        %vm778 = vcmp.eq.s32.totalorder %v773, 2
        %v779 = vxor.u32 %v769, 2147483648
        %v780 = vsel %vm778, %v779, %v770
        %v781 = vsel %vm774, %v777, %v780
        %v782 = vsel %vm771, nan, %v781
        %v783 = vand.u32 2147483647, %v147
        %vm784 = vcmp.le.f32.partialorder %v783, 0.7853982
        %vm785 = vcmp.lt.s32.totalorder %v147, 0
        %v786 = vand.u32 %v147, 2139095040
        %v787 = vshrl.u32 %v786, 23
        %v788 = vsub.s32 %v787, 127
        %v789 = vand.u32 2147483647, %v147
        %v790 = vand.u32 %v789, 8388607
        %v791 = vor.u32 %v790, 8388608
        %v792 = vsub.s32 0, %v791
        %v793 = vadd.s32 %v788, 1
        %vm794 = vcmp.gt.s32.totalorder %v793, 0
        %v795 = vsel %vm794, %v793, 0
        %v796 = vshrl.u32 %v795, 5
        %v797 = vand.u32 %v795, 31
        %v798 = vsub.s32 32, %v797
        %v799 = vshrl.u32 683565275, %v798
        %v800 = vshll.u32 683565275, %v797
        %v801 = vshrl.u32 2475754826, %v798
        %v802 = vor.u32 %v800, %v801
        %v803 = vshll.u32 2475754826, %v797
        %v804 = vshrl.u32 2131351028, %v798
        %v805 = vor.u32 %v803, %v804
        %v806 = vshll.u32 2131351028, %v797
        %v807 = vshrl.u32 2102212464, %v798
        %v808 = vor.u32 %v806, %v807
        %v809 = vshll.u32 2102212464, %v797
        %v810 = vshrl.u32 920167782, %v798
        %v811 = vor.u32 %v809, %v810
        %v812 = vshll.u32 920167782, %v797
        %v813 = vshrl.u32 1326507024, %v798
        %v814 = vor.u32 %v812, %v813
        %vm815 = vcmp.lt.s32.totalorder %v796, 1
        %vm816 = vcmp.lt.s32.totalorder %v796, 2
        %vm817 = vcmp.lt.s32.totalorder %v796, 3
        %vm818 = vcmp.lt.s32.totalorder %v796, 4
        %v819 = vsel %vm815, %v799, %v802
        %v820 = vsel %vm818, %v808, 2102212464
        %v821 = vsel %vm817, %v805, %v820
        %v822 = vsel %vm816, %v819, %v821
        %v823 = vsel %vm815, %v802, %v805
        %v824 = vsel %vm818, %v811, 920167782
        %v825 = vsel %vm817, %v808, %v824
        %v826 = vsel %vm816, %v823, %v825
        %v827 = vsel %vm815, %v805, %v808
        %v828 = vsel %vm818, %v814, 1326507024
        %v829 = vsel %vm817, %v811, %v828
        %v830 = vsel %vm816, %v827, %v829
        %v831 = vshll.u32 %v791, 8
        %v832 = vmul.u32.u64.compose %v831, %v830
        %v833 = vextract.low.u32 %v832
        %v834 = vextract.high.u32 %v832
        %v835 = vmul.u32.u64.compose %v831, %v826
        %v836 = vextract.low.u32 %v835
        %v837 = vextract.high.u32 %v835
        %v838 = vmul.u32 %v831, %v822
        %v839 = vadd.s32 %v834, %v836
        %vm840 = vc.u32 %v834, %v836
        %v841 = vadd.s32 %v837, 1
        %v842 = vsel %vm840, %v841, %v837
        %v843 = vadd.s32 %v838, %v842
        %v844 = vadd.s32 %v843, 536870912
        %v845 = vshrl.u32 %v844, 30
        %v846 = vshll.u32 %v845, 30
        %v847 = vsub.s32 %v843, %v846
        %vm848 = vcmp.lt.s32.totalorder %v847, 0
        %v849 = vsub.s32 0, %v847
        %v850 = vsel %vm848, %v849, %v847
        %v851 = vclz %v850
        %v852 = vsub.s32 %v851, 2
        %vm853 = vcmp.gt.s32.totalorder 0, %v852
        %v854 = vsel %vm853, 0, %v852
        %v855 = vsub.s32 32, %v854
        %v856 = vshll.u32 %v847, %v854
        %v857 = vshrl.u32 %v839, %v855
        %v858 = vor.u32 %v856, %v857
        %v859 = vsub.s32 4294967266, %v854
        %v860 = vadd.s32 %v859, 127
        %v861 = vshll.u32 %v860, 23
        %v862 = vor.u32 4788187, %v861
        %v863 = vand.u32 2147483647, %v862
        %v865 = vcvt.s32.f32 %v858
        %v866 = vmul.f32 %v865, %v863
        %v867 = vxor.u32 %v866, 2147483648
        %v868 = vsel %vm785, %v867, %v866
        %v869 = vsub.s32 4, %v845
        %v870 = vsel %vm785, %v869, %v845
        %v871 = vsel %vm784, %v147, %v868
        %v872 = vsel %vm784, 0, %v870
        %v873 = vcosq.f32.pop %v871
        %v874 = vsinq.f32.pop %v871
        %vm875 = vweird.f32 %v147
        %v876 = vadd.s32 %v872, 3
        %v877 = vand.u32 %v876, 3
        %vm878 = vcmp.lt.s32.totalorder %v877, 2
        %vm879 = vcmp.eq.s32.totalorder %v877, 0
        %v880 = vxor.u32 %v874, 2147483648
        %v881 = vsel %vm879, %v873, %v880
        %vm882 = vcmp.eq.s32.totalorder %v877, 2
        %v883 = vxor.u32 %v873, 2147483648
        %v884 = vsel %vm882, %v883, %v874
        %v885 = vsel %vm878, %v881, %v884
        %v886 = vsel %vm875, nan, %v885
        %v887 = vand.u32 2147483647, %v148
        %vm888 = vcmp.le.f32.partialorder %v887, 0.7853982
        %vm889 = vcmp.lt.s32.totalorder %v148, 0
        %v890 = vand.u32 %v148, 2139095040
        %v891 = vshrl.u32 %v890, 23
        %v892 = vsub.s32 %v891, 127
        %v893 = vand.u32 2147483647, %v148
        %v894 = vand.u32 %v893, 8388607
        %v895 = vor.u32 %v894, 8388608
        %v896 = vsub.s32 0, %v895
        %v897 = vadd.s32 %v892, 1
        %vm898 = vcmp.gt.s32.totalorder %v897, 0
        %v899 = vsel %vm898, %v897, 0
        %v900 = vshrl.u32 %v899, 5
        %v901 = vand.u32 %v899, 31
        %v902 = vsub.s32 32, %v901
        %v903 = vshrl.u32 683565275, %v902
        %v904 = vshll.u32 683565275, %v901
        %v905 = vshrl.u32 2475754826, %v902
        %v906 = vor.u32 %v904, %v905
        %v907 = vshll.u32 2475754826, %v901
        %v908 = vshrl.u32 2131351028, %v902
        %v909 = vor.u32 %v907, %v908
        %v910 = vshll.u32 2131351028, %v901
        %v911 = vshrl.u32 2102212464, %v902
        %v912 = vor.u32 %v910, %v911
        %v913 = vshll.u32 2102212464, %v901
        %v914 = vshrl.u32 920167782, %v902
        %v915 = vor.u32 %v913, %v914
        %v916 = vshll.u32 920167782, %v901
        %v917 = vshrl.u32 1326507024, %v902
        %v918 = vor.u32 %v916, %v917
        %vm919 = vcmp.lt.s32.totalorder %v900, 1
        %vm920 = vcmp.lt.s32.totalorder %v900, 2
        %vm921 = vcmp.lt.s32.totalorder %v900, 3
        %vm922 = vcmp.lt.s32.totalorder %v900, 4
        %v923 = vsel %vm919, %v903, %v906
        %v924 = vsel %vm922, %v912, 2102212464
        %v925 = vsel %vm921, %v909, %v924
        %v926 = vsel %vm920, %v923, %v925
        %v927 = vsel %vm919, %v906, %v909
        %v928 = vsel %vm922, %v915, 920167782
        %v929 = vsel %vm921, %v912, %v928
        %v930 = vsel %vm920, %v927, %v929
        %v931 = vsel %vm919, %v909, %v912
        %v932 = vsel %vm922, %v918, 1326507024
        %v933 = vsel %vm921, %v915, %v932
        %v934 = vsel %vm920, %v931, %v933
        %v935 = vshll.u32 %v895, 8
        %v936 = vmul.u32.u64.compose %v935, %v934
        %v937 = vextract.low.u32 %v936
        %v938 = vextract.high.u32 %v936
        %v939 = vmul.u32.u64.compose %v935, %v930
        %v940 = vextract.low.u32 %v939
        %v941 = vextract.high.u32 %v939
        %v942 = vmul.u32 %v935, %v926
        %v943 = vadd.s32 %v938, %v940
        %vm944 = vc.u32 %v938, %v940
        %v945 = vadd.s32 %v941, 1
        %v946 = vsel %vm944, %v945, %v941
        %v947 = vadd.s32 %v942, %v946
        %v948 = vadd.s32 %v947, 536870912
        %v949 = vshrl.u32 %v948, 30
        %v950 = vshll.u32 %v949, 30
        %v951 = vsub.s32 %v947, %v950
        %vm952 = vcmp.lt.s32.totalorder %v951, 0
        %v953 = vsub.s32 0, %v951
        %v954 = vsel %vm952, %v953, %v951
        %v955 = vclz %v954
        %v956 = vsub.s32 %v955, 2
        %vm957 = vcmp.gt.s32.totalorder 0, %v956
        %v958 = vsel %vm957, 0, %v956
        %v959 = vsub.s32 32, %v958
        %v960 = vshll.u32 %v951, %v958
        %v961 = vshrl.u32 %v943, %v959
        %v962 = vor.u32 %v960, %v961
        %v963 = vsub.s32 4294967266, %v958
        %v964 = vadd.s32 %v963, 127
        %v965 = vshll.u32 %v964, 23
        %v966 = vor.u32 4788187, %v965
        %v967 = vand.u32 2147483647, %v966
        %v969 = vcvt.s32.f32 %v962
        %v970 = vmul.f32 %v969, %v967
        %v971 = vxor.u32 %v970, 2147483648
        %v972 = vsel %vm889, %v971, %v970
        %v973 = vsub.s32 4, %v949
        %v974 = vsel %vm889, %v973, %v949
        %v975 = vsel %vm888, %v148, %v972
        %v976 = vsel %vm888, 0, %v974
        %v977 = vcosq.f32.pop %v975
        %v978 = vsinq.f32.pop %v975
        %vm979 = vweird.f32 %v148
        %v980 = vadd.s32 %v976, 3
        %v981 = vand.u32 %v980, 3
        %vm982 = vcmp.lt.s32.totalorder %v981, 2
        %vm983 = vcmp.eq.s32.totalorder %v981, 0
        %v984 = vxor.u32 %v978, 2147483648
        %v985 = vsel %vm983, %v977, %v984
        %vm986 = vcmp.eq.s32.totalorder %v981, 2
        %v987 = vxor.u32 %v977, 2147483648
        %v988 = vsel %vm986, %v987, %v978
        %v989 = vsel %vm982, %v985, %v988
        %v990 = vsel %vm979, nan, %v989
        %v991 = vand.u32 2147483647, %v141
        %vm992 = vcmp.le.f32.partialorder %v991, 0.7853982
        %vm993 = vcmp.lt.s32.totalorder %v141, 0
        %v994 = vand.u32 %v141, 2139095040
        %v995 = vshrl.u32 %v994, 23
        %v996 = vsub.s32 %v995, 127
        %v997 = vand.u32 2147483647, %v141
        %v998 = vand.u32 %v997, 8388607
        %v999 = vor.u32 %v998, 8388608
        %v1000 = vsub.s32 0, %v999
        %v1001 = vadd.s32 %v996, 1
        %vm1002 = vcmp.gt.s32.totalorder %v1001, 0
        %v1003 = vsel %vm1002, %v1001, 0
        %v1004 = vshrl.u32 %v1003, 5
        %v1005 = vand.u32 %v1003, 31
        %v1006 = vsub.s32 32, %v1005
        %v1007 = vshrl.u32 683565275, %v1006
        %v1008 = vshll.u32 683565275, %v1005
        %v1009 = vshrl.u32 2475754826, %v1006
        %v1010 = vor.u32 %v1008, %v1009
        %v1011 = vshll.u32 2475754826, %v1005
        %v1012 = vshrl.u32 2131351028, %v1006
        %v1013 = vor.u32 %v1011, %v1012
        %v1014 = vshll.u32 2131351028, %v1005
        %v1015 = vshrl.u32 2102212464, %v1006
        %v1016 = vor.u32 %v1014, %v1015
        %v1017 = vshll.u32 2102212464, %v1005
        %v1018 = vshrl.u32 920167782, %v1006
        %v1019 = vor.u32 %v1017, %v1018
        %v1020 = vshll.u32 920167782, %v1005
        %v1021 = vshrl.u32 1326507024, %v1006
        %v1022 = vor.u32 %v1020, %v1021
        %vm1023 = vcmp.lt.s32.totalorder %v1004, 1
        %vm1024 = vcmp.lt.s32.totalorder %v1004, 2
        %vm1025 = vcmp.lt.s32.totalorder %v1004, 3
        %vm1026 = vcmp.lt.s32.totalorder %v1004, 4
        %v1027 = vsel %vm1023, %v1007, %v1010
        %v1028 = vsel %vm1026, %v1016, 2102212464
        %v1029 = vsel %vm1025, %v1013, %v1028
        %v1030 = vsel %vm1024, %v1027, %v1029
        %v1031 = vsel %vm1023, %v1010, %v1013
        %v1032 = vsel %vm1026, %v1019, 920167782
        %v1033 = vsel %vm1025, %v1016, %v1032
        %v1034 = vsel %vm1024, %v1031, %v1033
        %v1035 = vsel %vm1023, %v1013, %v1016
        %v1036 = vsel %vm1026, %v1022, 1326507024
        %v1037 = vsel %vm1025, %v1019, %v1036
        %v1038 = vsel %vm1024, %v1035, %v1037
        %v1039 = vshll.u32 %v999, 8
        %v1040 = vmul.u32.u64.compose %v1039, %v1038
        %v1041 = vextract.low.u32 %v1040
        %v1042 = vextract.high.u32 %v1040
        %v1043 = vmul.u32.u64.compose %v1039, %v1034
        %v1044 = vextract.low.u32 %v1043
        %v1045 = vextract.high.u32 %v1043
        %v1046 = vmul.u32 %v1039, %v1030
        %v1047 = vadd.s32 %v1042, %v1044
        %vm1048 = vc.u32 %v1042, %v1044
        %v1049 = vadd.s32 %v1045, 1
        %v1050 = vsel %vm1048, %v1049, %v1045
        %v1051 = vadd.s32 %v1046, %v1050
        %v1052 = vadd.s32 %v1051, 536870912
        %v1053 = vshrl.u32 %v1052, 30
        %v1054 = vshll.u32 %v1053, 30
        %v1055 = vsub.s32 %v1051, %v1054
        %vm1056 = vcmp.lt.s32.totalorder %v1055, 0
        %v1057 = vsub.s32 0, %v1055
        %v1058 = vsel %vm1056, %v1057, %v1055
        %v1059 = vclz %v1058
        %v1060 = vsub.s32 %v1059, 2
        %vm1061 = vcmp.gt.s32.totalorder 0, %v1060
        %v1062 = vsel %vm1061, 0, %v1060
        %v1063 = vsub.s32 32, %v1062
        %v1064 = vshll.u32 %v1055, %v1062
        %v1065 = vshrl.u32 %v1047, %v1063
        %v1066 = vor.u32 %v1064, %v1065
        %v1067 = vsub.s32 4294967266, %v1062
        %v1068 = vadd.s32 %v1067, 127
        %v1069 = vshll.u32 %v1068, 23
        %v1070 = vor.u32 4788187, %v1069
        %v1071 = vand.u32 2147483647, %v1070
        %v1073 = vcvt.s32.f32 %v1066
        %v1074 = vmul.f32 %v1073, %v1071
        %v1075 = vxor.u32 %v1074, 2147483648
        %v1076 = vsel %vm993, %v1075, %v1074
        %v1077 = vsub.s32 4, %v1053
        %v1078 = vsel %vm993, %v1077, %v1053
        %v1079 = vsel %vm992, %v141, %v1076
        %v1080 = vsel %vm992, 0, %v1078
        %v1081 = vcosq.f32.pop %v1079
        %v1082 = vsinq.f32.pop %v1079
        %vm1083 = vweird.f32 %v141
        %v1084 = vand.u32 %v1080, 3
        %vm1085 = vcmp.lt.s32.totalorder %v1084, 2
        %vm1086 = vcmp.eq.s32.totalorder %v1084, 0
        %v1087 = vxor.u32 %v1082, 2147483648
        %v1088 = vsel %vm1086, %v1081, %v1087
        %vm1089 = vcmp.eq.s32.totalorder %v1084, 2
        %v1090 = vxor.u32 %v1081, 2147483648
        %v1091 = vsel %vm1089, %v1090, %v1082
        %v1092 = vsel %vm1085, %v1088, %v1091
        %v1093 = vsel %vm1083, nan, %v1092
        %v1094 = vand.u32 2147483647, %v142
        %vm1095 = vcmp.le.f32.partialorder %v1094, 0.7853982
        %vm1096 = vcmp.lt.s32.totalorder %v142, 0
        %v1097 = vand.u32 %v142, 2139095040
        %v1098 = vshrl.u32 %v1097, 23
        %v1099 = vsub.s32 %v1098, 127
        %v1100 = vand.u32 2147483647, %v142
        %v1101 = vand.u32 %v1100, 8388607
        %v1102 = vor.u32 %v1101, 8388608
        %v1103 = vsub.s32 0, %v1102
        %v1104 = vadd.s32 %v1099, 1
        %vm1105 = vcmp.gt.s32.totalorder %v1104, 0
        %v1106 = vsel %vm1105, %v1104, 0
        %v1107 = vshrl.u32 %v1106, 5
        %v1108 = vand.u32 %v1106, 31
        %v1109 = vsub.s32 32, %v1108
        %v1110 = vshrl.u32 683565275, %v1109
        %v1111 = vshll.u32 683565275, %v1108
        %v1112 = vshrl.u32 2475754826, %v1109
        %v1113 = vor.u32 %v1111, %v1112
        %v1114 = vshll.u32 2475754826, %v1108
        %v1115 = vshrl.u32 2131351028, %v1109
        %v1116 = vor.u32 %v1114, %v1115
        %v1117 = vshll.u32 2131351028, %v1108
        %v1118 = vshrl.u32 2102212464, %v1109
        %v1119 = vor.u32 %v1117, %v1118
        %v1120 = vshll.u32 2102212464, %v1108
        %v1121 = vshrl.u32 920167782, %v1109
        %v1122 = vor.u32 %v1120, %v1121
        %v1123 = vshll.u32 920167782, %v1108
        %v1124 = vshrl.u32 1326507024, %v1109
        %v1125 = vor.u32 %v1123, %v1124
        %vm1126 = vcmp.lt.s32.totalorder %v1107, 1
        %vm1127 = vcmp.lt.s32.totalorder %v1107, 2
        %vm1128 = vcmp.lt.s32.totalorder %v1107, 3
        %vm1129 = vcmp.lt.s32.totalorder %v1107, 4
        %v1130 = vsel %vm1126, %v1110, %v1113
        %v1131 = vsel %vm1129, %v1119, 2102212464
        %v1132 = vsel %vm1128, %v1116, %v1131
        %v1133 = vsel %vm1127, %v1130, %v1132
        %v1134 = vsel %vm1126, %v1113, %v1116
        %v1135 = vsel %vm1129, %v1122, 920167782
        %v1136 = vsel %vm1128, %v1119, %v1135
        %v1137 = vsel %vm1127, %v1134, %v1136
        %v1138 = vsel %vm1126, %v1116, %v1119
        %v1139 = vsel %vm1129, %v1125, 1326507024
        %v1140 = vsel %vm1128, %v1122, %v1139
        %v1141 = vsel %vm1127, %v1138, %v1140
        %v1142 = vshll.u32 %v1102, 8
        %v1143 = vmul.u32.u64.compose %v1142, %v1141
        %v1144 = vextract.low.u32 %v1143
        %v1145 = vextract.high.u32 %v1143
        %v1146 = vmul.u32.u64.compose %v1142, %v1137
        %v1147 = vextract.low.u32 %v1146
        %v1148 = vextract.high.u32 %v1146
        %v1149 = vmul.u32 %v1142, %v1133
        %v1150 = vadd.s32 %v1145, %v1147
        %vm1151 = vc.u32 %v1145, %v1147
        %v1152 = vadd.s32 %v1148, 1
        %v1153 = vsel %vm1151, %v1152, %v1148
        %v1154 = vadd.s32 %v1149, %v1153
        %v1155 = vadd.s32 %v1154, 536870912
        %v1156 = vshrl.u32 %v1155, 30
        %v1157 = vshll.u32 %v1156, 30
        %v1158 = vsub.s32 %v1154, %v1157
        %vm1159 = vcmp.lt.s32.totalorder %v1158, 0
        %v1160 = vsub.s32 0, %v1158
        %v1161 = vsel %vm1159, %v1160, %v1158
        %v1162 = vclz %v1161
        %v1163 = vsub.s32 %v1162, 2
        %vm1164 = vcmp.gt.s32.totalorder 0, %v1163
        %v1165 = vsel %vm1164, 0, %v1163
        %v1166 = vsub.s32 32, %v1165
        %v1167 = vshll.u32 %v1158, %v1165
        %v1168 = vshrl.u32 %v1150, %v1166
        %v1169 = vor.u32 %v1167, %v1168
        %v1170 = vsub.s32 4294967266, %v1165
        %v1171 = vadd.s32 %v1170, 127
        %v1172 = vshll.u32 %v1171, 23
        %v1173 = vor.u32 4788187, %v1172
        %v1174 = vand.u32 2147483647, %v1173
        %v1176 = vcvt.s32.f32 %v1169
        %v1177 = vmul.f32 %v1176, %v1174
        %v1178 = vxor.u32 %v1177, 2147483648
        %v1179 = vsel %vm1096, %v1178, %v1177
        %v1180 = vsub.s32 4, %v1156
        %v1181 = vsel %vm1096, %v1180, %v1156
        %v1182 = vsel %vm1095, %v142, %v1179
        %v1183 = vsel %vm1095, 0, %v1181
        %v1184 = vcosq.f32.pop %v1182
        %v1185 = vsinq.f32.pop %v1182
        %vm1186 = vweird.f32 %v142
        %v1187 = vand.u32 %v1183, 3
        %vm1188 = vcmp.lt.s32.totalorder %v1187, 2
        %vm1189 = vcmp.eq.s32.totalorder %v1187, 0
        %v1190 = vxor.u32 %v1185, 2147483648
        %v1191 = vsel %vm1189, %v1184, %v1190
        %vm1192 = vcmp.eq.s32.totalorder %v1187, 2
        %v1193 = vxor.u32 %v1184, 2147483648
        %v1194 = vsel %vm1192, %v1193, %v1185
        %v1195 = vsel %vm1188, %v1191, %v1194
        %v1196 = vsel %vm1186, nan, %v1195
        %v1197 = vand.u32 2147483647, %v143
        %vm1198 = vcmp.le.f32.partialorder %v1197, 0.7853982
        %vm1199 = vcmp.lt.s32.totalorder %v143, 0
        %v1200 = vand.u32 %v143, 2139095040
        %v1201 = vshrl.u32 %v1200, 23
        %v1202 = vsub.s32 %v1201, 127
        %v1203 = vand.u32 2147483647, %v143
        %v1204 = vand.u32 %v1203, 8388607
        %v1205 = vor.u32 %v1204, 8388608
        %v1206 = vsub.s32 0, %v1205
        %v1207 = vadd.s32 %v1202, 1
        %vm1208 = vcmp.gt.s32.totalorder %v1207, 0
        %v1209 = vsel %vm1208, %v1207, 0
        %v1210 = vshrl.u32 %v1209, 5
        %v1211 = vand.u32 %v1209, 31
        %v1212 = vsub.s32 32, %v1211
        %v1213 = vshrl.u32 683565275, %v1212
        %v1214 = vshll.u32 683565275, %v1211
        %v1215 = vshrl.u32 2475754826, %v1212
        %v1216 = vor.u32 %v1214, %v1215
        %v1217 = vshll.u32 2475754826, %v1211
        %v1218 = vshrl.u32 2131351028, %v1212
        %v1219 = vor.u32 %v1217, %v1218
        %v1220 = vshll.u32 2131351028, %v1211
        %v1221 = vshrl.u32 2102212464, %v1212
        %v1222 = vor.u32 %v1220, %v1221
        %v1223 = vshll.u32 2102212464, %v1211
        %v1224 = vshrl.u32 920167782, %v1212
        %v1225 = vor.u32 %v1223, %v1224
        %v1226 = vshll.u32 920167782, %v1211
        %v1227 = vshrl.u32 1326507024, %v1212
        %v1228 = vor.u32 %v1226, %v1227
        %vm1229 = vcmp.lt.s32.totalorder %v1210, 1
        %vm1230 = vcmp.lt.s32.totalorder %v1210, 2
        %vm1231 = vcmp.lt.s32.totalorder %v1210, 3
        %vm1232 = vcmp.lt.s32.totalorder %v1210, 4
        %v1233 = vsel %vm1229, %v1213, %v1216
        %v1234 = vsel %vm1232, %v1222, 2102212464
        %v1235 = vsel %vm1231, %v1219, %v1234
        %v1236 = vsel %vm1230, %v1233, %v1235
        %v1237 = vsel %vm1229, %v1216, %v1219
        %v1238 = vsel %vm1232, %v1225, 920167782
        %v1239 = vsel %vm1231, %v1222, %v1238
        %v1240 = vsel %vm1230, %v1237, %v1239
        %v1241 = vsel %vm1229, %v1219, %v1222
        %v1242 = vsel %vm1232, %v1228, 1326507024
        %v1243 = vsel %vm1231, %v1225, %v1242
        %v1244 = vsel %vm1230, %v1241, %v1243
        %v1245 = vshll.u32 %v1205, 8
        %v1246 = vmul.u32.u64.compose %v1245, %v1244
        %v1247 = vextract.low.u32 %v1246
        %v1248 = vextract.high.u32 %v1246
        %v1249 = vmul.u32.u64.compose %v1245, %v1240
        %v1250 = vextract.low.u32 %v1249
        %v1251 = vextract.high.u32 %v1249
        %v1252 = vmul.u32 %v1245, %v1236
        %v1253 = vadd.s32 %v1248, %v1250
        %vm1254 = vc.u32 %v1248, %v1250
        %v1255 = vadd.s32 %v1251, 1
        %v1256 = vsel %vm1254, %v1255, %v1251
        %v1257 = vadd.s32 %v1252, %v1256
        %v1258 = vadd.s32 %v1257, 536870912
        %v1259 = vshrl.u32 %v1258, 30
        %v1260 = vshll.u32 %v1259, 30
        %v1261 = vsub.s32 %v1257, %v1260
        %vm1262 = vcmp.lt.s32.totalorder %v1261, 0
        %v1263 = vsub.s32 0, %v1261
        %v1264 = vsel %vm1262, %v1263, %v1261
        %v1265 = vclz %v1264
        %v1266 = vsub.s32 %v1265, 2
        %vm1267 = vcmp.gt.s32.totalorder 0, %v1266
        %v1268 = vsel %vm1267, 0, %v1266
        %v1269 = vsub.s32 32, %v1268
        %v1270 = vshll.u32 %v1261, %v1268
        %v1271 = vshrl.u32 %v1253, %v1269
        %v1272 = vor.u32 %v1270, %v1271
        %v1273 = vsub.s32 4294967266, %v1268
        %v1274 = vadd.s32 %v1273, 127
        %v1275 = vshll.u32 %v1274, 23
        %v1276 = vor.u32 4788187, %v1275
        %v1277 = vand.u32 2147483647, %v1276
        %v1279 = vcvt.s32.f32 %v1272
        %v1280 = vmul.f32 %v1279, %v1277
        %v1281 = vxor.u32 %v1280, 2147483648
        %v1282 = vsel %vm1199, %v1281, %v1280
        %v1283 = vsub.s32 4, %v1259
        %v1284 = vsel %vm1199, %v1283, %v1259
        %v1285 = vsel %vm1198, %v143, %v1282
        %v1286 = vsel %vm1198, 0, %v1284
        %v1287 = vcosq.f32.pop %v1285
        %v1288 = vsinq.f32.pop %v1285
        %vm1289 = vweird.f32 %v143
        %v1290 = vand.u32 %v1286, 3
        %vm1291 = vcmp.lt.s32.totalorder %v1290, 2
        %vm1292 = vcmp.eq.s32.totalorder %v1290, 0
        %v1293 = vxor.u32 %v1288, 2147483648
        %v1294 = vsel %vm1292, %v1287, %v1293
        %vm1295 = vcmp.eq.s32.totalorder %v1290, 2
        %v1296 = vxor.u32 %v1287, 2147483648
        %v1297 = vsel %vm1295, %v1296, %v1288
        %v1298 = vsel %vm1291, %v1294, %v1297
        %v1299 = vsel %vm1289, nan, %v1298
        %v1300 = vand.u32 2147483647, %v144
        %vm1301 = vcmp.le.f32.partialorder %v1300, 0.7853982
        %vm1302 = vcmp.lt.s32.totalorder %v144, 0
        %v1303 = vand.u32 %v144, 2139095040
        %v1304 = vshrl.u32 %v1303, 23
        %v1305 = vsub.s32 %v1304, 127
        %v1306 = vand.u32 2147483647, %v144
        %v1307 = vand.u32 %v1306, 8388607
        %v1308 = vor.u32 %v1307, 8388608
        %v1309 = vsub.s32 0, %v1308
        %v1310 = vadd.s32 %v1305, 1
        %vm1311 = vcmp.gt.s32.totalorder %v1310, 0
        %v1312 = vsel %vm1311, %v1310, 0
        %v1313 = vshrl.u32 %v1312, 5
        %v1314 = vand.u32 %v1312, 31
        %v1315 = vsub.s32 32, %v1314
        %v1316 = vshrl.u32 683565275, %v1315
        %v1317 = vshll.u32 683565275, %v1314
        %v1318 = vshrl.u32 2475754826, %v1315
        %v1319 = vor.u32 %v1317, %v1318
        %v1320 = vshll.u32 2475754826, %v1314
        %v1321 = vshrl.u32 2131351028, %v1315
        %v1322 = vor.u32 %v1320, %v1321
        %v1323 = vshll.u32 2131351028, %v1314
        %v1324 = vshrl.u32 2102212464, %v1315
        %v1325 = vor.u32 %v1323, %v1324
        %v1326 = vshll.u32 2102212464, %v1314
        %v1327 = vshrl.u32 920167782, %v1315
        %v1328 = vor.u32 %v1326, %v1327
        %v1329 = vshll.u32 920167782, %v1314
        %v1330 = vshrl.u32 1326507024, %v1315
        %v1331 = vor.u32 %v1329, %v1330
        %vm1332 = vcmp.lt.s32.totalorder %v1313, 1
        %vm1333 = vcmp.lt.s32.totalorder %v1313, 2
        %vm1334 = vcmp.lt.s32.totalorder %v1313, 3
        %vm1335 = vcmp.lt.s32.totalorder %v1313, 4
        %v1336 = vsel %vm1332, %v1316, %v1319
        %v1337 = vsel %vm1335, %v1325, 2102212464
        %v1338 = vsel %vm1334, %v1322, %v1337
        %v1339 = vsel %vm1333, %v1336, %v1338
        %v1340 = vsel %vm1332, %v1319, %v1322
        %v1341 = vsel %vm1335, %v1328, 920167782
        %v1342 = vsel %vm1334, %v1325, %v1341
        %v1343 = vsel %vm1333, %v1340, %v1342
        %v1344 = vsel %vm1332, %v1322, %v1325
        %v1345 = vsel %vm1335, %v1331, 1326507024
        %v1346 = vsel %vm1334, %v1328, %v1345
        %v1347 = vsel %vm1333, %v1344, %v1346
        %v1348 = vshll.u32 %v1308, 8
        %v1349 = vmul.u32.u64.compose %v1348, %v1347
        %v1350 = vextract.low.u32 %v1349
        %v1351 = vextract.high.u32 %v1349
        %v1352 = vmul.u32.u64.compose %v1348, %v1343
        %v1353 = vextract.low.u32 %v1352
        %v1354 = vextract.high.u32 %v1352
        %v1355 = vmul.u32 %v1348, %v1339
        %v1356 = vadd.s32 %v1351, %v1353
        %vm1357 = vc.u32 %v1351, %v1353
        %v1358 = vadd.s32 %v1354, 1
        %v1359 = vsel %vm1357, %v1358, %v1354
        %v1360 = vadd.s32 %v1355, %v1359
        %v1361 = vadd.s32 %v1360, 536870912
        %v1362 = vshrl.u32 %v1361, 30
        %v1363 = vshll.u32 %v1362, 30
        %v1364 = vsub.s32 %v1360, %v1363
        %vm1365 = vcmp.lt.s32.totalorder %v1364, 0
        %v1366 = vsub.s32 0, %v1364
        %v1367 = vsel %vm1365, %v1366, %v1364
        %v1368 = vclz %v1367
        %v1369 = vsub.s32 %v1368, 2
        %vm1370 = vcmp.gt.s32.totalorder 0, %v1369
        %v1371 = vsel %vm1370, 0, %v1369
        %v1372 = vsub.s32 32, %v1371
        %v1373 = vshll.u32 %v1364, %v1371
        %v1374 = vshrl.u32 %v1356, %v1372
        %v1375 = vor.u32 %v1373, %v1374
        %v1376 = vsub.s32 4294967266, %v1371
        %v1377 = vadd.s32 %v1376, 127
        %v1378 = vshll.u32 %v1377, 23
        %v1379 = vor.u32 4788187, %v1378
        %v1380 = vand.u32 2147483647, %v1379
        %v1382 = vcvt.s32.f32 %v1375
        %v1383 = vmul.f32 %v1382, %v1380
        %v1384 = vxor.u32 %v1383, 2147483648
        %v1385 = vsel %vm1302, %v1384, %v1383
        %v1386 = vsub.s32 4, %v1362
        %v1387 = vsel %vm1302, %v1386, %v1362
        %v1388 = vsel %vm1301, %v144, %v1385
        %v1389 = vsel %vm1301, 0, %v1387
        %v1390 = vcosq.f32.pop %v1388
        %v1391 = vsinq.f32.pop %v1388
        %vm1392 = vweird.f32 %v144
        %v1393 = vand.u32 %v1389, 3
        %vm1394 = vcmp.lt.s32.totalorder %v1393, 2
        %vm1395 = vcmp.eq.s32.totalorder %v1393, 0
        %v1396 = vxor.u32 %v1391, 2147483648
        %v1397 = vsel %vm1395, %v1390, %v1396
        %vm1398 = vcmp.eq.s32.totalorder %v1393, 2
        %v1399 = vxor.u32 %v1390, 2147483648
        %v1400 = vsel %vm1398, %v1399, %v1391
        %v1401 = vsel %vm1394, %v1397, %v1400
        %v1402 = vsel %vm1392, nan, %v1401
        %v1403 = vand.u32 2147483647, %v145
        %vm1404 = vcmp.le.f32.partialorder %v1403, 0.7853982
        %vm1405 = vcmp.lt.s32.totalorder %v145, 0
        %v1406 = vand.u32 %v145, 2139095040
        %v1407 = vshrl.u32 %v1406, 23
        %v1408 = vsub.s32 %v1407, 127
        %v1409 = vand.u32 2147483647, %v145
        %v1410 = vand.u32 %v1409, 8388607
        %v1411 = vor.u32 %v1410, 8388608
        %v1412 = vsub.s32 0, %v1411
        %v1413 = vadd.s32 %v1408, 1
        %vm1414 = vcmp.gt.s32.totalorder %v1413, 0
        %v1415 = vsel %vm1414, %v1413, 0
        %v1416 = vshrl.u32 %v1415, 5
        %v1417 = vand.u32 %v1415, 31
        %v1418 = vsub.s32 32, %v1417
        %v1419 = vshrl.u32 683565275, %v1418
        %v1420 = vshll.u32 683565275, %v1417
        %v1421 = vshrl.u32 2475754826, %v1418
        %v1422 = vor.u32 %v1420, %v1421
        %v1423 = vshll.u32 2475754826, %v1417
        %v1424 = vshrl.u32 2131351028, %v1418
        %v1425 = vor.u32 %v1423, %v1424
        %v1426 = vshll.u32 2131351028, %v1417
        %v1427 = vshrl.u32 2102212464, %v1418
        %v1428 = vor.u32 %v1426, %v1427
        %v1429 = vshll.u32 2102212464, %v1417
        %v1430 = vshrl.u32 920167782, %v1418
        %v1431 = vor.u32 %v1429, %v1430
        %v1432 = vshll.u32 920167782, %v1417
        %v1433 = vshrl.u32 1326507024, %v1418
        %v1434 = vor.u32 %v1432, %v1433
        %vm1435 = vcmp.lt.s32.totalorder %v1416, 1
        %vm1436 = vcmp.lt.s32.totalorder %v1416, 2
        %vm1437 = vcmp.lt.s32.totalorder %v1416, 3
        %vm1438 = vcmp.lt.s32.totalorder %v1416, 4
        %v1439 = vsel %vm1435, %v1419, %v1422
        %v1440 = vsel %vm1438, %v1428, 2102212464
        %v1441 = vsel %vm1437, %v1425, %v1440
        %v1442 = vsel %vm1436, %v1439, %v1441
        %v1443 = vsel %vm1435, %v1422, %v1425
        %v1444 = vsel %vm1438, %v1431, 920167782
        %v1445 = vsel %vm1437, %v1428, %v1444
        %v1446 = vsel %vm1436, %v1443, %v1445
        %v1447 = vsel %vm1435, %v1425, %v1428
        %v1448 = vsel %vm1438, %v1434, 1326507024
        %v1449 = vsel %vm1437, %v1431, %v1448
        %v1450 = vsel %vm1436, %v1447, %v1449
        %v1451 = vshll.u32 %v1411, 8
        %v1452 = vmul.u32.u64.compose %v1451, %v1450
        %v1453 = vextract.low.u32 %v1452
        %v1454 = vextract.high.u32 %v1452
        %v1455 = vmul.u32.u64.compose %v1451, %v1446
        %v1456 = vextract.low.u32 %v1455
        %v1457 = vextract.high.u32 %v1455
        %v1458 = vmul.u32 %v1451, %v1442
        %v1459 = vadd.s32 %v1454, %v1456
        %vm1460 = vc.u32 %v1454, %v1456
        %v1461 = vadd.s32 %v1457, 1
        %v1462 = vsel %vm1460, %v1461, %v1457
        %v1463 = vadd.s32 %v1458, %v1462
        %v1464 = vadd.s32 %v1463, 536870912
        %v1465 = vshrl.u32 %v1464, 30
        %v1466 = vshll.u32 %v1465, 30
        %v1467 = vsub.s32 %v1463, %v1466
        %vm1468 = vcmp.lt.s32.totalorder %v1467, 0
        %v1469 = vsub.s32 0, %v1467
        %v1470 = vsel %vm1468, %v1469, %v1467
        %v1471 = vclz %v1470
        %v1472 = vsub.s32 %v1471, 2
        %vm1473 = vcmp.gt.s32.totalorder 0, %v1472
        %v1474 = vsel %vm1473, 0, %v1472
        %v1475 = vsub.s32 32, %v1474
        %v1476 = vshll.u32 %v1467, %v1474
        %v1477 = vshrl.u32 %v1459, %v1475
        %v1478 = vor.u32 %v1476, %v1477
        %v1479 = vsub.s32 4294967266, %v1474
        %v1480 = vadd.s32 %v1479, 127
        %v1481 = vshll.u32 %v1480, 23
        %v1482 = vor.u32 4788187, %v1481
        %v1483 = vand.u32 2147483647, %v1482
        %v1485 = vcvt.s32.f32 %v1478
        %v1486 = vmul.f32 %v1485, %v1483
        %v1487 = vxor.u32 %v1486, 2147483648
        %v1488 = vsel %vm1405, %v1487, %v1486
        %v1489 = vsub.s32 4, %v1465
        %v1490 = vsel %vm1405, %v1489, %v1465
        %v1491 = vsel %vm1404, %v145, %v1488
        %v1492 = vsel %vm1404, 0, %v1490
        %v1493 = vcosq.f32.pop %v1491
        %v1494 = vsinq.f32.pop %v1491
        %vm1495 = vweird.f32 %v145
        %v1496 = vand.u32 %v1492, 3
        %vm1497 = vcmp.lt.s32.totalorder %v1496, 2
        %vm1498 = vcmp.eq.s32.totalorder %v1496, 0
        %v1499 = vxor.u32 %v1494, 2147483648
        %v1500 = vsel %vm1498, %v1493, %v1499
        %vm1501 = vcmp.eq.s32.totalorder %v1496, 2
        %v1502 = vxor.u32 %v1493, 2147483648
        %v1503 = vsel %vm1501, %v1502, %v1494
        %v1504 = vsel %vm1497, %v1500, %v1503
        %v1505 = vsel %vm1495, nan, %v1504
        %v1506 = vand.u32 2147483647, %v146
        %vm1507 = vcmp.le.f32.partialorder %v1506, 0.7853982
        %vm1508 = vcmp.lt.s32.totalorder %v146, 0
        %v1509 = vand.u32 %v146, 2139095040
        %v1510 = vshrl.u32 %v1509, 23
        %v1511 = vsub.s32 %v1510, 127
        %v1512 = vand.u32 2147483647, %v146
        %v1513 = vand.u32 %v1512, 8388607
        %v1514 = vor.u32 %v1513, 8388608
        %v1515 = vsub.s32 0, %v1514
        %v1516 = vadd.s32 %v1511, 1
        %vm1517 = vcmp.gt.s32.totalorder %v1516, 0
        %v1518 = vsel %vm1517, %v1516, 0
        %v1519 = vshrl.u32 %v1518, 5
        %v1520 = vand.u32 %v1518, 31
        %v1521 = vsub.s32 32, %v1520
        %v1522 = vshrl.u32 683565275, %v1521
        %v1523 = vshll.u32 683565275, %v1520
        %v1524 = vshrl.u32 2475754826, %v1521
        %v1525 = vor.u32 %v1523, %v1524
        %v1526 = vshll.u32 2475754826, %v1520
        %v1527 = vshrl.u32 2131351028, %v1521
        %v1528 = vor.u32 %v1526, %v1527
        %v1529 = vshll.u32 2131351028, %v1520
        %v1530 = vshrl.u32 2102212464, %v1521
        %v1531 = vor.u32 %v1529, %v1530
        %v1532 = vshll.u32 2102212464, %v1520
        %v1533 = vshrl.u32 920167782, %v1521
        %v1534 = vor.u32 %v1532, %v1533
        %v1535 = vshll.u32 920167782, %v1520
        %v1536 = vshrl.u32 1326507024, %v1521
        %v1537 = vor.u32 %v1535, %v1536
        %vm1538 = vcmp.lt.s32.totalorder %v1519, 1
        %vm1539 = vcmp.lt.s32.totalorder %v1519, 2
        %vm1540 = vcmp.lt.s32.totalorder %v1519, 3
        %vm1541 = vcmp.lt.s32.totalorder %v1519, 4
        %v1542 = vsel %vm1538, %v1522, %v1525
        %v1543 = vsel %vm1541, %v1531, 2102212464
        %v1544 = vsel %vm1540, %v1528, %v1543
        %v1545 = vsel %vm1539, %v1542, %v1544
        %v1546 = vsel %vm1538, %v1525, %v1528
        %v1547 = vsel %vm1541, %v1534, 920167782
        %v1548 = vsel %vm1540, %v1531, %v1547
        %v1549 = vsel %vm1539, %v1546, %v1548
        %v1550 = vsel %vm1538, %v1528, %v1531
        %v1551 = vsel %vm1541, %v1537, 1326507024
        %v1552 = vsel %vm1540, %v1534, %v1551
        %v1553 = vsel %vm1539, %v1550, %v1552
        %v1554 = vshll.u32 %v1514, 8
        %v1555 = vmul.u32.u64.compose %v1554, %v1553
        %v1556 = vextract.low.u32 %v1555
        %v1557 = vextract.high.u32 %v1555
        %v1558 = vmul.u32.u64.compose %v1554, %v1549
        %v1559 = vextract.low.u32 %v1558
        %v1560 = vextract.high.u32 %v1558
        %v1561 = vmul.u32 %v1554, %v1545
        %v1562 = vadd.s32 %v1557, %v1559
        %vm1563 = vc.u32 %v1557, %v1559
        %v1564 = vadd.s32 %v1560, 1
        %v1565 = vsel %vm1563, %v1564, %v1560
        %v1566 = vadd.s32 %v1561, %v1565
        %v1567 = vadd.s32 %v1566, 536870912
        %v1568 = vshrl.u32 %v1567, 30
        %v1569 = vshll.u32 %v1568, 30
        %v1570 = vsub.s32 %v1566, %v1569
        %vm1571 = vcmp.lt.s32.totalorder %v1570, 0
        %v1572 = vsub.s32 0, %v1570
        %v1573 = vsel %vm1571, %v1572, %v1570
        %v1574 = vclz %v1573
        %v1575 = vsub.s32 %v1574, 2
        %vm1576 = vcmp.gt.s32.totalorder 0, %v1575
        %v1577 = vsel %vm1576, 0, %v1575
        %v1578 = vsub.s32 32, %v1577
        %v1579 = vshll.u32 %v1570, %v1577
        %v1580 = vshrl.u32 %v1562, %v1578
        %v1581 = vor.u32 %v1579, %v1580
        %v1582 = vsub.s32 4294967266, %v1577
        %v1583 = vadd.s32 %v1582, 127
        %v1584 = vshll.u32 %v1583, 23
        %v1585 = vor.u32 4788187, %v1584
        %v1586 = vand.u32 2147483647, %v1585
        %v1588 = vcvt.s32.f32 %v1581
        %v1589 = vmul.f32 %v1588, %v1586
        %v1590 = vxor.u32 %v1589, 2147483648
        %v1591 = vsel %vm1508, %v1590, %v1589
        %v1592 = vsub.s32 4, %v1568
        %v1593 = vsel %vm1508, %v1592, %v1568
        %v1594 = vsel %vm1507, %v146, %v1591
        %v1595 = vsel %vm1507, 0, %v1593
        %v1596 = vcosq.f32.pop %v1594
        %v1597 = vsinq.f32.pop %v1594
        %vm1598 = vweird.f32 %v146
        %v1599 = vand.u32 %v1595, 3
        %vm1600 = vcmp.lt.s32.totalorder %v1599, 2
        %vm1601 = vcmp.eq.s32.totalorder %v1599, 0
        %v1602 = vxor.u32 %v1597, 2147483648
        %v1603 = vsel %vm1601, %v1596, %v1602
        %vm1604 = vcmp.eq.s32.totalorder %v1599, 2
        %v1605 = vxor.u32 %v1596, 2147483648
        %v1606 = vsel %vm1604, %v1605, %v1597
        %v1607 = vsel %vm1600, %v1603, %v1606
        %v1608 = vsel %vm1598, nan, %v1607
        %v1609 = vand.u32 2147483647, %v147
        %vm1610 = vcmp.le.f32.partialorder %v1609, 0.7853982
        %vm1611 = vcmp.lt.s32.totalorder %v147, 0
        %v1612 = vand.u32 %v147, 2139095040
        %v1613 = vshrl.u32 %v1612, 23
        %v1614 = vsub.s32 %v1613, 127
        %v1615 = vand.u32 2147483647, %v147
        %v1616 = vand.u32 %v1615, 8388607
        %v1617 = vor.u32 %v1616, 8388608
        %v1618 = vsub.s32 0, %v1617
        %v1619 = vadd.s32 %v1614, 1
        %vm1620 = vcmp.gt.s32.totalorder %v1619, 0
        %v1621 = vsel %vm1620, %v1619, 0
        %v1622 = vshrl.u32 %v1621, 5
        %v1623 = vand.u32 %v1621, 31
        %v1624 = vsub.s32 32, %v1623
        %v1625 = vshrl.u32 683565275, %v1624
        %v1626 = vshll.u32 683565275, %v1623
        %v1627 = vshrl.u32 2475754826, %v1624
        %v1628 = vor.u32 %v1626, %v1627
        %v1629 = vshll.u32 2475754826, %v1623
        %v1630 = vshrl.u32 2131351028, %v1624
        %v1631 = vor.u32 %v1629, %v1630
        %v1632 = vshll.u32 2131351028, %v1623
        %v1633 = vshrl.u32 2102212464, %v1624
        %v1634 = vor.u32 %v1632, %v1633
        %v1635 = vshll.u32 2102212464, %v1623
        %v1636 = vshrl.u32 920167782, %v1624
        %v1637 = vor.u32 %v1635, %v1636
        %v1638 = vshll.u32 920167782, %v1623
        %v1639 = vshrl.u32 1326507024, %v1624
        %v1640 = vor.u32 %v1638, %v1639
        %vm1641 = vcmp.lt.s32.totalorder %v1622, 1
        %vm1642 = vcmp.lt.s32.totalorder %v1622, 2
        %vm1643 = vcmp.lt.s32.totalorder %v1622, 3
        %vm1644 = vcmp.lt.s32.totalorder %v1622, 4
        %v1645 = vsel %vm1641, %v1625, %v1628
        %v1646 = vsel %vm1644, %v1634, 2102212464
        %v1647 = vsel %vm1643, %v1631, %v1646
        %v1648 = vsel %vm1642, %v1645, %v1647
        %v1649 = vsel %vm1641, %v1628, %v1631
        %v1650 = vsel %vm1644, %v1637, 920167782
        %v1651 = vsel %vm1643, %v1634, %v1650
        %v1652 = vsel %vm1642, %v1649, %v1651
        %v1653 = vsel %vm1641, %v1631, %v1634
        %v1654 = vsel %vm1644, %v1640, 1326507024
        %v1655 = vsel %vm1643, %v1637, %v1654
        %v1656 = vsel %vm1642, %v1653, %v1655
        %v1657 = vshll.u32 %v1617, 8
        %v1658 = vmul.u32.u64.compose %v1657, %v1656
        %v1659 = vextract.low.u32 %v1658
        %v1660 = vextract.high.u32 %v1658
        %v1661 = vmul.u32.u64.compose %v1657, %v1652
        %v1662 = vextract.low.u32 %v1661
        %v1663 = vextract.high.u32 %v1661
        %v1664 = vmul.u32 %v1657, %v1648
        %v1665 = vadd.s32 %v1660, %v1662
        %vm1666 = vc.u32 %v1660, %v1662
        %v1667 = vadd.s32 %v1663, 1
        %v1668 = vsel %vm1666, %v1667, %v1663
        %v1669 = vadd.s32 %v1664, %v1668
        %v1670 = vadd.s32 %v1669, 536870912
        %v1671 = vshrl.u32 %v1670, 30
        %v1672 = vshll.u32 %v1671, 30
        %v1673 = vsub.s32 %v1669, %v1672
        %vm1674 = vcmp.lt.s32.totalorder %v1673, 0
        %v1675 = vsub.s32 0, %v1673
        %v1676 = vsel %vm1674, %v1675, %v1673
        %v1677 = vclz %v1676
        %v1678 = vsub.s32 %v1677, 2
        %vm1679 = vcmp.gt.s32.totalorder 0, %v1678
        %v1680 = vsel %vm1679, 0, %v1678
        %v1681 = vsub.s32 32, %v1680
        %v1682 = vshll.u32 %v1673, %v1680
        %v1683 = vshrl.u32 %v1665, %v1681
        %v1684 = vor.u32 %v1682, %v1683
        %v1685 = vsub.s32 4294967266, %v1680
        %v1686 = vadd.s32 %v1685, 127
        %v1687 = vshll.u32 %v1686, 23
        %v1688 = vor.u32 4788187, %v1687
        %v1689 = vand.u32 2147483647, %v1688
        %v1691 = vcvt.s32.f32 %v1684
        %v1692 = vmul.f32 %v1691, %v1689
        %v1693 = vxor.u32 %v1692, 2147483648
        %v1694 = vsel %vm1611, %v1693, %v1692
        %v1695 = vsub.s32 4, %v1671
        %v1696 = vsel %vm1611, %v1695, %v1671
        %v1697 = vsel %vm1610, %v147, %v1694
        %v1698 = vsel %vm1610, 0, %v1696
        %v1699 = vcosq.f32.pop %v1697
        %v1700 = vsinq.f32.pop %v1697
        %vm1701 = vweird.f32 %v147
        %v1702 = vand.u32 %v1698, 3
        %vm1703 = vcmp.lt.s32.totalorder %v1702, 2
        %vm1704 = vcmp.eq.s32.totalorder %v1702, 0
        %v1705 = vxor.u32 %v1700, 2147483648
        %v1706 = vsel %vm1704, %v1699, %v1705
        %vm1707 = vcmp.eq.s32.totalorder %v1702, 2
        %v1708 = vxor.u32 %v1699, 2147483648
        %v1709 = vsel %vm1707, %v1708, %v1700
        %v1710 = vsel %vm1703, %v1706, %v1709
        %v1711 = vsel %vm1701, nan, %v1710
        %v1712 = vand.u32 2147483647, %v148
        %vm1713 = vcmp.le.f32.partialorder %v1712, 0.7853982
        %vm1714 = vcmp.lt.s32.totalorder %v148, 0
        %v1715 = vand.u32 %v148, 2139095040
        %v1716 = vshrl.u32 %v1715, 23
        %v1717 = vsub.s32 %v1716, 127
        %v1718 = vand.u32 2147483647, %v148
        %v1719 = vand.u32 %v1718, 8388607
        %v1720 = vor.u32 %v1719, 8388608
        %v1721 = vsub.s32 0, %v1720
        %v1722 = vadd.s32 %v1717, 1
        %vm1723 = vcmp.gt.s32.totalorder %v1722, 0
        %v1724 = vsel %vm1723, %v1722, 0
        %v1725 = vshrl.u32 %v1724, 5
        %v1726 = vand.u32 %v1724, 31
        %v1727 = vsub.s32 32, %v1726
        %v1728 = vshrl.u32 683565275, %v1727
        %v1729 = vshll.u32 683565275, %v1726
        %v1730 = vshrl.u32 2475754826, %v1727
        %v1731 = vor.u32 %v1729, %v1730
        %v1732 = vshll.u32 2475754826, %v1726
        %v1733 = vshrl.u32 2131351028, %v1727
        %v1734 = vor.u32 %v1732, %v1733
        %v1735 = vshll.u32 2131351028, %v1726
        %v1736 = vshrl.u32 2102212464, %v1727
        %v1737 = vor.u32 %v1735, %v1736
        %v1738 = vshll.u32 2102212464, %v1726
        %v1739 = vshrl.u32 920167782, %v1727
        %v1740 = vor.u32 %v1738, %v1739
        %v1741 = vshll.u32 920167782, %v1726
        %v1742 = vshrl.u32 1326507024, %v1727
        %v1743 = vor.u32 %v1741, %v1742
        %vm1744 = vcmp.lt.s32.totalorder %v1725, 1
        %vm1745 = vcmp.lt.s32.totalorder %v1725, 2
        %vm1746 = vcmp.lt.s32.totalorder %v1725, 3
        %vm1747 = vcmp.lt.s32.totalorder %v1725, 4
        %v1748 = vsel %vm1744, %v1728, %v1731
        %v1749 = vsel %vm1747, %v1737, 2102212464
        %v1750 = vsel %vm1746, %v1734, %v1749
        %v1751 = vsel %vm1745, %v1748, %v1750
        %v1752 = vsel %vm1744, %v1731, %v1734
        %v1753 = vsel %vm1747, %v1740, 920167782
        %v1754 = vsel %vm1746, %v1737, %v1753
        %v1755 = vsel %vm1745, %v1752, %v1754
        %v1756 = vsel %vm1744, %v1734, %v1737
        %v1757 = vsel %vm1747, %v1743, 1326507024
        %v1758 = vsel %vm1746, %v1740, %v1757
        %v1759 = vsel %vm1745, %v1756, %v1758
        %v1760 = vshll.u32 %v1720, 8
        %v1761 = vmul.u32.u64.compose %v1760, %v1759
        %v1762 = vextract.low.u32 %v1761
        %v1763 = vextract.high.u32 %v1761
        %v1764 = vmul.u32.u64.compose %v1760, %v1755
        %v1765 = vextract.low.u32 %v1764
        %v1766 = vextract.high.u32 %v1764
        %v1767 = vmul.u32 %v1760, %v1751
        %v1768 = vadd.s32 %v1763, %v1765
        %vm1769 = vc.u32 %v1763, %v1765
        %v1770 = vadd.s32 %v1766, 1
        %v1771 = vsel %vm1769, %v1770, %v1766
        %v1772 = vadd.s32 %v1767, %v1771
        %v1773 = vadd.s32 %v1772, 536870912
        %v1774 = vshrl.u32 %v1773, 30
        %v1775 = vshll.u32 %v1774, 30
        %v1776 = vsub.s32 %v1772, %v1775
        %vm1777 = vcmp.lt.s32.totalorder %v1776, 0
        %v1778 = vsub.s32 0, %v1776
        %v1779 = vsel %vm1777, %v1778, %v1776
        %v1780 = vclz %v1779
        %v1781 = vsub.s32 %v1780, 2
        %vm1782 = vcmp.gt.s32.totalorder 0, %v1781
        %v1783 = vsel %vm1782, 0, %v1781
        %v1784 = vsub.s32 32, %v1783
        %v1785 = vshll.u32 %v1776, %v1783
        %v1786 = vshrl.u32 %v1768, %v1784
        %v1787 = vor.u32 %v1785, %v1786
        %v1788 = vsub.s32 4294967266, %v1783
        %v1789 = vadd.s32 %v1788, 127
        %v1790 = vshll.u32 %v1789, 23
        %v1791 = vor.u32 4788187, %v1790
        %v1792 = vand.u32 2147483647, %v1791
        %v1794 = vcvt.s32.f32 %v1787
        %v1795 = vmul.f32 %v1794, %v1792
        %v1796 = vxor.u32 %v1795, 2147483648
        %v1797 = vsel %vm1714, %v1796, %v1795
        %v1798 = vsub.s32 4, %v1774
        %v1799 = vsel %vm1714, %v1798, %v1774
        %v1800 = vsel %vm1713, %v148, %v1797
        %v1801 = vsel %vm1713, 0, %v1799
        %v1802 = vcosq.f32.pop %v1800
        %v1803 = vsinq.f32.pop %v1800
        %vm1804 = vweird.f32 %v148
        %v1805 = vand.u32 %v1801, 3
        %vm1806 = vcmp.lt.s32.totalorder %v1805, 2
        %vm1807 = vcmp.eq.s32.totalorder %v1805, 0
        %v1808 = vxor.u32 %v1803, 2147483648
        %v1809 = vsel %vm1807, %v1802, %v1808
        %vm1810 = vcmp.eq.s32.totalorder %v1805, 2
        %v1811 = vxor.u32 %v1802, 2147483648
        %v1812 = vsel %vm1810, %v1811, %v1803
        %v1813 = vsel %vm1806, %v1809, %v1812
        %v1814 = vsel %vm1804, nan, %v1813
        %s1815 = sadd.s32 %s138, 8
        %s1816 = smul.addr %s1815, 8
        %s1817 = scalar_lea.vmem %s135, %s1816 [#allocation5]
        %1818 = vst [vmem:[%s1817] sm:$0xff] %v262
        %1819 = vst [vmem:[%s1817 + $0x8] sm:$0xff] %v366
        %1820 = vst [vmem:[%s1817 + $0x10] sm:$0xff] %v470
        %1821 = vst [vmem:[%s1817 + $0x18] sm:$0xff] %v574
        %1822 = vst [vmem:[%s1817 + $0x20] sm:$0xff] %v678
        %1823 = vst [vmem:[%s1817 + $0x28] sm:$0xff] %v782
        %1824 = vst [vmem:[%s1817 + $0x30] sm:$0xff] %v886
        %1825 = vst [vmem:[%s1817 + $0x38] sm:$0xff] %v990
        %s1826 = sadd.s32 %s138, 16
        %s1827 = smul.addr %s1826, 8
        %s1828 = scalar_lea.vmem %s135, %s1827 [#allocation5]
        %1829 = vst [vmem:[%s1828] sm:$0xff] %v1093
        %1830 = vst [vmem:[%s1828 + $0x8] sm:$0xff] %v1196
        %1831 = vst [vmem:[%s1828 + $0x10] sm:$0xff] %v1299
        %1832 = vst [vmem:[%s1828 + $0x18] sm:$0xff] %v1402
        %1833 = vst [vmem:[%s1828 + $0x20] sm:$0xff] %v1505
        %1834 = vst [vmem:[%s1828 + $0x28] sm:$0xff] %v1608
        %1835 = vst [vmem:[%s1828 + $0x30] sm:$0xff] %v1711
        %1836 = vst [vmem:[%s1828 + $0x38] sm:$0xff] %v1814
        %v1837 = vmul.f32 %v262, 2.0
        %v1838 = vmul.f32 %v366, 2.0
        %v1839 = vmul.f32 %v470, 2.0
        %v1840 = vmul.f32 %v574, 2.0
        %v1841 = vmul.f32 %v678, 2.0
        %v1842 = vmul.f32 %v782, 2.0
        %v1843 = vmul.f32 %v886, 2.0
        %v1844 = vmul.f32 %v990, 2.0
        %v1845 = vmul.f32 %v1837, %v1093
        %v1846 = vmul.f32 %v1838, %v1196
        %v1847 = vmul.f32 %v1839, %v1299
        %v1848 = vmul.f32 %v1840, %v1402
        %v1849 = vmul.f32 %v1841, %v1505
        %v1850 = vmul.f32 %v1842, %v1608
        %v1851 = vmul.f32 %v1843, %v1711
        %v1852 = vmul.f32 %v1844, %v1814
        %v1853 = vmul.f32 %v1837, %v262
        %v1854 = vmul.f32 %v1838, %v366
        %v1855 = vmul.f32 %v1839, %v470
        %v1856 = vmul.f32 %v1840, %v574
        %v1857 = vmul.f32 %v1841, %v678
        %v1858 = vmul.f32 %v1842, %v782
        %v1859 = vmul.f32 %v1843, %v886
        %v1860 = vmul.f32 %v1844, %v990
        %v1861 = vsub.f32 1.0, %v1853
        %v1862 = vsub.f32 1.0, %v1854
        %v1863 = vsub.f32 1.0, %v1855
        %v1864 = vsub.f32 1.0, %v1856
        %v1865 = vsub.f32 1.0, %v1857
        %v1866 = vsub.f32 1.0, %v1858
        %v1867 = vsub.f32 1.0, %v1859
        %v1868 = vsub.f32 1.0, %v1860
        %s1869 = sadd.s32 %s138, 24
        %s1870 = smul.addr %s1869, 8
        %s1871 = scalar_lea.vmem %s135, %s1870 [#allocation5]
        %1872 = vst [vmem:[%s1871] sm:$0xff] %v1845
        %1873 = vst [vmem:[%s1871 + $0x8] sm:$0xff] %v1846
        %1874 = vst [vmem:[%s1871 + $0x10] sm:$0xff] %v1847
        %1875 = vst [vmem:[%s1871 + $0x18] sm:$0xff] %v1848
        %1876 = vst [vmem:[%s1871 + $0x20] sm:$0xff] %v1849
        %1877 = vst [vmem:[%s1871 + $0x28] sm:$0xff] %v1850
        %1878 = vst [vmem:[%s1871 + $0x30] sm:$0xff] %v1851
        %1879 = vst [vmem:[%s1871 + $0x38] sm:$0xff] %v1852
        %s1880 = sadd.s32 %s138, 32
        %s1881 = smul.addr %s1880, 8
        %s1882 = scalar_lea.vmem %s135, %s1881 [#allocation5]
        %1883 = vst [vmem:[%s1882] sm:$0xff] %v1861
        %1884 = vst [vmem:[%s1882 + $0x8] sm:$0xff] %v1862
        %1885 = vst [vmem:[%s1882 + $0x10] sm:$0xff] %v1863
        %1886 = vst [vmem:[%s1882 + $0x18] sm:$0xff] %v1864
        %1887 = vst [vmem:[%s1882 + $0x20] sm:$0xff] %v1865
        %1888 = vst [vmem:[%s1882 + $0x28] sm:$0xff] %v1866
        %1889 = vst [vmem:[%s1882 + $0x30] sm:$0xff] %v1867
        %1890 = vst [vmem:[%s1882 + $0x38] sm:$0xff] %v1868
        %v1891 = vmul.f32 %v1845, 2.0
        %v1892 = vmul.f32 %v1846, 2.0
        %v1893 = vmul.f32 %v1847, 2.0
        %v1894 = vmul.f32 %v1848, 2.0
        %v1895 = vmul.f32 %v1849, 2.0
        %v1896 = vmul.f32 %v1850, 2.0
        %v1897 = vmul.f32 %v1851, 2.0
        %v1898 = vmul.f32 %v1852, 2.0
        %v1899 = vmul.f32 %v1891, %v1861
        %v1900 = vmul.f32 %v1892, %v1862
        %v1901 = vmul.f32 %v1893, %v1863
        %v1902 = vmul.f32 %v1894, %v1864
        %v1903 = vmul.f32 %v1895, %v1865
        %v1904 = vmul.f32 %v1896, %v1866
        %v1905 = vmul.f32 %v1897, %v1867
        %v1906 = vmul.f32 %v1898, %v1868
        %v1907 = vmul.f32 %v1891, %v1845
        %v1908 = vmul.f32 %v1892, %v1846
        %v1909 = vmul.f32 %v1893, %v1847
        %v1910 = vmul.f32 %v1894, %v1848
        %v1911 = vmul.f32 %v1895, %v1849
        %v1912 = vmul.f32 %v1896, %v1850
        %v1913 = vmul.f32 %v1897, %v1851
        %v1914 = vmul.f32 %v1898, %v1852
        %v1915 = vsub.f32 1.0, %v1907
        %v1916 = vsub.f32 1.0, %v1908
        %v1917 = vsub.f32 1.0, %v1909
        %v1918 = vsub.f32 1.0, %v1910
        %v1919 = vsub.f32 1.0, %v1911
        %v1920 = vsub.f32 1.0, %v1912
        %v1921 = vsub.f32 1.0, %v1913
        %v1922 = vsub.f32 1.0, %v1914
        %s1923 = sadd.s32 %s138, 40
        %s1924 = smul.addr %s1923, 8
        %s1925 = scalar_lea.vmem %s135, %s1924 [#allocation5]
        %1926 = vst [vmem:[%s1925] sm:$0xff] %v1899
        %1927 = vst [vmem:[%s1925 + $0x8] sm:$0xff] %v1900
        %1928 = vst [vmem:[%s1925 + $0x10] sm:$0xff] %v1901
        %1929 = vst [vmem:[%s1925 + $0x18] sm:$0xff] %v1902
        %1930 = vst [vmem:[%s1925 + $0x20] sm:$0xff] %v1903
        %1931 = vst [vmem:[%s1925 + $0x28] sm:$0xff] %v1904
        %1932 = vst [vmem:[%s1925 + $0x30] sm:$0xff] %v1905
        %1933 = vst [vmem:[%s1925 + $0x38] sm:$0xff] %v1906
        %s1934 = sadd.s32 %s138, 48
        %s1935 = smul.addr %s1934, 8
        %s1936 = scalar_lea.vmem %s135, %s1935 [#allocation5]
        %1937 = vst [vmem:[%s1936] sm:$0xff] %v1915
        %1938 = vst [vmem:[%s1936 + $0x8] sm:$0xff] %v1916
        %1939 = vst [vmem:[%s1936 + $0x10] sm:$0xff] %v1917
        %1940 = vst [vmem:[%s1936 + $0x18] sm:$0xff] %v1918
        %1941 = vst [vmem:[%s1936 + $0x20] sm:$0xff] %v1919
        %1942 = vst [vmem:[%s1936 + $0x28] sm:$0xff] %v1920
        %1943 = vst [vmem:[%s1936 + $0x30] sm:$0xff] %v1921
        %1944 = vst [vmem:[%s1936 + $0x38] sm:$0xff] %v1922
        %v1945 = vmul.f32 %v1899, 2.0
        %v1946 = vmul.f32 %v1900, 2.0
        %v1947 = vmul.f32 %v1901, 2.0
        %v1948 = vmul.f32 %v1902, 2.0
        %v1949 = vmul.f32 %v1903, 2.0
        %v1950 = vmul.f32 %v1904, 2.0
        %v1951 = vmul.f32 %v1905, 2.0
        %v1952 = vmul.f32 %v1906, 2.0
        %v1953 = vmul.f32 %v1945, %v1915
        %v1954 = vmul.f32 %v1946, %v1916
        %v1955 = vmul.f32 %v1947, %v1917
        %v1956 = vmul.f32 %v1948, %v1918
        %v1957 = vmul.f32 %v1949, %v1919
        %v1958 = vmul.f32 %v1950, %v1920
        %v1959 = vmul.f32 %v1951, %v1921
        %v1960 = vmul.f32 %v1952, %v1922
        %v1961 = vmul.f32 %v1945, %v1899
        %v1962 = vmul.f32 %v1946, %v1900
        %v1963 = vmul.f32 %v1947, %v1901
        %v1964 = vmul.f32 %v1948, %v1902
        %v1965 = vmul.f32 %v1949, %v1903
        %v1966 = vmul.f32 %v1950, %v1904
        %v1967 = vmul.f32 %v1951, %v1905
        %v1968 = vmul.f32 %v1952, %v1906
        %v1969 = vsub.f32 1.0, %v1961
        %v1970 = vsub.f32 1.0, %v1962
        %v1971 = vsub.f32 1.0, %v1963
        %v1972 = vsub.f32 1.0, %v1964
        %v1973 = vsub.f32 1.0, %v1965
        %v1974 = vsub.f32 1.0, %v1966
        %v1975 = vsub.f32 1.0, %v1967
        %v1976 = vsub.f32 1.0, %v1968
        %s1977 = sadd.s32 %s138, 56
        %s1978 = smul.addr %s1977, 8
        %s1979 = scalar_lea.vmem %s135, %s1978 [#allocation5]
        %1980 = vst [vmem:[%s1979] sm:$0xff] %v1953
        %1981 = vst [vmem:[%s1979 + $0x8] sm:$0xff] %v1954
        %1982 = vst [vmem:[%s1979 + $0x10] sm:$0xff] %v1955
        %1983 = vst [vmem:[%s1979 + $0x18] sm:$0xff] %v1956
        %1984 = vst [vmem:[%s1979 + $0x20] sm:$0xff] %v1957
        %1985 = vst [vmem:[%s1979 + $0x28] sm:$0xff] %v1958
        %1986 = vst [vmem:[%s1979 + $0x30] sm:$0xff] %v1959
        %1987 = vst [vmem:[%s1979 + $0x38] sm:$0xff] %v1960
        %s1988 = sadd.s32 %s138, 64
        %s1989 = smul.addr %s1988, 8
        %s1990 = scalar_lea.vmem %s135, %s1989 [#allocation5]
        %1991 = vst [vmem:[%s1990] sm:$0xff] %v1969
        %1992 = vst [vmem:[%s1990 + $0x8] sm:$0xff] %v1970
        %1993 = vst [vmem:[%s1990 + $0x10] sm:$0xff] %v1971
        %1994 = vst [vmem:[%s1990 + $0x18] sm:$0xff] %v1972
        %1995 = vst [vmem:[%s1990 + $0x20] sm:$0xff] %v1973
        %1996 = vst [vmem:[%s1990 + $0x28] sm:$0xff] %v1974
        %1997 = vst [vmem:[%s1990 + $0x30] sm:$0xff] %v1975
        %1998 = vst [vmem:[%s1990 + $0x38] sm:$0xff] %v1976
        %v1999 = vmul.f32 %v141, 16.0
        %v2000 = vmul.f32 %v142, 16.0
        %v2001 = vmul.f32 %v143, 16.0
        %v2002 = vmul.f32 %v144, 16.0
        %v2003 = vmul.f32 %v145, 16.0
        %v2004 = vmul.f32 %v146, 16.0
        %v2005 = vmul.f32 %v147, 16.0
        %v2006 = vmul.f32 %v148, 16.0
        %v2007 = vand.u32 2147483647, %v1999
        %vm2008 = vcmp.le.f32.partialorder %v2007, 0.7853982
        %vm2009 = vcmp.lt.s32.totalorder %v1999, 0
        %v2010 = vand.u32 %v1999, 2139095040
        %v2011 = vshrl.u32 %v2010, 23
        %v2012 = vsub.s32 %v2011, 127
        %v2013 = vand.u32 2147483647, %v1999
        %v2014 = vand.u32 %v2013, 8388607
        %v2015 = vor.u32 %v2014, 8388608
        %v2016 = vsub.s32 0, %v2015
        %v2017 = vadd.s32 %v2012, 1
        %vm2018 = vcmp.gt.s32.totalorder %v2017, 0
        %v2019 = vsel %vm2018, %v2017, 0
        %v2020 = vshrl.u32 %v2019, 5
        %v2021 = vand.u32 %v2019, 31
        %v2022 = vsub.s32 32, %v2021
        %v2023 = vshrl.u32 683565275, %v2022
        %v2024 = vshll.u32 683565275, %v2021
        %v2025 = vshrl.u32 2475754826, %v2022
        %v2026 = vor.u32 %v2024, %v2025
        %v2027 = vshll.u32 2475754826, %v2021
        %v2028 = vshrl.u32 2131351028, %v2022
        %v2029 = vor.u32 %v2027, %v2028
        %v2030 = vshll.u32 2131351028, %v2021
        %v2031 = vshrl.u32 2102212464, %v2022
        %v2032 = vor.u32 %v2030, %v2031
        %v2033 = vshll.u32 2102212464, %v2021
        %v2034 = vshrl.u32 920167782, %v2022
        %v2035 = vor.u32 %v2033, %v2034
        %v2036 = vshll.u32 920167782, %v2021
        %v2037 = vshrl.u32 1326507024, %v2022
        %v2038 = vor.u32 %v2036, %v2037
        %vm2039 = vcmp.lt.s32.totalorder %v2020, 1
        %vm2040 = vcmp.lt.s32.totalorder %v2020, 2
        %vm2041 = vcmp.lt.s32.totalorder %v2020, 3
        %vm2042 = vcmp.lt.s32.totalorder %v2020, 4
        %v2043 = vsel %vm2039, %v2023, %v2026
        %v2044 = vsel %vm2042, %v2032, 2102212464
        %v2045 = vsel %vm2041, %v2029, %v2044
        %v2046 = vsel %vm2040, %v2043, %v2045
        %v2047 = vsel %vm2039, %v2026, %v2029
        %v2048 = vsel %vm2042, %v2035, 920167782
        %v2049 = vsel %vm2041, %v2032, %v2048
        %v2050 = vsel %vm2040, %v2047, %v2049
        %v2051 = vsel %vm2039, %v2029, %v2032
        %v2052 = vsel %vm2042, %v2038, 1326507024
        %v2053 = vsel %vm2041, %v2035, %v2052
        %v2054 = vsel %vm2040, %v2051, %v2053
        %v2055 = vshll.u32 %v2015, 8
        %v2056 = vmul.u32.u64.compose %v2055, %v2054
        %v2057 = vextract.low.u32 %v2056
        %v2058 = vextract.high.u32 %v2056
        %v2059 = vmul.u32.u64.compose %v2055, %v2050
        %v2060 = vextract.low.u32 %v2059
        %v2061 = vextract.high.u32 %v2059
        %v2062 = vmul.u32 %v2055, %v2046
        %v2063 = vadd.s32 %v2058, %v2060
        %vm2064 = vc.u32 %v2058, %v2060
        %v2065 = vadd.s32 %v2061, 1
        %v2066 = vsel %vm2064, %v2065, %v2061
        %v2067 = vadd.s32 %v2062, %v2066
        %v2068 = vadd.s32 %v2067, 536870912
        %v2069 = vshrl.u32 %v2068, 30
        %v2070 = vshll.u32 %v2069, 30
        %v2071 = vsub.s32 %v2067, %v2070
        %vm2072 = vcmp.lt.s32.totalorder %v2071, 0
        %v2073 = vsub.s32 0, %v2071
        %v2074 = vsel %vm2072, %v2073, %v2071
        %v2075 = vclz %v2074
        %v2076 = vsub.s32 %v2075, 2
        %vm2077 = vcmp.gt.s32.totalorder 0, %v2076
        %v2078 = vsel %vm2077, 0, %v2076
        %v2079 = vsub.s32 32, %v2078
        %v2080 = vshll.u32 %v2071, %v2078
        %v2081 = vshrl.u32 %v2063, %v2079
        %v2082 = vor.u32 %v2080, %v2081
        %v2083 = vsub.s32 4294967266, %v2078
        %v2084 = vadd.s32 %v2083, 127
        %v2085 = vshll.u32 %v2084, 23
        %v2086 = vor.u32 4788187, %v2085
        %v2087 = vand.u32 2147483647, %v2086
        %v2089 = vcvt.s32.f32 %v2082
        %v2090 = vmul.f32 %v2089, %v2087
        %v2091 = vxor.u32 %v2090, 2147483648
        %v2092 = vsel %vm2009, %v2091, %v2090
        %v2093 = vsub.s32 4, %v2069
        %v2094 = vsel %vm2009, %v2093, %v2069
        %v2095 = vsel %vm2008, %v1999, %v2092
        %v2096 = vsel %vm2008, 0, %v2094
        %v2097 = vcosq.f32.pop %v2095
        %v2098 = vsinq.f32.pop %v2095
        %vm2099 = vweird.f32 %v1999
        %v2100 = vadd.s32 %v2096, 3
        %v2101 = vand.u32 %v2100, 3
        %vm2102 = vcmp.lt.s32.totalorder %v2101, 2
        %vm2103 = vcmp.eq.s32.totalorder %v2101, 0
        %v2104 = vxor.u32 %v2098, 2147483648
        %v2105 = vsel %vm2103, %v2097, %v2104
        %vm2106 = vcmp.eq.s32.totalorder %v2101, 2
        %v2107 = vxor.u32 %v2097, 2147483648
        %v2108 = vsel %vm2106, %v2107, %v2098
        %v2109 = vsel %vm2102, %v2105, %v2108
        %v2110 = vsel %vm2099, nan, %v2109
        %v2111 = vand.u32 2147483647, %v2000
        %vm2112 = vcmp.le.f32.partialorder %v2111, 0.7853982
        %vm2113 = vcmp.lt.s32.totalorder %v2000, 0
        %v2114 = vand.u32 %v2000, 2139095040
        %v2115 = vshrl.u32 %v2114, 23
        %v2116 = vsub.s32 %v2115, 127
        %v2117 = vand.u32 2147483647, %v2000
        %v2118 = vand.u32 %v2117, 8388607
        %v2119 = vor.u32 %v2118, 8388608
        %v2120 = vsub.s32 0, %v2119
        %v2121 = vadd.s32 %v2116, 1
        %vm2122 = vcmp.gt.s32.totalorder %v2121, 0
        %v2123 = vsel %vm2122, %v2121, 0
        %v2124 = vshrl.u32 %v2123, 5
        %v2125 = vand.u32 %v2123, 31
        %v2126 = vsub.s32 32, %v2125
        %v2127 = vshrl.u32 683565275, %v2126
        %v2128 = vshll.u32 683565275, %v2125
        %v2129 = vshrl.u32 2475754826, %v2126
        %v2130 = vor.u32 %v2128, %v2129
        %v2131 = vshll.u32 2475754826, %v2125
        %v2132 = vshrl.u32 2131351028, %v2126
        %v2133 = vor.u32 %v2131, %v2132
        %v2134 = vshll.u32 2131351028, %v2125
        %v2135 = vshrl.u32 2102212464, %v2126
        %v2136 = vor.u32 %v2134, %v2135
        %v2137 = vshll.u32 2102212464, %v2125
        %v2138 = vshrl.u32 920167782, %v2126
        %v2139 = vor.u32 %v2137, %v2138
        %v2140 = vshll.u32 920167782, %v2125
        %v2141 = vshrl.u32 1326507024, %v2126
        %v2142 = vor.u32 %v2140, %v2141
        %vm2143 = vcmp.lt.s32.totalorder %v2124, 1
        %vm2144 = vcmp.lt.s32.totalorder %v2124, 2
        %vm2145 = vcmp.lt.s32.totalorder %v2124, 3
        %vm2146 = vcmp.lt.s32.totalorder %v2124, 4
        %v2147 = vsel %vm2143, %v2127, %v2130
        %v2148 = vsel %vm2146, %v2136, 2102212464
        %v2149 = vsel %vm2145, %v2133, %v2148
        %v2150 = vsel %vm2144, %v2147, %v2149
        %v2151 = vsel %vm2143, %v2130, %v2133
        %v2152 = vsel %vm2146, %v2139, 920167782
        %v2153 = vsel %vm2145, %v2136, %v2152
        %v2154 = vsel %vm2144, %v2151, %v2153
        %v2155 = vsel %vm2143, %v2133, %v2136
        %v2156 = vsel %vm2146, %v2142, 1326507024
        %v2157 = vsel %vm2145, %v2139, %v2156
        %v2158 = vsel %vm2144, %v2155, %v2157
        %v2159 = vshll.u32 %v2119, 8
        %v2160 = vmul.u32.u64.compose %v2159, %v2158
        %v2161 = vextract.low.u32 %v2160
        %v2162 = vextract.high.u32 %v2160
        %v2163 = vmul.u32.u64.compose %v2159, %v2154
        %v2164 = vextract.low.u32 %v2163
        %v2165 = vextract.high.u32 %v2163
        %v2166 = vmul.u32 %v2159, %v2150
        %v2167 = vadd.s32 %v2162, %v2164
        %vm2168 = vc.u32 %v2162, %v2164
        %v2169 = vadd.s32 %v2165, 1
        %v2170 = vsel %vm2168, %v2169, %v2165
        %v2171 = vadd.s32 %v2166, %v2170
        %v2172 = vadd.s32 %v2171, 536870912
        %v2173 = vshrl.u32 %v2172, 30
        %v2174 = vshll.u32 %v2173, 30
        %v2175 = vsub.s32 %v2171, %v2174
        %vm2176 = vcmp.lt.s32.totalorder %v2175, 0
        %v2177 = vsub.s32 0, %v2175
        %v2178 = vsel %vm2176, %v2177, %v2175
        %v2179 = vclz %v2178
        %v2180 = vsub.s32 %v2179, 2
        %vm2181 = vcmp.gt.s32.totalorder 0, %v2180
        %v2182 = vsel %vm2181, 0, %v2180
        %v2183 = vsub.s32 32, %v2182
        %v2184 = vshll.u32 %v2175, %v2182
        %v2185 = vshrl.u32 %v2167, %v2183
        %v2186 = vor.u32 %v2184, %v2185
        %v2187 = vsub.s32 4294967266, %v2182
        %v2188 = vadd.s32 %v2187, 127
        %v2189 = vshll.u32 %v2188, 23
        %v2190 = vor.u32 4788187, %v2189
        %v2191 = vand.u32 2147483647, %v2190
        %v2193 = vcvt.s32.f32 %v2186
        %v2194 = vmul.f32 %v2193, %v2191
        %v2195 = vxor.u32 %v2194, 2147483648
        %v2196 = vsel %vm2113, %v2195, %v2194
        %v2197 = vsub.s32 4, %v2173
        %v2198 = vsel %vm2113, %v2197, %v2173
        %v2199 = vsel %vm2112, %v2000, %v2196
        %v2200 = vsel %vm2112, 0, %v2198
        %v2201 = vcosq.f32.pop %v2199
        %v2202 = vsinq.f32.pop %v2199
        %vm2203 = vweird.f32 %v2000
        %v2204 = vadd.s32 %v2200, 3
        %v2205 = vand.u32 %v2204, 3
        %vm2206 = vcmp.lt.s32.totalorder %v2205, 2
        %vm2207 = vcmp.eq.s32.totalorder %v2205, 0
        %v2208 = vxor.u32 %v2202, 2147483648
        %v2209 = vsel %vm2207, %v2201, %v2208
        %vm2210 = vcmp.eq.s32.totalorder %v2205, 2
        %v2211 = vxor.u32 %v2201, 2147483648
        %v2212 = vsel %vm2210, %v2211, %v2202
        %v2213 = vsel %vm2206, %v2209, %v2212
        %v2214 = vsel %vm2203, nan, %v2213
        %v2215 = vand.u32 2147483647, %v2001
        %vm2216 = vcmp.le.f32.partialorder %v2215, 0.7853982
        %vm2217 = vcmp.lt.s32.totalorder %v2001, 0
        %v2218 = vand.u32 %v2001, 2139095040
        %v2219 = vshrl.u32 %v2218, 23
        %v2220 = vsub.s32 %v2219, 127
        %v2221 = vand.u32 2147483647, %v2001
        %v2222 = vand.u32 %v2221, 8388607
        %v2223 = vor.u32 %v2222, 8388608
        %v2224 = vsub.s32 0, %v2223
        %v2225 = vadd.s32 %v2220, 1
        %vm2226 = vcmp.gt.s32.totalorder %v2225, 0
        %v2227 = vsel %vm2226, %v2225, 0
        %v2228 = vshrl.u32 %v2227, 5
        %v2229 = vand.u32 %v2227, 31
        %v2230 = vsub.s32 32, %v2229
        %v2231 = vshrl.u32 683565275, %v2230
        %v2232 = vshll.u32 683565275, %v2229
        %v2233 = vshrl.u32 2475754826, %v2230
        %v2234 = vor.u32 %v2232, %v2233
        %v2235 = vshll.u32 2475754826, %v2229
        %v2236 = vshrl.u32 2131351028, %v2230
        %v2237 = vor.u32 %v2235, %v2236
        %v2238 = vshll.u32 2131351028, %v2229
        %v2239 = vshrl.u32 2102212464, %v2230
        %v2240 = vor.u32 %v2238, %v2239
        %v2241 = vshll.u32 2102212464, %v2229
        %v2242 = vshrl.u32 920167782, %v2230
        %v2243 = vor.u32 %v2241, %v2242
        %v2244 = vshll.u32 920167782, %v2229
        %v2245 = vshrl.u32 1326507024, %v2230
        %v2246 = vor.u32 %v2244, %v2245
        %vm2247 = vcmp.lt.s32.totalorder %v2228, 1
        %vm2248 = vcmp.lt.s32.totalorder %v2228, 2
        %vm2249 = vcmp.lt.s32.totalorder %v2228, 3
        %vm2250 = vcmp.lt.s32.totalorder %v2228, 4
        %v2251 = vsel %vm2247, %v2231, %v2234
        %v2252 = vsel %vm2250, %v2240, 2102212464
        %v2253 = vsel %vm2249, %v2237, %v2252
        %v2254 = vsel %vm2248, %v2251, %v2253
        %v2255 = vsel %vm2247, %v2234, %v2237
        %v2256 = vsel %vm2250, %v2243, 920167782
        %v2257 = vsel %vm2249, %v2240, %v2256
        %v2258 = vsel %vm2248, %v2255, %v2257
        %v2259 = vsel %vm2247, %v2237, %v2240
        %v2260 = vsel %vm2250, %v2246, 1326507024
        %v2261 = vsel %vm2249, %v2243, %v2260
        %v2262 = vsel %vm2248, %v2259, %v2261
        %v2263 = vshll.u32 %v2223, 8
        %v2264 = vmul.u32.u64.compose %v2263, %v2262
        %v2265 = vextract.low.u32 %v2264
        %v2266 = vextract.high.u32 %v2264
        %v2267 = vmul.u32.u64.compose %v2263, %v2258
        %v2268 = vextract.low.u32 %v2267
        %v2269 = vextract.high.u32 %v2267
        %v2270 = vmul.u32 %v2263, %v2254
        %v2271 = vadd.s32 %v2266, %v2268
        %vm2272 = vc.u32 %v2266, %v2268
        %v2273 = vadd.s32 %v2269, 1
        %v2274 = vsel %vm2272, %v2273, %v2269
        %v2275 = vadd.s32 %v2270, %v2274
        %v2276 = vadd.s32 %v2275, 536870912
        %v2277 = vshrl.u32 %v2276, 30
        %v2278 = vshll.u32 %v2277, 30
        %v2279 = vsub.s32 %v2275, %v2278
        %vm2280 = vcmp.lt.s32.totalorder %v2279, 0
        %v2281 = vsub.s32 0, %v2279
        %v2282 = vsel %vm2280, %v2281, %v2279
        %v2283 = vclz %v2282
        %v2284 = vsub.s32 %v2283, 2
        %vm2285 = vcmp.gt.s32.totalorder 0, %v2284
        %v2286 = vsel %vm2285, 0, %v2284
        %v2287 = vsub.s32 32, %v2286
        %v2288 = vshll.u32 %v2279, %v2286
        %v2289 = vshrl.u32 %v2271, %v2287
        %v2290 = vor.u32 %v2288, %v2289
        %v2291 = vsub.s32 4294967266, %v2286
        %v2292 = vadd.s32 %v2291, 127
        %v2293 = vshll.u32 %v2292, 23
        %v2294 = vor.u32 4788187, %v2293
        %v2295 = vand.u32 2147483647, %v2294
        %v2297 = vcvt.s32.f32 %v2290
        %v2298 = vmul.f32 %v2297, %v2295
        %v2299 = vxor.u32 %v2298, 2147483648
        %v2300 = vsel %vm2217, %v2299, %v2298
        %v2301 = vsub.s32 4, %v2277
        %v2302 = vsel %vm2217, %v2301, %v2277
        %v2303 = vsel %vm2216, %v2001, %v2300
        %v2304 = vsel %vm2216, 0, %v2302
        %v2305 = vcosq.f32.pop %v2303
        %v2306 = vsinq.f32.pop %v2303
        %vm2307 = vweird.f32 %v2001
        %v2308 = vadd.s32 %v2304, 3
        %v2309 = vand.u32 %v2308, 3
        %vm2310 = vcmp.lt.s32.totalorder %v2309, 2
        %vm2311 = vcmp.eq.s32.totalorder %v2309, 0
        %v2312 = vxor.u32 %v2306, 2147483648
        %v2313 = vsel %vm2311, %v2305, %v2312
        %vm2314 = vcmp.eq.s32.totalorder %v2309, 2
        %v2315 = vxor.u32 %v2305, 2147483648
        %v2316 = vsel %vm2314, %v2315, %v2306
        %v2317 = vsel %vm2310, %v2313, %v2316
        %v2318 = vsel %vm2307, nan, %v2317
        %v2319 = vand.u32 2147483647, %v2002
        %vm2320 = vcmp.le.f32.partialorder %v2319, 0.7853982
        %vm2321 = vcmp.lt.s32.totalorder %v2002, 0
        %v2322 = vand.u32 %v2002, 2139095040
        %v2323 = vshrl.u32 %v2322, 23
        %v2324 = vsub.s32 %v2323, 127
        %v2325 = vand.u32 2147483647, %v2002
        %v2326 = vand.u32 %v2325, 8388607
        %v2327 = vor.u32 %v2326, 8388608
        %v2328 = vsub.s32 0, %v2327
        %v2329 = vadd.s32 %v2324, 1
        %vm2330 = vcmp.gt.s32.totalorder %v2329, 0
        %v2331 = vsel %vm2330, %v2329, 0
        %v2332 = vshrl.u32 %v2331, 5
        %v2333 = vand.u32 %v2331, 31
        %v2334 = vsub.s32 32, %v2333
        %v2335 = vshrl.u32 683565275, %v2334
        %v2336 = vshll.u32 683565275, %v2333
        %v2337 = vshrl.u32 2475754826, %v2334
        %v2338 = vor.u32 %v2336, %v2337
        %v2339 = vshll.u32 2475754826, %v2333
        %v2340 = vshrl.u32 2131351028, %v2334
        %v2341 = vor.u32 %v2339, %v2340
        %v2342 = vshll.u32 2131351028, %v2333
        %v2343 = vshrl.u32 2102212464, %v2334
        %v2344 = vor.u32 %v2342, %v2343
        %v2345 = vshll.u32 2102212464, %v2333
        %v2346 = vshrl.u32 920167782, %v2334
        %v2347 = vor.u32 %v2345, %v2346
        %v2348 = vshll.u32 920167782, %v2333
        %v2349 = vshrl.u32 1326507024, %v2334
        %v2350 = vor.u32 %v2348, %v2349
        %vm2351 = vcmp.lt.s32.totalorder %v2332, 1
        %vm2352 = vcmp.lt.s32.totalorder %v2332, 2
        %vm2353 = vcmp.lt.s32.totalorder %v2332, 3
        %vm2354 = vcmp.lt.s32.totalorder %v2332, 4
        %v2355 = vsel %vm2351, %v2335, %v2338
        %v2356 = vsel %vm2354, %v2344, 2102212464
        %v2357 = vsel %vm2353, %v2341, %v2356
        %v2358 = vsel %vm2352, %v2355, %v2357
        %v2359 = vsel %vm2351, %v2338, %v2341
        %v2360 = vsel %vm2354, %v2347, 920167782
        %v2361 = vsel %vm2353, %v2344, %v2360
        %v2362 = vsel %vm2352, %v2359, %v2361
        %v2363 = vsel %vm2351, %v2341, %v2344
        %v2364 = vsel %vm2354, %v2350, 1326507024
        %v2365 = vsel %vm2353, %v2347, %v2364
        %v2366 = vsel %vm2352, %v2363, %v2365
        %v2367 = vshll.u32 %v2327, 8
        %v2368 = vmul.u32.u64.compose %v2367, %v2366
        %v2369 = vextract.low.u32 %v2368
        %v2370 = vextract.high.u32 %v2368
        %v2371 = vmul.u32.u64.compose %v2367, %v2362
        %v2372 = vextract.low.u32 %v2371
        %v2373 = vextract.high.u32 %v2371
        %v2374 = vmul.u32 %v2367, %v2358
        %v2375 = vadd.s32 %v2370, %v2372
        %vm2376 = vc.u32 %v2370, %v2372
        %v2377 = vadd.s32 %v2373, 1
        %v2378 = vsel %vm2376, %v2377, %v2373
        %v2379 = vadd.s32 %v2374, %v2378
        %v2380 = vadd.s32 %v2379, 536870912
        %v2381 = vshrl.u32 %v2380, 30
        %v2382 = vshll.u32 %v2381, 30
        %v2383 = vsub.s32 %v2379, %v2382
        %vm2384 = vcmp.lt.s32.totalorder %v2383, 0
        %v2385 = vsub.s32 0, %v2383
        %v2386 = vsel %vm2384, %v2385, %v2383
        %v2387 = vclz %v2386
        %v2388 = vsub.s32 %v2387, 2
        %vm2389 = vcmp.gt.s32.totalorder 0, %v2388
        %v2390 = vsel %vm2389, 0, %v2388
        %v2391 = vsub.s32 32, %v2390
        %v2392 = vshll.u32 %v2383, %v2390
        %v2393 = vshrl.u32 %v2375, %v2391
        %v2394 = vor.u32 %v2392, %v2393
        %v2395 = vsub.s32 4294967266, %v2390
        %v2396 = vadd.s32 %v2395, 127
        %v2397 = vshll.u32 %v2396, 23
        %v2398 = vor.u32 4788187, %v2397
        %v2399 = vand.u32 2147483647, %v2398
        %v2401 = vcvt.s32.f32 %v2394
        %v2402 = vmul.f32 %v2401, %v2399
        %v2403 = vxor.u32 %v2402, 2147483648
        %v2404 = vsel %vm2321, %v2403, %v2402
        %v2405 = vsub.s32 4, %v2381
        %v2406 = vsel %vm2321, %v2405, %v2381
        %v2407 = vsel %vm2320, %v2002, %v2404
        %v2408 = vsel %vm2320, 0, %v2406
        %v2409 = vcosq.f32.pop %v2407
        %v2410 = vsinq.f32.pop %v2407
        %vm2411 = vweird.f32 %v2002
        %v2412 = vadd.s32 %v2408, 3
        %v2413 = vand.u32 %v2412, 3
        %vm2414 = vcmp.lt.s32.totalorder %v2413, 2
        %vm2415 = vcmp.eq.s32.totalorder %v2413, 0
        %v2416 = vxor.u32 %v2410, 2147483648
        %v2417 = vsel %vm2415, %v2409, %v2416
        %vm2418 = vcmp.eq.s32.totalorder %v2413, 2
        %v2419 = vxor.u32 %v2409, 2147483648
        %v2420 = vsel %vm2418, %v2419, %v2410
        %v2421 = vsel %vm2414, %v2417, %v2420
        %v2422 = vsel %vm2411, nan, %v2421
        %v2423 = vand.u32 2147483647, %v2003
        %vm2424 = vcmp.le.f32.partialorder %v2423, 0.7853982
        %vm2425 = vcmp.lt.s32.totalorder %v2003, 0
        %v2426 = vand.u32 %v2003, 2139095040
        %v2427 = vshrl.u32 %v2426, 23
        %v2428 = vsub.s32 %v2427, 127
        %v2429 = vand.u32 2147483647, %v2003
        %v2430 = vand.u32 %v2429, 8388607
        %v2431 = vor.u32 %v2430, 8388608
        %v2432 = vsub.s32 0, %v2431
        %v2433 = vadd.s32 %v2428, 1
        %vm2434 = vcmp.gt.s32.totalorder %v2433, 0
        %v2435 = vsel %vm2434, %v2433, 0
        %v2436 = vshrl.u32 %v2435, 5
        %v2437 = vand.u32 %v2435, 31
        %v2438 = vsub.s32 32, %v2437
        %v2439 = vshrl.u32 683565275, %v2438
        %v2440 = vshll.u32 683565275, %v2437
        %v2441 = vshrl.u32 2475754826, %v2438
        %v2442 = vor.u32 %v2440, %v2441
        %v2443 = vshll.u32 2475754826, %v2437
        %v2444 = vshrl.u32 2131351028, %v2438
        %v2445 = vor.u32 %v2443, %v2444
        %v2446 = vshll.u32 2131351028, %v2437
        %v2447 = vshrl.u32 2102212464, %v2438
        %v2448 = vor.u32 %v2446, %v2447
        %v2449 = vshll.u32 2102212464, %v2437
        %v2450 = vshrl.u32 920167782, %v2438
        %v2451 = vor.u32 %v2449, %v2450
        %v2452 = vshll.u32 920167782, %v2437
        %v2453 = vshrl.u32 1326507024, %v2438
        %v2454 = vor.u32 %v2452, %v2453
        %vm2455 = vcmp.lt.s32.totalorder %v2436, 1
        %vm2456 = vcmp.lt.s32.totalorder %v2436, 2
        %vm2457 = vcmp.lt.s32.totalorder %v2436, 3
        %vm2458 = vcmp.lt.s32.totalorder %v2436, 4
        %v2459 = vsel %vm2455, %v2439, %v2442
        %v2460 = vsel %vm2458, %v2448, 2102212464
        %v2461 = vsel %vm2457, %v2445, %v2460
        %v2462 = vsel %vm2456, %v2459, %v2461
        %v2463 = vsel %vm2455, %v2442, %v2445
        %v2464 = vsel %vm2458, %v2451, 920167782
        %v2465 = vsel %vm2457, %v2448, %v2464
        %v2466 = vsel %vm2456, %v2463, %v2465
        %v2467 = vsel %vm2455, %v2445, %v2448
        %v2468 = vsel %vm2458, %v2454, 1326507024
        %v2469 = vsel %vm2457, %v2451, %v2468
        %v2470 = vsel %vm2456, %v2467, %v2469
        %v2471 = vshll.u32 %v2431, 8
        %v2472 = vmul.u32.u64.compose %v2471, %v2470
        %v2473 = vextract.low.u32 %v2472
        %v2474 = vextract.high.u32 %v2472
        %v2475 = vmul.u32.u64.compose %v2471, %v2466
        %v2476 = vextract.low.u32 %v2475
        %v2477 = vextract.high.u32 %v2475
        %v2478 = vmul.u32 %v2471, %v2462
        %v2479 = vadd.s32 %v2474, %v2476
        %vm2480 = vc.u32 %v2474, %v2476
        %v2481 = vadd.s32 %v2477, 1
        %v2482 = vsel %vm2480, %v2481, %v2477
        %v2483 = vadd.s32 %v2478, %v2482
        %v2484 = vadd.s32 %v2483, 536870912
        %v2485 = vshrl.u32 %v2484, 30
        %v2486 = vshll.u32 %v2485, 30
        %v2487 = vsub.s32 %v2483, %v2486
        %vm2488 = vcmp.lt.s32.totalorder %v2487, 0
        %v2489 = vsub.s32 0, %v2487
        %v2490 = vsel %vm2488, %v2489, %v2487
        %v2491 = vclz %v2490
        %v2492 = vsub.s32 %v2491, 2
        %vm2493 = vcmp.gt.s32.totalorder 0, %v2492
        %v2494 = vsel %vm2493, 0, %v2492
        %v2495 = vsub.s32 32, %v2494
        %v2496 = vshll.u32 %v2487, %v2494
        %v2497 = vshrl.u32 %v2479, %v2495
        %v2498 = vor.u32 %v2496, %v2497
        %v2499 = vsub.s32 4294967266, %v2494
        %v2500 = vadd.s32 %v2499, 127
        %v2501 = vshll.u32 %v2500, 23
        %v2502 = vor.u32 4788187, %v2501
        %v2503 = vand.u32 2147483647, %v2502
        %v2505 = vcvt.s32.f32 %v2498
        %v2506 = vmul.f32 %v2505, %v2503
        %v2507 = vxor.u32 %v2506, 2147483648
        %v2508 = vsel %vm2425, %v2507, %v2506
        %v2509 = vsub.s32 4, %v2485
        %v2510 = vsel %vm2425, %v2509, %v2485
        %v2511 = vsel %vm2424, %v2003, %v2508
        %v2512 = vsel %vm2424, 0, %v2510
        %v2513 = vcosq.f32.pop %v2511
        %v2514 = vsinq.f32.pop %v2511
        %vm2515 = vweird.f32 %v2003
        %v2516 = vadd.s32 %v2512, 3
        %v2517 = vand.u32 %v2516, 3
        %vm2518 = vcmp.lt.s32.totalorder %v2517, 2
        %vm2519 = vcmp.eq.s32.totalorder %v2517, 0
        %v2520 = vxor.u32 %v2514, 2147483648
        %v2521 = vsel %vm2519, %v2513, %v2520
        %vm2522 = vcmp.eq.s32.totalorder %v2517, 2
        %v2523 = vxor.u32 %v2513, 2147483648
        %v2524 = vsel %vm2522, %v2523, %v2514
        %v2525 = vsel %vm2518, %v2521, %v2524
        %v2526 = vsel %vm2515, nan, %v2525
        %v2527 = vand.u32 2147483647, %v2004
        %vm2528 = vcmp.le.f32.partialorder %v2527, 0.7853982
        %vm2529 = vcmp.lt.s32.totalorder %v2004, 0
        %v2530 = vand.u32 %v2004, 2139095040
        %v2531 = vshrl.u32 %v2530, 23
        %v2532 = vsub.s32 %v2531, 127
        %v2533 = vand.u32 2147483647, %v2004
        %v2534 = vand.u32 %v2533, 8388607
        %v2535 = vor.u32 %v2534, 8388608
        %v2536 = vsub.s32 0, %v2535
        %v2537 = vadd.s32 %v2532, 1
        %vm2538 = vcmp.gt.s32.totalorder %v2537, 0
        %v2539 = vsel %vm2538, %v2537, 0
        %v2540 = vshrl.u32 %v2539, 5
        %v2541 = vand.u32 %v2539, 31
        %v2542 = vsub.s32 32, %v2541
        %v2543 = vshrl.u32 683565275, %v2542
        %v2544 = vshll.u32 683565275, %v2541
        %v2545 = vshrl.u32 2475754826, %v2542
        %v2546 = vor.u32 %v2544, %v2545
        %v2547 = vshll.u32 2475754826, %v2541
        %v2548 = vshrl.u32 2131351028, %v2542
        %v2549 = vor.u32 %v2547, %v2548
        %v2550 = vshll.u32 2131351028, %v2541
        %v2551 = vshrl.u32 2102212464, %v2542
        %v2552 = vor.u32 %v2550, %v2551
        %v2553 = vshll.u32 2102212464, %v2541
        %v2554 = vshrl.u32 920167782, %v2542
        %v2555 = vor.u32 %v2553, %v2554
        %v2556 = vshll.u32 920167782, %v2541
        %v2557 = vshrl.u32 1326507024, %v2542
        %v2558 = vor.u32 %v2556, %v2557
        %vm2559 = vcmp.lt.s32.totalorder %v2540, 1
        %vm2560 = vcmp.lt.s32.totalorder %v2540, 2
        %vm2561 = vcmp.lt.s32.totalorder %v2540, 3
        %vm2562 = vcmp.lt.s32.totalorder %v2540, 4
        %v2563 = vsel %vm2559, %v2543, %v2546
        %v2564 = vsel %vm2562, %v2552, 2102212464
        %v2565 = vsel %vm2561, %v2549, %v2564
        %v2566 = vsel %vm2560, %v2563, %v2565
        %v2567 = vsel %vm2559, %v2546, %v2549
        %v2568 = vsel %vm2562, %v2555, 920167782
        %v2569 = vsel %vm2561, %v2552, %v2568
        %v2570 = vsel %vm2560, %v2567, %v2569
        %v2571 = vsel %vm2559, %v2549, %v2552
        %v2572 = vsel %vm2562, %v2558, 1326507024
        %v2573 = vsel %vm2561, %v2555, %v2572
        %v2574 = vsel %vm2560, %v2571, %v2573
        %v2575 = vshll.u32 %v2535, 8
        %v2576 = vmul.u32.u64.compose %v2575, %v2574
        %v2577 = vextract.low.u32 %v2576
        %v2578 = vextract.high.u32 %v2576
        %v2579 = vmul.u32.u64.compose %v2575, %v2570
        %v2580 = vextract.low.u32 %v2579
        %v2581 = vextract.high.u32 %v2579
        %v2582 = vmul.u32 %v2575, %v2566
        %v2583 = vadd.s32 %v2578, %v2580
        %vm2584 = vc.u32 %v2578, %v2580
        %v2585 = vadd.s32 %v2581, 1
        %v2586 = vsel %vm2584, %v2585, %v2581
        %v2587 = vadd.s32 %v2582, %v2586
        %v2588 = vadd.s32 %v2587, 536870912
        %v2589 = vshrl.u32 %v2588, 30
        %v2590 = vshll.u32 %v2589, 30
        %v2591 = vsub.s32 %v2587, %v2590
        %vm2592 = vcmp.lt.s32.totalorder %v2591, 0
        %v2593 = vsub.s32 0, %v2591
        %v2594 = vsel %vm2592, %v2593, %v2591
        %v2595 = vclz %v2594
        %v2596 = vsub.s32 %v2595, 2
        %vm2597 = vcmp.gt.s32.totalorder 0, %v2596
        %v2598 = vsel %vm2597, 0, %v2596
        %v2599 = vsub.s32 32, %v2598
        %v2600 = vshll.u32 %v2591, %v2598
        %v2601 = vshrl.u32 %v2583, %v2599
        %v2602 = vor.u32 %v2600, %v2601
        %v2603 = vsub.s32 4294967266, %v2598
        %v2604 = vadd.s32 %v2603, 127
        %v2605 = vshll.u32 %v2604, 23
        %v2606 = vor.u32 4788187, %v2605
        %v2607 = vand.u32 2147483647, %v2606
        %v2609 = vcvt.s32.f32 %v2602
        %v2610 = vmul.f32 %v2609, %v2607
        %v2611 = vxor.u32 %v2610, 2147483648
        %v2612 = vsel %vm2529, %v2611, %v2610
        %v2613 = vsub.s32 4, %v2589
        %v2614 = vsel %vm2529, %v2613, %v2589
        %v2615 = vsel %vm2528, %v2004, %v2612
        %v2616 = vsel %vm2528, 0, %v2614
        %v2617 = vcosq.f32.pop %v2615
        %v2618 = vsinq.f32.pop %v2615
        %vm2619 = vweird.f32 %v2004
        %v2620 = vadd.s32 %v2616, 3
        %v2621 = vand.u32 %v2620, 3
        %vm2622 = vcmp.lt.s32.totalorder %v2621, 2
        %vm2623 = vcmp.eq.s32.totalorder %v2621, 0
        %v2624 = vxor.u32 %v2618, 2147483648
        %v2625 = vsel %vm2623, %v2617, %v2624
        %vm2626 = vcmp.eq.s32.totalorder %v2621, 2
        %v2627 = vxor.u32 %v2617, 2147483648
        %v2628 = vsel %vm2626, %v2627, %v2618
        %v2629 = vsel %vm2622, %v2625, %v2628
        %v2630 = vsel %vm2619, nan, %v2629
        %v2631 = vand.u32 2147483647, %v2005
        %vm2632 = vcmp.le.f32.partialorder %v2631, 0.7853982
        %vm2633 = vcmp.lt.s32.totalorder %v2005, 0
        %v2634 = vand.u32 %v2005, 2139095040
        %v2635 = vshrl.u32 %v2634, 23
        %v2636 = vsub.s32 %v2635, 127
        %v2637 = vand.u32 2147483647, %v2005
        %v2638 = vand.u32 %v2637, 8388607
        %v2639 = vor.u32 %v2638, 8388608
        %v2640 = vsub.s32 0, %v2639
        %v2641 = vadd.s32 %v2636, 1
        %vm2642 = vcmp.gt.s32.totalorder %v2641, 0
        %v2643 = vsel %vm2642, %v2641, 0
        %v2644 = vshrl.u32 %v2643, 5
        %v2645 = vand.u32 %v2643, 31
        %v2646 = vsub.s32 32, %v2645
        %v2647 = vshrl.u32 683565275, %v2646
        %v2648 = vshll.u32 683565275, %v2645
        %v2649 = vshrl.u32 2475754826, %v2646
        %v2650 = vor.u32 %v2648, %v2649
        %v2651 = vshll.u32 2475754826, %v2645
        %v2652 = vshrl.u32 2131351028, %v2646
        %v2653 = vor.u32 %v2651, %v2652
        %v2654 = vshll.u32 2131351028, %v2645
        %v2655 = vshrl.u32 2102212464, %v2646
        %v2656 = vor.u32 %v2654, %v2655
        %v2657 = vshll.u32 2102212464, %v2645
        %v2658 = vshrl.u32 920167782, %v2646
        %v2659 = vor.u32 %v2657, %v2658
        %v2660 = vshll.u32 920167782, %v2645
        %v2661 = vshrl.u32 1326507024, %v2646
        %v2662 = vor.u32 %v2660, %v2661
        %vm2663 = vcmp.lt.s32.totalorder %v2644, 1
        %vm2664 = vcmp.lt.s32.totalorder %v2644, 2
        %vm2665 = vcmp.lt.s32.totalorder %v2644, 3
        %vm2666 = vcmp.lt.s32.totalorder %v2644, 4
        %v2667 = vsel %vm2663, %v2647, %v2650
        %v2668 = vsel %vm2666, %v2656, 2102212464
        %v2669 = vsel %vm2665, %v2653, %v2668
        %v2670 = vsel %vm2664, %v2667, %v2669
        %v2671 = vsel %vm2663, %v2650, %v2653
        %v2672 = vsel %vm2666, %v2659, 920167782
        %v2673 = vsel %vm2665, %v2656, %v2672
        %v2674 = vsel %vm2664, %v2671, %v2673
        %v2675 = vsel %vm2663, %v2653, %v2656
        %v2676 = vsel %vm2666, %v2662, 1326507024
        %v2677 = vsel %vm2665, %v2659, %v2676
        %v2678 = vsel %vm2664, %v2675, %v2677
        %v2679 = vshll.u32 %v2639, 8
        %v2680 = vmul.u32.u64.compose %v2679, %v2678
        %v2681 = vextract.low.u32 %v2680
        %v2682 = vextract.high.u32 %v2680
        %v2683 = vmul.u32.u64.compose %v2679, %v2674
        %v2684 = vextract.low.u32 %v2683
        %v2685 = vextract.high.u32 %v2683
        %v2686 = vmul.u32 %v2679, %v2670
        %v2687 = vadd.s32 %v2682, %v2684
        %vm2688 = vc.u32 %v2682, %v2684
        %v2689 = vadd.s32 %v2685, 1
        %v2690 = vsel %vm2688, %v2689, %v2685
        %v2691 = vadd.s32 %v2686, %v2690
        %v2692 = vadd.s32 %v2691, 536870912
        %v2693 = vshrl.u32 %v2692, 30
        %v2694 = vshll.u32 %v2693, 30
        %v2695 = vsub.s32 %v2691, %v2694
        %vm2696 = vcmp.lt.s32.totalorder %v2695, 0
        %v2697 = vsub.s32 0, %v2695
        %v2698 = vsel %vm2696, %v2697, %v2695
        %v2699 = vclz %v2698
        %v2700 = vsub.s32 %v2699, 2
        %vm2701 = vcmp.gt.s32.totalorder 0, %v2700
        %v2702 = vsel %vm2701, 0, %v2700
        %v2703 = vsub.s32 32, %v2702
        %v2704 = vshll.u32 %v2695, %v2702
        %v2705 = vshrl.u32 %v2687, %v2703
        %v2706 = vor.u32 %v2704, %v2705
        %v2707 = vsub.s32 4294967266, %v2702
        %v2708 = vadd.s32 %v2707, 127
        %v2709 = vshll.u32 %v2708, 23
        %v2710 = vor.u32 4788187, %v2709
        %v2711 = vand.u32 2147483647, %v2710
        %v2713 = vcvt.s32.f32 %v2706
        %v2714 = vmul.f32 %v2713, %v2711
        %v2715 = vxor.u32 %v2714, 2147483648
        %v2716 = vsel %vm2633, %v2715, %v2714
        %v2717 = vsub.s32 4, %v2693
        %v2718 = vsel %vm2633, %v2717, %v2693
        %v2719 = vsel %vm2632, %v2005, %v2716
        %v2720 = vsel %vm2632, 0, %v2718
        %v2721 = vcosq.f32.pop %v2719
        %v2722 = vsinq.f32.pop %v2719
        %vm2723 = vweird.f32 %v2005
        %v2724 = vadd.s32 %v2720, 3
        %v2725 = vand.u32 %v2724, 3
        %vm2726 = vcmp.lt.s32.totalorder %v2725, 2
        %vm2727 = vcmp.eq.s32.totalorder %v2725, 0
        %v2728 = vxor.u32 %v2722, 2147483648
        %v2729 = vsel %vm2727, %v2721, %v2728
        %vm2730 = vcmp.eq.s32.totalorder %v2725, 2
        %v2731 = vxor.u32 %v2721, 2147483648
        %v2732 = vsel %vm2730, %v2731, %v2722
        %v2733 = vsel %vm2726, %v2729, %v2732
        %v2734 = vsel %vm2723, nan, %v2733
        %v2735 = vand.u32 2147483647, %v2006
        %vm2736 = vcmp.le.f32.partialorder %v2735, 0.7853982
        %vm2737 = vcmp.lt.s32.totalorder %v2006, 0
        %v2738 = vand.u32 %v2006, 2139095040
        %v2739 = vshrl.u32 %v2738, 23
        %v2740 = vsub.s32 %v2739, 127
        %v2741 = vand.u32 2147483647, %v2006
        %v2742 = vand.u32 %v2741, 8388607
        %v2743 = vor.u32 %v2742, 8388608
        %v2744 = vsub.s32 0, %v2743
        %v2745 = vadd.s32 %v2740, 1
        %vm2746 = vcmp.gt.s32.totalorder %v2745, 0
        %v2747 = vsel %vm2746, %v2745, 0
        %v2748 = vshrl.u32 %v2747, 5
        %v2749 = vand.u32 %v2747, 31
        %v2750 = vsub.s32 32, %v2749
        %v2751 = vshrl.u32 683565275, %v2750
        %v2752 = vshll.u32 683565275, %v2749
        %v2753 = vshrl.u32 2475754826, %v2750
        %v2754 = vor.u32 %v2752, %v2753
        %v2755 = vshll.u32 2475754826, %v2749
        %v2756 = vshrl.u32 2131351028, %v2750
        %v2757 = vor.u32 %v2755, %v2756
        %v2758 = vshll.u32 2131351028, %v2749
        %v2759 = vshrl.u32 2102212464, %v2750
        %v2760 = vor.u32 %v2758, %v2759
        %v2761 = vshll.u32 2102212464, %v2749
        %v2762 = vshrl.u32 920167782, %v2750
        %v2763 = vor.u32 %v2761, %v2762
        %v2764 = vshll.u32 920167782, %v2749
        %v2765 = vshrl.u32 1326507024, %v2750
        %v2766 = vor.u32 %v2764, %v2765
        %vm2767 = vcmp.lt.s32.totalorder %v2748, 1
        %vm2768 = vcmp.lt.s32.totalorder %v2748, 2
        %vm2769 = vcmp.lt.s32.totalorder %v2748, 3
        %vm2770 = vcmp.lt.s32.totalorder %v2748, 4
        %v2771 = vsel %vm2767, %v2751, %v2754
        %v2772 = vsel %vm2770, %v2760, 2102212464
        %v2773 = vsel %vm2769, %v2757, %v2772
        %v2774 = vsel %vm2768, %v2771, %v2773
        %v2775 = vsel %vm2767, %v2754, %v2757
        %v2776 = vsel %vm2770, %v2763, 920167782
        %v2777 = vsel %vm2769, %v2760, %v2776
        %v2778 = vsel %vm2768, %v2775, %v2777
        %v2779 = vsel %vm2767, %v2757, %v2760
        %v2780 = vsel %vm2770, %v2766, 1326507024
        %v2781 = vsel %vm2769, %v2763, %v2780
        %v2782 = vsel %vm2768, %v2779, %v2781
        %v2783 = vshll.u32 %v2743, 8
        %v2784 = vmul.u32.u64.compose %v2783, %v2782
        %v2785 = vextract.low.u32 %v2784
        %v2786 = vextract.high.u32 %v2784
        %v2787 = vmul.u32.u64.compose %v2783, %v2778
        %v2788 = vextract.low.u32 %v2787
        %v2789 = vextract.high.u32 %v2787
        %v2790 = vmul.u32 %v2783, %v2774
        %v2791 = vadd.s32 %v2786, %v2788
        %vm2792 = vc.u32 %v2786, %v2788
        %v2793 = vadd.s32 %v2789, 1
        %v2794 = vsel %vm2792, %v2793, %v2789
        %v2795 = vadd.s32 %v2790, %v2794
        %v2796 = vadd.s32 %v2795, 536870912
        %v2797 = vshrl.u32 %v2796, 30
        %v2798 = vshll.u32 %v2797, 30
        %v2799 = vsub.s32 %v2795, %v2798
        %vm2800 = vcmp.lt.s32.totalorder %v2799, 0
        %v2801 = vsub.s32 0, %v2799
        %v2802 = vsel %vm2800, %v2801, %v2799
        %v2803 = vclz %v2802
        %v2804 = vsub.s32 %v2803, 2
        %vm2805 = vcmp.gt.s32.totalorder 0, %v2804
        %v2806 = vsel %vm2805, 0, %v2804
        %v2807 = vsub.s32 32, %v2806
        %v2808 = vshll.u32 %v2799, %v2806
        %v2809 = vshrl.u32 %v2791, %v2807
        %v2810 = vor.u32 %v2808, %v2809
        %v2811 = vsub.s32 4294967266, %v2806
        %v2812 = vadd.s32 %v2811, 127
        %v2813 = vshll.u32 %v2812, 23
        %v2814 = vor.u32 4788187, %v2813
        %v2815 = vand.u32 2147483647, %v2814
        %v2817 = vcvt.s32.f32 %v2810
        %v2818 = vmul.f32 %v2817, %v2815
        %v2819 = vxor.u32 %v2818, 2147483648
        %v2820 = vsel %vm2737, %v2819, %v2818
        %v2821 = vsub.s32 4, %v2797
        %v2822 = vsel %vm2737, %v2821, %v2797
        %v2823 = vsel %vm2736, %v2006, %v2820
        %v2824 = vsel %vm2736, 0, %v2822
        %v2825 = vcosq.f32.pop %v2823
        %v2826 = vsinq.f32.pop %v2823
        %vm2827 = vweird.f32 %v2006
        %v2828 = vadd.s32 %v2824, 3
        %v2829 = vand.u32 %v2828, 3
        %vm2830 = vcmp.lt.s32.totalorder %v2829, 2
        %vm2831 = vcmp.eq.s32.totalorder %v2829, 0
        %v2832 = vxor.u32 %v2826, 2147483648
        %v2833 = vsel %vm2831, %v2825, %v2832
        %vm2834 = vcmp.eq.s32.totalorder %v2829, 2
        %v2835 = vxor.u32 %v2825, 2147483648
        %v2836 = vsel %vm2834, %v2835, %v2826
        %v2837 = vsel %vm2830, %v2833, %v2836
        %v2838 = vsel %vm2827, nan, %v2837
        %v2839 = vand.u32 2147483647, %v1999
        %vm2840 = vcmp.le.f32.partialorder %v2839, 0.7853982
        %vm2841 = vcmp.lt.s32.totalorder %v1999, 0
        %v2842 = vand.u32 %v1999, 2139095040
        %v2843 = vshrl.u32 %v2842, 23
        %v2844 = vsub.s32 %v2843, 127
        %v2845 = vand.u32 2147483647, %v1999
        %v2846 = vand.u32 %v2845, 8388607
        %v2847 = vor.u32 %v2846, 8388608
        %v2848 = vsub.s32 0, %v2847
        %v2849 = vadd.s32 %v2844, 1
        %vm2850 = vcmp.gt.s32.totalorder %v2849, 0
        %v2851 = vsel %vm2850, %v2849, 0
        %v2852 = vshrl.u32 %v2851, 5
        %v2853 = vand.u32 %v2851, 31
        %v2854 = vsub.s32 32, %v2853
        %v2855 = vshrl.u32 683565275, %v2854
        %v2856 = vshll.u32 683565275, %v2853
        %v2857 = vshrl.u32 2475754826, %v2854
        %v2858 = vor.u32 %v2856, %v2857
        %v2859 = vshll.u32 2475754826, %v2853
        %v2860 = vshrl.u32 2131351028, %v2854
        %v2861 = vor.u32 %v2859, %v2860
        %v2862 = vshll.u32 2131351028, %v2853
        %v2863 = vshrl.u32 2102212464, %v2854
        %v2864 = vor.u32 %v2862, %v2863
        %v2865 = vshll.u32 2102212464, %v2853
        %v2866 = vshrl.u32 920167782, %v2854
        %v2867 = vor.u32 %v2865, %v2866
        %v2868 = vshll.u32 920167782, %v2853
        %v2869 = vshrl.u32 1326507024, %v2854
        %v2870 = vor.u32 %v2868, %v2869
        %vm2871 = vcmp.lt.s32.totalorder %v2852, 1
        %vm2872 = vcmp.lt.s32.totalorder %v2852, 2
        %vm2873 = vcmp.lt.s32.totalorder %v2852, 3
        %vm2874 = vcmp.lt.s32.totalorder %v2852, 4
        %v2875 = vsel %vm2871, %v2855, %v2858
        %v2876 = vsel %vm2874, %v2864, 2102212464
        %v2877 = vsel %vm2873, %v2861, %v2876
        %v2878 = vsel %vm2872, %v2875, %v2877
        %v2879 = vsel %vm2871, %v2858, %v2861
        %v2880 = vsel %vm2874, %v2867, 920167782
        %v2881 = vsel %vm2873, %v2864, %v2880
        %v2882 = vsel %vm2872, %v2879, %v2881
        %v2883 = vsel %vm2871, %v2861, %v2864
        %v2884 = vsel %vm2874, %v2870, 1326507024
        %v2885 = vsel %vm2873, %v2867, %v2884
        %v2886 = vsel %vm2872, %v2883, %v2885
        %v2887 = vshll.u32 %v2847, 8
        %v2888 = vmul.u32.u64.compose %v2887, %v2886
        %v2889 = vextract.low.u32 %v2888
        %v2890 = vextract.high.u32 %v2888
        %v2891 = vmul.u32.u64.compose %v2887, %v2882
        %v2892 = vextract.low.u32 %v2891
        %v2893 = vextract.high.u32 %v2891
        %v2894 = vmul.u32 %v2887, %v2878
        %v2895 = vadd.s32 %v2890, %v2892
        %vm2896 = vc.u32 %v2890, %v2892
        %v2897 = vadd.s32 %v2893, 1
        %v2898 = vsel %vm2896, %v2897, %v2893
        %v2899 = vadd.s32 %v2894, %v2898
        %v2900 = vadd.s32 %v2899, 536870912
        %v2901 = vshrl.u32 %v2900, 30
        %v2902 = vshll.u32 %v2901, 30
        %v2903 = vsub.s32 %v2899, %v2902
        %vm2904 = vcmp.lt.s32.totalorder %v2903, 0
        %v2905 = vsub.s32 0, %v2903
        %v2906 = vsel %vm2904, %v2905, %v2903
        %v2907 = vclz %v2906
        %v2908 = vsub.s32 %v2907, 2
        %vm2909 = vcmp.gt.s32.totalorder 0, %v2908
        %v2910 = vsel %vm2909, 0, %v2908
        %v2911 = vsub.s32 32, %v2910
        %v2912 = vshll.u32 %v2903, %v2910
        %v2913 = vshrl.u32 %v2895, %v2911
        %v2914 = vor.u32 %v2912, %v2913
        %v2915 = vsub.s32 4294967266, %v2910
        %v2916 = vadd.s32 %v2915, 127
        %v2917 = vshll.u32 %v2916, 23
        %v2918 = vor.u32 4788187, %v2917
        %v2919 = vand.u32 2147483647, %v2918
        %v2921 = vcvt.s32.f32 %v2914
        %v2922 = vmul.f32 %v2921, %v2919
        %v2923 = vxor.u32 %v2922, 2147483648
        %v2924 = vsel %vm2841, %v2923, %v2922
        %v2925 = vsub.s32 4, %v2901
        %v2926 = vsel %vm2841, %v2925, %v2901
        %v2927 = vsel %vm2840, %v1999, %v2924
        %v2928 = vsel %vm2840, 0, %v2926
        %v2929 = vcosq.f32.pop %v2927
        %v2930 = vsinq.f32.pop %v2927
        %vm2931 = vweird.f32 %v1999
        %v2932 = vand.u32 %v2928, 3
        %vm2933 = vcmp.lt.s32.totalorder %v2932, 2
        %vm2934 = vcmp.eq.s32.totalorder %v2932, 0
        %v2935 = vxor.u32 %v2930, 2147483648
        %v2936 = vsel %vm2934, %v2929, %v2935
        %vm2937 = vcmp.eq.s32.totalorder %v2932, 2
        %v2938 = vxor.u32 %v2929, 2147483648
        %v2939 = vsel %vm2937, %v2938, %v2930
        %v2940 = vsel %vm2933, %v2936, %v2939
        %v2941 = vsel %vm2931, nan, %v2940
        %v2942 = vand.u32 2147483647, %v2000
        %vm2943 = vcmp.le.f32.partialorder %v2942, 0.7853982
        %vm2944 = vcmp.lt.s32.totalorder %v2000, 0
        %v2945 = vand.u32 %v2000, 2139095040
        %v2946 = vshrl.u32 %v2945, 23
        %v2947 = vsub.s32 %v2946, 127
        %v2948 = vand.u32 2147483647, %v2000
        %v2949 = vand.u32 %v2948, 8388607
        %v2950 = vor.u32 %v2949, 8388608
        %v2951 = vsub.s32 0, %v2950
        %v2952 = vadd.s32 %v2947, 1
        %vm2953 = vcmp.gt.s32.totalorder %v2952, 0
        %v2954 = vsel %vm2953, %v2952, 0
        %v2955 = vshrl.u32 %v2954, 5
        %v2956 = vand.u32 %v2954, 31
        %v2957 = vsub.s32 32, %v2956
        %v2958 = vshrl.u32 683565275, %v2957
        %v2959 = vshll.u32 683565275, %v2956
        %v2960 = vshrl.u32 2475754826, %v2957
        %v2961 = vor.u32 %v2959, %v2960
        %v2962 = vshll.u32 2475754826, %v2956
        %v2963 = vshrl.u32 2131351028, %v2957
        %v2964 = vor.u32 %v2962, %v2963
        %v2965 = vshll.u32 2131351028, %v2956
        %v2966 = vshrl.u32 2102212464, %v2957
        %v2967 = vor.u32 %v2965, %v2966
        %v2968 = vshll.u32 2102212464, %v2956
        %v2969 = vshrl.u32 920167782, %v2957
        %v2970 = vor.u32 %v2968, %v2969
        %v2971 = vshll.u32 920167782, %v2956
        %v2972 = vshrl.u32 1326507024, %v2957
        %v2973 = vor.u32 %v2971, %v2972
        %vm2974 = vcmp.lt.s32.totalorder %v2955, 1
        %vm2975 = vcmp.lt.s32.totalorder %v2955, 2
        %vm2976 = vcmp.lt.s32.totalorder %v2955, 3
        %vm2977 = vcmp.lt.s32.totalorder %v2955, 4
        %v2978 = vsel %vm2974, %v2958, %v2961
        %v2979 = vsel %vm2977, %v2967, 2102212464
        %v2980 = vsel %vm2976, %v2964, %v2979
        %v2981 = vsel %vm2975, %v2978, %v2980
        %v2982 = vsel %vm2974, %v2961, %v2964
        %v2983 = vsel %vm2977, %v2970, 920167782
        %v2984 = vsel %vm2976, %v2967, %v2983
        %v2985 = vsel %vm2975, %v2982, %v2984
        %v2986 = vsel %vm2974, %v2964, %v2967
        %v2987 = vsel %vm2977, %v2973, 1326507024
        %v2988 = vsel %vm2976, %v2970, %v2987
        %v2989 = vsel %vm2975, %v2986, %v2988
        %v2990 = vshll.u32 %v2950, 8
        %v2991 = vmul.u32.u64.compose %v2990, %v2989
        %v2992 = vextract.low.u32 %v2991
        %v2993 = vextract.high.u32 %v2991
        %v2994 = vmul.u32.u64.compose %v2990, %v2985
        %v2995 = vextract.low.u32 %v2994
        %v2996 = vextract.high.u32 %v2994
        %v2997 = vmul.u32 %v2990, %v2981
        %v2998 = vadd.s32 %v2993, %v2995
        %vm2999 = vc.u32 %v2993, %v2995
        %v3000 = vadd.s32 %v2996, 1
        %v3001 = vsel %vm2999, %v3000, %v2996
        %v3002 = vadd.s32 %v2997, %v3001
        %v3003 = vadd.s32 %v3002, 536870912
        %v3004 = vshrl.u32 %v3003, 30
        %v3005 = vshll.u32 %v3004, 30
        %v3006 = vsub.s32 %v3002, %v3005
        %vm3007 = vcmp.lt.s32.totalorder %v3006, 0
        %v3008 = vsub.s32 0, %v3006
        %v3009 = vsel %vm3007, %v3008, %v3006
        %v3010 = vclz %v3009
        %v3011 = vsub.s32 %v3010, 2
        %vm3012 = vcmp.gt.s32.totalorder 0, %v3011
        %v3013 = vsel %vm3012, 0, %v3011
        %v3014 = vsub.s32 32, %v3013
        %v3015 = vshll.u32 %v3006, %v3013
        %v3016 = vshrl.u32 %v2998, %v3014
        %v3017 = vor.u32 %v3015, %v3016
        %v3018 = vsub.s32 4294967266, %v3013
        %v3019 = vadd.s32 %v3018, 127
        %v3020 = vshll.u32 %v3019, 23
        %v3021 = vor.u32 4788187, %v3020
        %v3022 = vand.u32 2147483647, %v3021
        %v3024 = vcvt.s32.f32 %v3017
        %v3025 = vmul.f32 %v3024, %v3022
        %v3026 = vxor.u32 %v3025, 2147483648
        %v3027 = vsel %vm2944, %v3026, %v3025
        %v3028 = vsub.s32 4, %v3004
        %v3029 = vsel %vm2944, %v3028, %v3004
        %v3030 = vsel %vm2943, %v2000, %v3027
        %v3031 = vsel %vm2943, 0, %v3029
        %v3032 = vcosq.f32.pop %v3030
        %v3033 = vsinq.f32.pop %v3030
        %vm3034 = vweird.f32 %v2000
        %v3035 = vand.u32 %v3031, 3
        %vm3036 = vcmp.lt.s32.totalorder %v3035, 2
        %vm3037 = vcmp.eq.s32.totalorder %v3035, 0
        %v3038 = vxor.u32 %v3033, 2147483648
        %v3039 = vsel %vm3037, %v3032, %v3038
        %vm3040 = vcmp.eq.s32.totalorder %v3035, 2
        %v3041 = vxor.u32 %v3032, 2147483648
        %v3042 = vsel %vm3040, %v3041, %v3033
        %v3043 = vsel %vm3036, %v3039, %v3042
        %v3044 = vsel %vm3034, nan, %v3043
        %v3045 = vand.u32 2147483647, %v2001
        %vm3046 = vcmp.le.f32.partialorder %v3045, 0.7853982
        %vm3047 = vcmp.lt.s32.totalorder %v2001, 0
        %v3048 = vand.u32 %v2001, 2139095040
        %v3049 = vshrl.u32 %v3048, 23
        %v3050 = vsub.s32 %v3049, 127
        %v3051 = vand.u32 2147483647, %v2001
        %v3052 = vand.u32 %v3051, 8388607
        %v3053 = vor.u32 %v3052, 8388608
        %v3054 = vsub.s32 0, %v3053
        %v3055 = vadd.s32 %v3050, 1
        %vm3056 = vcmp.gt.s32.totalorder %v3055, 0
        %v3057 = vsel %vm3056, %v3055, 0
        %v3058 = vshrl.u32 %v3057, 5
        %v3059 = vand.u32 %v3057, 31
        %v3060 = vsub.s32 32, %v3059
        %v3061 = vshrl.u32 683565275, %v3060
        %v3062 = vshll.u32 683565275, %v3059
        %v3063 = vshrl.u32 2475754826, %v3060
        %v3064 = vor.u32 %v3062, %v3063
        %v3065 = vshll.u32 2475754826, %v3059
        %v3066 = vshrl.u32 2131351028, %v3060
        %v3067 = vor.u32 %v3065, %v3066
        %v3068 = vshll.u32 2131351028, %v3059
        %v3069 = vshrl.u32 2102212464, %v3060
        %v3070 = vor.u32 %v3068, %v3069
        %v3071 = vshll.u32 2102212464, %v3059
        %v3072 = vshrl.u32 920167782, %v3060
        %v3073 = vor.u32 %v3071, %v3072
        %v3074 = vshll.u32 920167782, %v3059
        %v3075 = vshrl.u32 1326507024, %v3060
        %v3076 = vor.u32 %v3074, %v3075
        %vm3077 = vcmp.lt.s32.totalorder %v3058, 1
        %vm3078 = vcmp.lt.s32.totalorder %v3058, 2
        %vm3079 = vcmp.lt.s32.totalorder %v3058, 3
        %vm3080 = vcmp.lt.s32.totalorder %v3058, 4
        %v3081 = vsel %vm3077, %v3061, %v3064
        %v3082 = vsel %vm3080, %v3070, 2102212464
        %v3083 = vsel %vm3079, %v3067, %v3082
        %v3084 = vsel %vm3078, %v3081, %v3083
        %v3085 = vsel %vm3077, %v3064, %v3067
        %v3086 = vsel %vm3080, %v3073, 920167782
        %v3087 = vsel %vm3079, %v3070, %v3086
        %v3088 = vsel %vm3078, %v3085, %v3087
        %v3089 = vsel %vm3077, %v3067, %v3070
        %v3090 = vsel %vm3080, %v3076, 1326507024
        %v3091 = vsel %vm3079, %v3073, %v3090
        %v3092 = vsel %vm3078, %v3089, %v3091
        %v3093 = vshll.u32 %v3053, 8
        %v3094 = vmul.u32.u64.compose %v3093, %v3092
        %v3095 = vextract.low.u32 %v3094
        %v3096 = vextract.high.u32 %v3094
        %v3097 = vmul.u32.u64.compose %v3093, %v3088
        %v3098 = vextract.low.u32 %v3097
        %v3099 = vextract.high.u32 %v3097
        %v3100 = vmul.u32 %v3093, %v3084
        %v3101 = vadd.s32 %v3096, %v3098
        %vm3102 = vc.u32 %v3096, %v3098
        %v3103 = vadd.s32 %v3099, 1
        %v3104 = vsel %vm3102, %v3103, %v3099
        %v3105 = vadd.s32 %v3100, %v3104
        %v3106 = vadd.s32 %v3105, 536870912
        %v3107 = vshrl.u32 %v3106, 30
        %v3108 = vshll.u32 %v3107, 30
        %v3109 = vsub.s32 %v3105, %v3108
        %vm3110 = vcmp.lt.s32.totalorder %v3109, 0
        %v3111 = vsub.s32 0, %v3109
        %v3112 = vsel %vm3110, %v3111, %v3109
        %v3113 = vclz %v3112
        %v3114 = vsub.s32 %v3113, 2
        %vm3115 = vcmp.gt.s32.totalorder 0, %v3114
        %v3116 = vsel %vm3115, 0, %v3114
        %v3117 = vsub.s32 32, %v3116
        %v3118 = vshll.u32 %v3109, %v3116
        %v3119 = vshrl.u32 %v3101, %v3117
        %v3120 = vor.u32 %v3118, %v3119
        %v3121 = vsub.s32 4294967266, %v3116
        %v3122 = vadd.s32 %v3121, 127
        %v3123 = vshll.u32 %v3122, 23
        %v3124 = vor.u32 4788187, %v3123
        %v3125 = vand.u32 2147483647, %v3124
        %v3127 = vcvt.s32.f32 %v3120
        %v3128 = vmul.f32 %v3127, %v3125
        %v3129 = vxor.u32 %v3128, 2147483648
        %v3130 = vsel %vm3047, %v3129, %v3128
        %v3131 = vsub.s32 4, %v3107
        %v3132 = vsel %vm3047, %v3131, %v3107
        %v3133 = vsel %vm3046, %v2001, %v3130
        %v3134 = vsel %vm3046, 0, %v3132
        %v3135 = vcosq.f32.pop %v3133
        %v3136 = vsinq.f32.pop %v3133
        %vm3137 = vweird.f32 %v2001
        %v3138 = vand.u32 %v3134, 3
        %vm3139 = vcmp.lt.s32.totalorder %v3138, 2
        %vm3140 = vcmp.eq.s32.totalorder %v3138, 0
        %v3141 = vxor.u32 %v3136, 2147483648
        %v3142 = vsel %vm3140, %v3135, %v3141
        %vm3143 = vcmp.eq.s32.totalorder %v3138, 2
        %v3144 = vxor.u32 %v3135, 2147483648
        %v3145 = vsel %vm3143, %v3144, %v3136
        %v3146 = vsel %vm3139, %v3142, %v3145
        %v3147 = vsel %vm3137, nan, %v3146
        %v3148 = vand.u32 2147483647, %v2002
        %vm3149 = vcmp.le.f32.partialorder %v3148, 0.7853982
        %vm3150 = vcmp.lt.s32.totalorder %v2002, 0
        %v3151 = vand.u32 %v2002, 2139095040
        %v3152 = vshrl.u32 %v3151, 23
        %v3153 = vsub.s32 %v3152, 127
        %v3154 = vand.u32 2147483647, %v2002
        %v3155 = vand.u32 %v3154, 8388607
        %v3156 = vor.u32 %v3155, 8388608
        %v3157 = vsub.s32 0, %v3156
        %v3158 = vadd.s32 %v3153, 1
        %vm3159 = vcmp.gt.s32.totalorder %v3158, 0
        %v3160 = vsel %vm3159, %v3158, 0
        %v3161 = vshrl.u32 %v3160, 5
        %v3162 = vand.u32 %v3160, 31
        %v3163 = vsub.s32 32, %v3162
        %v3164 = vshrl.u32 683565275, %v3163
        %v3165 = vshll.u32 683565275, %v3162
        %v3166 = vshrl.u32 2475754826, %v3163
        %v3167 = vor.u32 %v3165, %v3166
        %v3168 = vshll.u32 2475754826, %v3162
        %v3169 = vshrl.u32 2131351028, %v3163
        %v3170 = vor.u32 %v3168, %v3169
        %v3171 = vshll.u32 2131351028, %v3162
        %v3172 = vshrl.u32 2102212464, %v3163
        %v3173 = vor.u32 %v3171, %v3172
        %v3174 = vshll.u32 2102212464, %v3162
        %v3175 = vshrl.u32 920167782, %v3163
        %v3176 = vor.u32 %v3174, %v3175
        %v3177 = vshll.u32 920167782, %v3162
        %v3178 = vshrl.u32 1326507024, %v3163
        %v3179 = vor.u32 %v3177, %v3178
        %vm3180 = vcmp.lt.s32.totalorder %v3161, 1
        %vm3181 = vcmp.lt.s32.totalorder %v3161, 2
        %vm3182 = vcmp.lt.s32.totalorder %v3161, 3
        %vm3183 = vcmp.lt.s32.totalorder %v3161, 4
        %v3184 = vsel %vm3180, %v3164, %v3167
        %v3185 = vsel %vm3183, %v3173, 2102212464
        %v3186 = vsel %vm3182, %v3170, %v3185
        %v3187 = vsel %vm3181, %v3184, %v3186
        %v3188 = vsel %vm3180, %v3167, %v3170
        %v3189 = vsel %vm3183, %v3176, 920167782
        %v3190 = vsel %vm3182, %v3173, %v3189
        %v3191 = vsel %vm3181, %v3188, %v3190
        %v3192 = vsel %vm3180, %v3170, %v3173
        %v3193 = vsel %vm3183, %v3179, 1326507024
        %v3194 = vsel %vm3182, %v3176, %v3193
        %v3195 = vsel %vm3181, %v3192, %v3194
        %v3196 = vshll.u32 %v3156, 8
        %v3197 = vmul.u32.u64.compose %v3196, %v3195
        %v3198 = vextract.low.u32 %v3197
        %v3199 = vextract.high.u32 %v3197
        %v3200 = vmul.u32.u64.compose %v3196, %v3191
        %v3201 = vextract.low.u32 %v3200
        %v3202 = vextract.high.u32 %v3200
        %v3203 = vmul.u32 %v3196, %v3187
        %v3204 = vadd.s32 %v3199, %v3201
        %vm3205 = vc.u32 %v3199, %v3201
        %v3206 = vadd.s32 %v3202, 1
        %v3207 = vsel %vm3205, %v3206, %v3202
        %v3208 = vadd.s32 %v3203, %v3207
        %v3209 = vadd.s32 %v3208, 536870912
        %v3210 = vshrl.u32 %v3209, 30
        %v3211 = vshll.u32 %v3210, 30
        %v3212 = vsub.s32 %v3208, %v3211
        %vm3213 = vcmp.lt.s32.totalorder %v3212, 0
        %v3214 = vsub.s32 0, %v3212
        %v3215 = vsel %vm3213, %v3214, %v3212
        %v3216 = vclz %v3215
        %v3217 = vsub.s32 %v3216, 2
        %vm3218 = vcmp.gt.s32.totalorder 0, %v3217
        %v3219 = vsel %vm3218, 0, %v3217
        %v3220 = vsub.s32 32, %v3219
        %v3221 = vshll.u32 %v3212, %v3219
        %v3222 = vshrl.u32 %v3204, %v3220
        %v3223 = vor.u32 %v3221, %v3222
        %v3224 = vsub.s32 4294967266, %v3219
        %v3225 = vadd.s32 %v3224, 127
        %v3226 = vshll.u32 %v3225, 23
        %v3227 = vor.u32 4788187, %v3226
        %v3228 = vand.u32 2147483647, %v3227
        %v3230 = vcvt.s32.f32 %v3223
        %v3231 = vmul.f32 %v3230, %v3228
        %v3232 = vxor.u32 %v3231, 2147483648
        %v3233 = vsel %vm3150, %v3232, %v3231
        %v3234 = vsub.s32 4, %v3210
        %v3235 = vsel %vm3150, %v3234, %v3210
        %v3236 = vsel %vm3149, %v2002, %v3233
        %v3237 = vsel %vm3149, 0, %v3235
        %v3238 = vcosq.f32.pop %v3236
        %v3239 = vsinq.f32.pop %v3236
        %vm3240 = vweird.f32 %v2002
        %v3241 = vand.u32 %v3237, 3
        %vm3242 = vcmp.lt.s32.totalorder %v3241, 2
        %vm3243 = vcmp.eq.s32.totalorder %v3241, 0
        %v3244 = vxor.u32 %v3239, 2147483648
        %v3245 = vsel %vm3243, %v3238, %v3244
        %vm3246 = vcmp.eq.s32.totalorder %v3241, 2
        %v3247 = vxor.u32 %v3238, 2147483648
        %v3248 = vsel %vm3246, %v3247, %v3239
        %v3249 = vsel %vm3242, %v3245, %v3248
        %v3250 = vsel %vm3240, nan, %v3249
        %v3251 = vand.u32 2147483647, %v2003
        %vm3252 = vcmp.le.f32.partialorder %v3251, 0.7853982
        %vm3253 = vcmp.lt.s32.totalorder %v2003, 0
        %v3254 = vand.u32 %v2003, 2139095040
        %v3255 = vshrl.u32 %v3254, 23
        %v3256 = vsub.s32 %v3255, 127
        %v3257 = vand.u32 2147483647, %v2003
        %v3258 = vand.u32 %v3257, 8388607
        %v3259 = vor.u32 %v3258, 8388608
        %v3260 = vsub.s32 0, %v3259
        %v3261 = vadd.s32 %v3256, 1
        %vm3262 = vcmp.gt.s32.totalorder %v3261, 0
        %v3263 = vsel %vm3262, %v3261, 0
        %v3264 = vshrl.u32 %v3263, 5
        %v3265 = vand.u32 %v3263, 31
        %v3266 = vsub.s32 32, %v3265
        %v3267 = vshrl.u32 683565275, %v3266
        %v3268 = vshll.u32 683565275, %v3265
        %v3269 = vshrl.u32 2475754826, %v3266
        %v3270 = vor.u32 %v3268, %v3269
        %v3271 = vshll.u32 2475754826, %v3265
        %v3272 = vshrl.u32 2131351028, %v3266
        %v3273 = vor.u32 %v3271, %v3272
        %v3274 = vshll.u32 2131351028, %v3265
        %v3275 = vshrl.u32 2102212464, %v3266
        %v3276 = vor.u32 %v3274, %v3275
        %v3277 = vshll.u32 2102212464, %v3265
        %v3278 = vshrl.u32 920167782, %v3266
        %v3279 = vor.u32 %v3277, %v3278
        %v3280 = vshll.u32 920167782, %v3265
        %v3281 = vshrl.u32 1326507024, %v3266
        %v3282 = vor.u32 %v3280, %v3281
        %vm3283 = vcmp.lt.s32.totalorder %v3264, 1
        %vm3284 = vcmp.lt.s32.totalorder %v3264, 2
        %vm3285 = vcmp.lt.s32.totalorder %v3264, 3
        %vm3286 = vcmp.lt.s32.totalorder %v3264, 4
        %v3287 = vsel %vm3283, %v3267, %v3270
        %v3288 = vsel %vm3286, %v3276, 2102212464
        %v3289 = vsel %vm3285, %v3273, %v3288
        %v3290 = vsel %vm3284, %v3287, %v3289
        %v3291 = vsel %vm3283, %v3270, %v3273
        %v3292 = vsel %vm3286, %v3279, 920167782
        %v3293 = vsel %vm3285, %v3276, %v3292
        %v3294 = vsel %vm3284, %v3291, %v3293
        %v3295 = vsel %vm3283, %v3273, %v3276
        %v3296 = vsel %vm3286, %v3282, 1326507024
        %v3297 = vsel %vm3285, %v3279, %v3296
        %v3298 = vsel %vm3284, %v3295, %v3297
        %v3299 = vshll.u32 %v3259, 8
        %v3300 = vmul.u32.u64.compose %v3299, %v3298
        %v3301 = vextract.low.u32 %v3300
        %v3302 = vextract.high.u32 %v3300
        %v3303 = vmul.u32.u64.compose %v3299, %v3294
        %v3304 = vextract.low.u32 %v3303
        %v3305 = vextract.high.u32 %v3303
        %v3306 = vmul.u32 %v3299, %v3290
        %v3307 = vadd.s32 %v3302, %v3304
        %vm3308 = vc.u32 %v3302, %v3304
        %v3309 = vadd.s32 %v3305, 1
        %v3310 = vsel %vm3308, %v3309, %v3305
        %v3311 = vadd.s32 %v3306, %v3310
        %v3312 = vadd.s32 %v3311, 536870912
        %v3313 = vshrl.u32 %v3312, 30
        %v3314 = vshll.u32 %v3313, 30
        %v3315 = vsub.s32 %v3311, %v3314
        %vm3316 = vcmp.lt.s32.totalorder %v3315, 0
        %v3317 = vsub.s32 0, %v3315
        %v3318 = vsel %vm3316, %v3317, %v3315
        %v3319 = vclz %v3318
        %v3320 = vsub.s32 %v3319, 2
        %vm3321 = vcmp.gt.s32.totalorder 0, %v3320
        %v3322 = vsel %vm3321, 0, %v3320
        %v3323 = vsub.s32 32, %v3322
        %v3324 = vshll.u32 %v3315, %v3322
        %v3325 = vshrl.u32 %v3307, %v3323
        %v3326 = vor.u32 %v3324, %v3325
        %v3327 = vsub.s32 4294967266, %v3322
        %v3328 = vadd.s32 %v3327, 127
        %v3329 = vshll.u32 %v3328, 23
        %v3330 = vor.u32 4788187, %v3329
        %v3331 = vand.u32 2147483647, %v3330
        %v3333 = vcvt.s32.f32 %v3326
        %v3334 = vmul.f32 %v3333, %v3331
        %v3335 = vxor.u32 %v3334, 2147483648
        %v3336 = vsel %vm3253, %v3335, %v3334
        %v3337 = vsub.s32 4, %v3313
        %v3338 = vsel %vm3253, %v3337, %v3313
        %v3339 = vsel %vm3252, %v2003, %v3336
        %v3340 = vsel %vm3252, 0, %v3338
        %v3341 = vcosq.f32.pop %v3339
        %v3342 = vsinq.f32.pop %v3339
        %vm3343 = vweird.f32 %v2003
        %v3344 = vand.u32 %v3340, 3
        %vm3345 = vcmp.lt.s32.totalorder %v3344, 2
        %vm3346 = vcmp.eq.s32.totalorder %v3344, 0
        %v3347 = vxor.u32 %v3342, 2147483648
        %v3348 = vsel %vm3346, %v3341, %v3347
        %vm3349 = vcmp.eq.s32.totalorder %v3344, 2
        %v3350 = vxor.u32 %v3341, 2147483648
        %v3351 = vsel %vm3349, %v3350, %v3342
        %v3352 = vsel %vm3345, %v3348, %v3351
        %v3353 = vsel %vm3343, nan, %v3352
        %v3354 = vand.u32 2147483647, %v2004
        %vm3355 = vcmp.le.f32.partialorder %v3354, 0.7853982
        %vm3356 = vcmp.lt.s32.totalorder %v2004, 0
        %v3357 = vand.u32 %v2004, 2139095040
        %v3358 = vshrl.u32 %v3357, 23
        %v3359 = vsub.s32 %v3358, 127
        %v3360 = vand.u32 2147483647, %v2004
        %v3361 = vand.u32 %v3360, 8388607
        %v3362 = vor.u32 %v3361, 8388608
        %v3363 = vsub.s32 0, %v3362
        %v3364 = vadd.s32 %v3359, 1
        %vm3365 = vcmp.gt.s32.totalorder %v3364, 0
        %v3366 = vsel %vm3365, %v3364, 0
        %v3367 = vshrl.u32 %v3366, 5
        %v3368 = vand.u32 %v3366, 31
        %v3369 = vsub.s32 32, %v3368
        %v3370 = vshrl.u32 683565275, %v3369
        %v3371 = vshll.u32 683565275, %v3368
        %v3372 = vshrl.u32 2475754826, %v3369
        %v3373 = vor.u32 %v3371, %v3372
        %v3374 = vshll.u32 2475754826, %v3368
        %v3375 = vshrl.u32 2131351028, %v3369
        %v3376 = vor.u32 %v3374, %v3375
        %v3377 = vshll.u32 2131351028, %v3368
        %v3378 = vshrl.u32 2102212464, %v3369
        %v3379 = vor.u32 %v3377, %v3378
        %v3380 = vshll.u32 2102212464, %v3368
        %v3381 = vshrl.u32 920167782, %v3369
        %v3382 = vor.u32 %v3380, %v3381
        %v3383 = vshll.u32 920167782, %v3368
        %v3384 = vshrl.u32 1326507024, %v3369
        %v3385 = vor.u32 %v3383, %v3384
        %vm3386 = vcmp.lt.s32.totalorder %v3367, 1
        %vm3387 = vcmp.lt.s32.totalorder %v3367, 2
        %vm3388 = vcmp.lt.s32.totalorder %v3367, 3
        %vm3389 = vcmp.lt.s32.totalorder %v3367, 4
        %v3390 = vsel %vm3386, %v3370, %v3373
        %v3391 = vsel %vm3389, %v3379, 2102212464
        %v3392 = vsel %vm3388, %v3376, %v3391
        %v3393 = vsel %vm3387, %v3390, %v3392
        %v3394 = vsel %vm3386, %v3373, %v3376
        %v3395 = vsel %vm3389, %v3382, 920167782
        %v3396 = vsel %vm3388, %v3379, %v3395
        %v3397 = vsel %vm3387, %v3394, %v3396
        %v3398 = vsel %vm3386, %v3376, %v3379
        %v3399 = vsel %vm3389, %v3385, 1326507024
        %v3400 = vsel %vm3388, %v3382, %v3399
        %v3401 = vsel %vm3387, %v3398, %v3400
        %v3402 = vshll.u32 %v3362, 8
        %v3403 = vmul.u32.u64.compose %v3402, %v3401
        %v3404 = vextract.low.u32 %v3403
        %v3405 = vextract.high.u32 %v3403
        %v3406 = vmul.u32.u64.compose %v3402, %v3397
        %v3407 = vextract.low.u32 %v3406
        %v3408 = vextract.high.u32 %v3406
        %v3409 = vmul.u32 %v3402, %v3393
        %v3410 = vadd.s32 %v3405, %v3407
        %vm3411 = vc.u32 %v3405, %v3407
        %v3412 = vadd.s32 %v3408, 1
        %v3413 = vsel %vm3411, %v3412, %v3408
        %v3414 = vadd.s32 %v3409, %v3413
        %v3415 = vadd.s32 %v3414, 536870912
        %v3416 = vshrl.u32 %v3415, 30
        %v3417 = vshll.u32 %v3416, 30
        %v3418 = vsub.s32 %v3414, %v3417
        %vm3419 = vcmp.lt.s32.totalorder %v3418, 0
        %v3420 = vsub.s32 0, %v3418
        %v3421 = vsel %vm3419, %v3420, %v3418
        %v3422 = vclz %v3421
        %v3423 = vsub.s32 %v3422, 2
        %vm3424 = vcmp.gt.s32.totalorder 0, %v3423
        %v3425 = vsel %vm3424, 0, %v3423
        %v3426 = vsub.s32 32, %v3425
        %v3427 = vshll.u32 %v3418, %v3425
        %v3428 = vshrl.u32 %v3410, %v3426
        %v3429 = vor.u32 %v3427, %v3428
        %v3430 = vsub.s32 4294967266, %v3425
        %v3431 = vadd.s32 %v3430, 127
        %v3432 = vshll.u32 %v3431, 23
        %v3433 = vor.u32 4788187, %v3432
        %v3434 = vand.u32 2147483647, %v3433
        %v3436 = vcvt.s32.f32 %v3429
        %v3437 = vmul.f32 %v3436, %v3434
        %v3438 = vxor.u32 %v3437, 2147483648
        %v3439 = vsel %vm3356, %v3438, %v3437
        %v3440 = vsub.s32 4, %v3416
        %v3441 = vsel %vm3356, %v3440, %v3416
        %v3442 = vsel %vm3355, %v2004, %v3439
        %v3443 = vsel %vm3355, 0, %v3441
        %v3444 = vcosq.f32.pop %v3442
        %v3445 = vsinq.f32.pop %v3442
        %vm3446 = vweird.f32 %v2004
        %v3447 = vand.u32 %v3443, 3
        %vm3448 = vcmp.lt.s32.totalorder %v3447, 2
        %vm3449 = vcmp.eq.s32.totalorder %v3447, 0
        %v3450 = vxor.u32 %v3445, 2147483648
        %v3451 = vsel %vm3449, %v3444, %v3450
        %vm3452 = vcmp.eq.s32.totalorder %v3447, 2
        %v3453 = vxor.u32 %v3444, 2147483648
        %v3454 = vsel %vm3452, %v3453, %v3445
        %v3455 = vsel %vm3448, %v3451, %v3454
        %v3456 = vsel %vm3446, nan, %v3455
        %v3457 = vand.u32 2147483647, %v2005
        %vm3458 = vcmp.le.f32.partialorder %v3457, 0.7853982
        %vm3459 = vcmp.lt.s32.totalorder %v2005, 0
        %v3460 = vand.u32 %v2005, 2139095040
        %v3461 = vshrl.u32 %v3460, 23
        %v3462 = vsub.s32 %v3461, 127
        %v3463 = vand.u32 2147483647, %v2005
        %v3464 = vand.u32 %v3463, 8388607
        %v3465 = vor.u32 %v3464, 8388608
        %v3466 = vsub.s32 0, %v3465
        %v3467 = vadd.s32 %v3462, 1
        %vm3468 = vcmp.gt.s32.totalorder %v3467, 0
        %v3469 = vsel %vm3468, %v3467, 0
        %v3470 = vshrl.u32 %v3469, 5
        %v3471 = vand.u32 %v3469, 31
        %v3472 = vsub.s32 32, %v3471
        %v3473 = vshrl.u32 683565275, %v3472
        %v3474 = vshll.u32 683565275, %v3471
        %v3475 = vshrl.u32 2475754826, %v3472
        %v3476 = vor.u32 %v3474, %v3475
        %v3477 = vshll.u32 2475754826, %v3471
        %v3478 = vshrl.u32 2131351028, %v3472
        %v3479 = vor.u32 %v3477, %v3478
        %v3480 = vshll.u32 2131351028, %v3471
        %v3481 = vshrl.u32 2102212464, %v3472
        %v3482 = vor.u32 %v3480, %v3481
        %v3483 = vshll.u32 2102212464, %v3471
        %v3484 = vshrl.u32 920167782, %v3472
        %v3485 = vor.u32 %v3483, %v3484
        %v3486 = vshll.u32 920167782, %v3471
        %v3487 = vshrl.u32 1326507024, %v3472
        %v3488 = vor.u32 %v3486, %v3487
        %vm3489 = vcmp.lt.s32.totalorder %v3470, 1
        %vm3490 = vcmp.lt.s32.totalorder %v3470, 2
        %vm3491 = vcmp.lt.s32.totalorder %v3470, 3
        %vm3492 = vcmp.lt.s32.totalorder %v3470, 4
        %v3493 = vsel %vm3489, %v3473, %v3476
        %v3494 = vsel %vm3492, %v3482, 2102212464
        %v3495 = vsel %vm3491, %v3479, %v3494
        %v3496 = vsel %vm3490, %v3493, %v3495
        %v3497 = vsel %vm3489, %v3476, %v3479
        %v3498 = vsel %vm3492, %v3485, 920167782
        %v3499 = vsel %vm3491, %v3482, %v3498
        %v3500 = vsel %vm3490, %v3497, %v3499
        %v3501 = vsel %vm3489, %v3479, %v3482
        %v3502 = vsel %vm3492, %v3488, 1326507024
        %v3503 = vsel %vm3491, %v3485, %v3502
        %v3504 = vsel %vm3490, %v3501, %v3503
        %v3505 = vshll.u32 %v3465, 8
        %v3506 = vmul.u32.u64.compose %v3505, %v3504
        %v3507 = vextract.low.u32 %v3506
        %v3508 = vextract.high.u32 %v3506
        %v3509 = vmul.u32.u64.compose %v3505, %v3500
        %v3510 = vextract.low.u32 %v3509
        %v3511 = vextract.high.u32 %v3509
        %v3512 = vmul.u32 %v3505, %v3496
        %v3513 = vadd.s32 %v3508, %v3510
        %vm3514 = vc.u32 %v3508, %v3510
        %v3515 = vadd.s32 %v3511, 1
        %v3516 = vsel %vm3514, %v3515, %v3511
        %v3517 = vadd.s32 %v3512, %v3516
        %v3518 = vadd.s32 %v3517, 536870912
        %v3519 = vshrl.u32 %v3518, 30
        %v3520 = vshll.u32 %v3519, 30
        %v3521 = vsub.s32 %v3517, %v3520
        %vm3522 = vcmp.lt.s32.totalorder %v3521, 0
        %v3523 = vsub.s32 0, %v3521
        %v3524 = vsel %vm3522, %v3523, %v3521
        %v3525 = vclz %v3524
        %v3526 = vsub.s32 %v3525, 2
        %vm3527 = vcmp.gt.s32.totalorder 0, %v3526
        %v3528 = vsel %vm3527, 0, %v3526
        %v3529 = vsub.s32 32, %v3528
        %v3530 = vshll.u32 %v3521, %v3528
        %v3531 = vshrl.u32 %v3513, %v3529
        %v3532 = vor.u32 %v3530, %v3531
        %v3533 = vsub.s32 4294967266, %v3528
        %v3534 = vadd.s32 %v3533, 127
        %v3535 = vshll.u32 %v3534, 23
        %v3536 = vor.u32 4788187, %v3535
        %v3537 = vand.u32 2147483647, %v3536
        %v3539 = vcvt.s32.f32 %v3532
        %v3540 = vmul.f32 %v3539, %v3537
        %v3541 = vxor.u32 %v3540, 2147483648
        %v3542 = vsel %vm3459, %v3541, %v3540
        %v3543 = vsub.s32 4, %v3519
        %v3544 = vsel %vm3459, %v3543, %v3519
        %v3545 = vsel %vm3458, %v2005, %v3542
        %v3546 = vsel %vm3458, 0, %v3544
        %v3547 = vcosq.f32.pop %v3545
        %v3548 = vsinq.f32.pop %v3545
        %vm3549 = vweird.f32 %v2005
        %v3550 = vand.u32 %v3546, 3
        %vm3551 = vcmp.lt.s32.totalorder %v3550, 2
        %vm3552 = vcmp.eq.s32.totalorder %v3550, 0
        %v3553 = vxor.u32 %v3548, 2147483648
        %v3554 = vsel %vm3552, %v3547, %v3553
        %vm3555 = vcmp.eq.s32.totalorder %v3550, 2
        %v3556 = vxor.u32 %v3547, 2147483648
        %v3557 = vsel %vm3555, %v3556, %v3548
        %v3558 = vsel %vm3551, %v3554, %v3557
        %v3559 = vsel %vm3549, nan, %v3558
        %v3560 = vand.u32 2147483647, %v2006
        %vm3561 = vcmp.le.f32.partialorder %v3560, 0.7853982
        %vm3562 = vcmp.lt.s32.totalorder %v2006, 0
        %v3563 = vand.u32 %v2006, 2139095040
        %v3564 = vshrl.u32 %v3563, 23
        %v3565 = vsub.s32 %v3564, 127
        %v3566 = vand.u32 2147483647, %v2006
        %v3567 = vand.u32 %v3566, 8388607
        %v3568 = vor.u32 %v3567, 8388608
        %v3569 = vsub.s32 0, %v3568
        %v3570 = vadd.s32 %v3565, 1
        %vm3571 = vcmp.gt.s32.totalorder %v3570, 0
        %v3572 = vsel %vm3571, %v3570, 0
        %v3573 = vshrl.u32 %v3572, 5
        %v3574 = vand.u32 %v3572, 31
        %v3575 = vsub.s32 32, %v3574
        %v3576 = vshrl.u32 683565275, %v3575
        %v3577 = vshll.u32 683565275, %v3574
        %v3578 = vshrl.u32 2475754826, %v3575
        %v3579 = vor.u32 %v3577, %v3578
        %v3580 = vshll.u32 2475754826, %v3574
        %v3581 = vshrl.u32 2131351028, %v3575
        %v3582 = vor.u32 %v3580, %v3581
        %v3583 = vshll.u32 2131351028, %v3574
        %v3584 = vshrl.u32 2102212464, %v3575
        %v3585 = vor.u32 %v3583, %v3584
        %v3586 = vshll.u32 2102212464, %v3574
        %v3587 = vshrl.u32 920167782, %v3575
        %v3588 = vor.u32 %v3586, %v3587
        %v3589 = vshll.u32 920167782, %v3574
        %v3590 = vshrl.u32 1326507024, %v3575
        %v3591 = vor.u32 %v3589, %v3590
        %vm3592 = vcmp.lt.s32.totalorder %v3573, 1
        %vm3593 = vcmp.lt.s32.totalorder %v3573, 2
        %vm3594 = vcmp.lt.s32.totalorder %v3573, 3
        %vm3595 = vcmp.lt.s32.totalorder %v3573, 4
        %v3596 = vsel %vm3592, %v3576, %v3579
        %v3597 = vsel %vm3595, %v3585, 2102212464
        %v3598 = vsel %vm3594, %v3582, %v3597
        %v3599 = vsel %vm3593, %v3596, %v3598
        %v3600 = vsel %vm3592, %v3579, %v3582
        %v3601 = vsel %vm3595, %v3588, 920167782
        %v3602 = vsel %vm3594, %v3585, %v3601
        %v3603 = vsel %vm3593, %v3600, %v3602
        %v3604 = vsel %vm3592, %v3582, %v3585
        %v3605 = vsel %vm3595, %v3591, 1326507024
        %v3606 = vsel %vm3594, %v3588, %v3605
        %v3607 = vsel %vm3593, %v3604, %v3606
        %v3608 = vshll.u32 %v3568, 8
        %v3609 = vmul.u32.u64.compose %v3608, %v3607
        %v3610 = vextract.low.u32 %v3609
        %v3611 = vextract.high.u32 %v3609
        %v3612 = vmul.u32.u64.compose %v3608, %v3603
        %v3613 = vextract.low.u32 %v3612
        %v3614 = vextract.high.u32 %v3612
        %v3615 = vmul.u32 %v3608, %v3599
        %v3616 = vadd.s32 %v3611, %v3613
        %vm3617 = vc.u32 %v3611, %v3613
        %v3618 = vadd.s32 %v3614, 1
        %v3619 = vsel %vm3617, %v3618, %v3614
        %v3620 = vadd.s32 %v3615, %v3619
        %v3621 = vadd.s32 %v3620, 536870912
        %v3622 = vshrl.u32 %v3621, 30
        %v3623 = vshll.u32 %v3622, 30
        %v3624 = vsub.s32 %v3620, %v3623
        %vm3625 = vcmp.lt.s32.totalorder %v3624, 0
        %v3626 = vsub.s32 0, %v3624
        %v3627 = vsel %vm3625, %v3626, %v3624
        %v3628 = vclz %v3627
        %v3629 = vsub.s32 %v3628, 2
        %vm3630 = vcmp.gt.s32.totalorder 0, %v3629
        %v3631 = vsel %vm3630, 0, %v3629
        %v3632 = vsub.s32 32, %v3631
        %v3633 = vshll.u32 %v3624, %v3631
        %v3634 = vshrl.u32 %v3616, %v3632
        %v3635 = vor.u32 %v3633, %v3634
        %v3636 = vsub.s32 4294967266, %v3631
        %v3637 = vadd.s32 %v3636, 127
        %v3638 = vshll.u32 %v3637, 23
        %v3639 = vor.u32 4788187, %v3638
        %v3640 = vand.u32 2147483647, %v3639
        %v3642 = vcvt.s32.f32 %v3635
        %v3643 = vmul.f32 %v3642, %v3640
        %v3644 = vxor.u32 %v3643, 2147483648
        %v3645 = vsel %vm3562, %v3644, %v3643
        %v3646 = vsub.s32 4, %v3622
        %v3647 = vsel %vm3562, %v3646, %v3622
        %v3648 = vsel %vm3561, %v2006, %v3645
        %v3649 = vsel %vm3561, 0, %v3647
        %v3650 = vcosq.f32.pop %v3648
        %v3651 = vsinq.f32.pop %v3648
        %vm3652 = vweird.f32 %v2006
        %v3653 = vand.u32 %v3649, 3
        %vm3654 = vcmp.lt.s32.totalorder %v3653, 2
        %vm3655 = vcmp.eq.s32.totalorder %v3653, 0
        %v3656 = vxor.u32 %v3651, 2147483648
        %v3657 = vsel %vm3655, %v3650, %v3656
        %vm3658 = vcmp.eq.s32.totalorder %v3653, 2
        %v3659 = vxor.u32 %v3650, 2147483648
        %v3660 = vsel %vm3658, %v3659, %v3651
        %v3661 = vsel %vm3654, %v3657, %v3660
        %v3662 = vsel %vm3652, nan, %v3661
        %s3663 = sadd.s32 %s138, 72
        %s3664 = smul.addr %s3663, 8
        %s3665 = scalar_lea.vmem %s135, %s3664 [#allocation5]
        %3666 = vst [vmem:[%s3665] sm:$0xff] %v2110
        %3667 = vst [vmem:[%s3665 + $0x8] sm:$0xff] %v2214
        %3668 = vst [vmem:[%s3665 + $0x10] sm:$0xff] %v2318
        %3669 = vst [vmem:[%s3665 + $0x18] sm:$0xff] %v2422
        %3670 = vst [vmem:[%s3665 + $0x20] sm:$0xff] %v2526
        %3671 = vst [vmem:[%s3665 + $0x28] sm:$0xff] %v2630
        %3672 = vst [vmem:[%s3665 + $0x30] sm:$0xff] %v2734
        %3673 = vst [vmem:[%s3665 + $0x38] sm:$0xff] %v2838
        %s3674 = sadd.s32 %s138, 80
        %s3675 = smul.addr %s3674, 8
        %s3676 = scalar_lea.vmem %s135, %s3675 [#allocation5]
        %3677 = vst [vmem:[%s3676] sm:$0xff] %v2941
        %3678 = vst [vmem:[%s3676 + $0x8] sm:$0xff] %v3044
        %3679 = vst [vmem:[%s3676 + $0x10] sm:$0xff] %v3147
        %3680 = vst [vmem:[%s3676 + $0x18] sm:$0xff] %v3250
        %3681 = vst [vmem:[%s3676 + $0x20] sm:$0xff] %v3353
        %3682 = vst [vmem:[%s3676 + $0x28] sm:$0xff] %v3456
        %3683 = vst [vmem:[%s3676 + $0x30] sm:$0xff] %v3559
        %3684 = vst [vmem:[%s3676 + $0x38] sm:$0xff] %v3662
        %v3685 = vmul.f32 %v2110, 2.0
        %v3686 = vmul.f32 %v2214, 2.0
        %v3687 = vmul.f32 %v2318, 2.0
        %v3688 = vmul.f32 %v2422, 2.0
        %v3689 = vmul.f32 %v2526, 2.0
        %v3690 = vmul.f32 %v2630, 2.0
        %v3691 = vmul.f32 %v2734, 2.0
        %v3692 = vmul.f32 %v2838, 2.0
        %v3693 = vmul.f32 %v3685, %v2941
        %v3694 = vmul.f32 %v3686, %v3044
        %v3695 = vmul.f32 %v3687, %v3147
        %v3696 = vmul.f32 %v3688, %v3250
        %v3697 = vmul.f32 %v3689, %v3353
        %v3698 = vmul.f32 %v3690, %v3456
        %v3699 = vmul.f32 %v3691, %v3559
        %v3700 = vmul.f32 %v3692, %v3662
        %v3701 = vmul.f32 %v3685, %v2110
        %v3702 = vmul.f32 %v3686, %v2214
        %v3703 = vmul.f32 %v3687, %v2318
        %v3704 = vmul.f32 %v3688, %v2422
        %v3705 = vmul.f32 %v3689, %v2526
        %v3706 = vmul.f32 %v3690, %v2630
        %v3707 = vmul.f32 %v3691, %v2734
        %v3708 = vmul.f32 %v3692, %v2838
        %v3709 = vsub.f32 1.0, %v3701
        %v3710 = vsub.f32 1.0, %v3702
        %v3711 = vsub.f32 1.0, %v3703
        %v3712 = vsub.f32 1.0, %v3704
        %v3713 = vsub.f32 1.0, %v3705
        %v3714 = vsub.f32 1.0, %v3706
        %v3715 = vsub.f32 1.0, %v3707
        %v3716 = vsub.f32 1.0, %v3708
        %s3717 = sadd.s32 %s138, 88
        %s3718 = smul.addr %s3717, 8
        %s3719 = scalar_lea.vmem %s135, %s3718 [#allocation5]
        %3720 = vst [vmem:[%s3719] sm:$0xff] %v3693
        %3721 = vst [vmem:[%s3719 + $0x8] sm:$0xff] %v3694
        %3722 = vst [vmem:[%s3719 + $0x10] sm:$0xff] %v3695
        %3723 = vst [vmem:[%s3719 + $0x18] sm:$0xff] %v3696
        %3724 = vst [vmem:[%s3719 + $0x20] sm:$0xff] %v3697
        %3725 = vst [vmem:[%s3719 + $0x28] sm:$0xff] %v3698
        %3726 = vst [vmem:[%s3719 + $0x30] sm:$0xff] %v3699
        %3727 = vst [vmem:[%s3719 + $0x38] sm:$0xff] %v3700
        %s3728 = sadd.s32 %s138, 96
        %s3729 = smul.addr %s3728, 8
        %s3730 = scalar_lea.vmem %s135, %s3729 [#allocation5]
        %3731 = vst [vmem:[%s3730] sm:$0xff] %v3709
        %3732 = vst [vmem:[%s3730 + $0x8] sm:$0xff] %v3710
        %3733 = vst [vmem:[%s3730 + $0x10] sm:$0xff] %v3711
        %3734 = vst [vmem:[%s3730 + $0x18] sm:$0xff] %v3712
        %3735 = vst [vmem:[%s3730 + $0x20] sm:$0xff] %v3713
        %3736 = vst [vmem:[%s3730 + $0x28] sm:$0xff] %v3714
        %3737 = vst [vmem:[%s3730 + $0x30] sm:$0xff] %v3715
        %3738 = vst [vmem:[%s3730 + $0x38] sm:$0xff] %v3716
        %v3739 = vmul.f32 %v3693, 2.0
        %v3740 = vmul.f32 %v3694, 2.0
        %v3741 = vmul.f32 %v3695, 2.0
        %v3742 = vmul.f32 %v3696, 2.0
        %v3743 = vmul.f32 %v3697, 2.0
        %v3744 = vmul.f32 %v3698, 2.0
        %v3745 = vmul.f32 %v3699, 2.0
        %v3746 = vmul.f32 %v3700, 2.0
        %v3747 = vmul.f32 %v3739, %v3709
        %v3748 = vmul.f32 %v3740, %v3710
        %v3749 = vmul.f32 %v3741, %v3711
        %v3750 = vmul.f32 %v3742, %v3712
        %v3751 = vmul.f32 %v3743, %v3713
        %v3752 = vmul.f32 %v3744, %v3714
        %v3753 = vmul.f32 %v3745, %v3715
        %v3754 = vmul.f32 %v3746, %v3716
        %v3755 = vmul.f32 %v3739, %v3693
        %v3756 = vmul.f32 %v3740, %v3694
        %v3757 = vmul.f32 %v3741, %v3695
        %v3758 = vmul.f32 %v3742, %v3696
        %v3759 = vmul.f32 %v3743, %v3697
        %v3760 = vmul.f32 %v3744, %v3698
        %v3761 = vmul.f32 %v3745, %v3699
        %v3762 = vmul.f32 %v3746, %v3700
        %v3763 = vsub.f32 1.0, %v3755
        %v3764 = vsub.f32 1.0, %v3756
        %v3765 = vsub.f32 1.0, %v3757
        %v3766 = vsub.f32 1.0, %v3758
        %v3767 = vsub.f32 1.0, %v3759
        %v3768 = vsub.f32 1.0, %v3760
        %v3769 = vsub.f32 1.0, %v3761
        %v3770 = vsub.f32 1.0, %v3762
        %s3771 = sadd.s32 %s138, 104
        %s3772 = smul.addr %s3771, 8
        %s3773 = scalar_lea.vmem %s135, %s3772 [#allocation5]
        %3774 = vst [vmem:[%s3773] sm:$0xff] %v3747
        %3775 = vst [vmem:[%s3773 + $0x8] sm:$0xff] %v3748
        %3776 = vst [vmem:[%s3773 + $0x10] sm:$0xff] %v3749
        %3777 = vst [vmem:[%s3773 + $0x18] sm:$0xff] %v3750
        %3778 = vst [vmem:[%s3773 + $0x20] sm:$0xff] %v3751
        %3779 = vst [vmem:[%s3773 + $0x28] sm:$0xff] %v3752
        %3780 = vst [vmem:[%s3773 + $0x30] sm:$0xff] %v3753
        %3781 = vst [vmem:[%s3773 + $0x38] sm:$0xff] %v3754
        %s3782 = sadd.s32 %s138, 112
        %s3783 = smul.addr %s3782, 8
        %s3784 = scalar_lea.vmem %s135, %s3783 [#allocation5]
        %3785 = vst [vmem:[%s3784] sm:$0xff] %v3763
        %3786 = vst [vmem:[%s3784 + $0x8] sm:$0xff] %v3764
        %3787 = vst [vmem:[%s3784 + $0x10] sm:$0xff] %v3765
        %3788 = vst [vmem:[%s3784 + $0x18] sm:$0xff] %v3766
        %3789 = vst [vmem:[%s3784 + $0x20] sm:$0xff] %v3767
        %3790 = vst [vmem:[%s3784 + $0x28] sm:$0xff] %v3768
        %3791 = vst [vmem:[%s3784 + $0x30] sm:$0xff] %v3769
        %3792 = vst [vmem:[%s3784 + $0x38] sm:$0xff] %v3770
        %v3793 = vmul.f32 %v3747, 2.0
        %v3794 = vmul.f32 %v3748, 2.0
        %v3795 = vmul.f32 %v3749, 2.0
        %v3796 = vmul.f32 %v3750, 2.0
        %v3797 = vmul.f32 %v3751, 2.0
        %v3798 = vmul.f32 %v3752, 2.0
        %v3799 = vmul.f32 %v3753, 2.0
        %v3800 = vmul.f32 %v3754, 2.0
        %v3801 = vmul.f32 %v3793, %v3763
        %v3802 = vmul.f32 %v3794, %v3764
        %v3803 = vmul.f32 %v3795, %v3765
        %v3804 = vmul.f32 %v3796, %v3766
        %v3805 = vmul.f32 %v3797, %v3767
        %v3806 = vmul.f32 %v3798, %v3768
        %v3807 = vmul.f32 %v3799, %v3769
        %v3808 = vmul.f32 %v3800, %v3770
        %v3809 = vmul.f32 %v3793, %v3747
        %v3810 = vmul.f32 %v3794, %v3748
        %v3811 = vmul.f32 %v3795, %v3749
        %v3812 = vmul.f32 %v3796, %v3750
        %v3813 = vmul.f32 %v3797, %v3751
        %v3814 = vmul.f32 %v3798, %v3752
        %v3815 = vmul.f32 %v3799, %v3753
        %v3816 = vmul.f32 %v3800, %v3754
        %v3817 = vsub.f32 1.0, %v3809
        %v3818 = vsub.f32 1.0, %v3810
        %v3819 = vsub.f32 1.0, %v3811
        %v3820 = vsub.f32 1.0, %v3812
        %v3821 = vsub.f32 1.0, %v3813
        %v3822 = vsub.f32 1.0, %v3814
        %v3823 = vsub.f32 1.0, %v3815
        %v3824 = vsub.f32 1.0, %v3816
        %s3825 = sadd.s32 %s138, 120
        %s3826 = smul.addr %s3825, 8
        %s3827 = scalar_lea.vmem %s135, %s3826 [#allocation5]
        %3828 = vst [vmem:[%s3827] sm:$0xff] %v3801
        %3829 = vst [vmem:[%s3827 + $0x8] sm:$0xff] %v3802
        %3830 = vst [vmem:[%s3827 + $0x10] sm:$0xff] %v3803
        %3831 = vst [vmem:[%s3827 + $0x18] sm:$0xff] %v3804
        %3832 = vst [vmem:[%s3827 + $0x20] sm:$0xff] %v3805
        %3833 = vst [vmem:[%s3827 + $0x28] sm:$0xff] %v3806
        %3834 = vst [vmem:[%s3827 + $0x30] sm:$0xff] %v3807
        %3835 = vst [vmem:[%s3827 + $0x38] sm:$0xff] %v3808
        %s3836 = sadd.s32 %s138, 128
        %s3837 = smul.addr %s3836, 8
        %s3838 = scalar_lea.vmem %s135, %s3837 [#allocation5]
        %3839 = vst [vmem:[%s3838] sm:$0xff] %v3817
        %3840 = vst [vmem:[%s3838 + $0x8] sm:$0xff] %v3818
        %3841 = vst [vmem:[%s3838 + $0x10] sm:$0xff] %v3819
        %3842 = vst [vmem:[%s3838 + $0x18] sm:$0xff] %v3820
        %3843 = vst [vmem:[%s3838 + $0x20] sm:$0xff] %v3821
        %3844 = vst [vmem:[%s3838 + $0x28] sm:$0xff] %v3822
        %3845 = vst [vmem:[%s3838 + $0x30] sm:$0xff] %v3823
        %3846 = vst [vmem:[%s3838 + $0x38] sm:$0xff] %v3824
        %v3847 = vmul.f32 %v141, 256.0
        %v3848 = vmul.f32 %v142, 256.0
        %v3849 = vmul.f32 %v143, 256.0
        %v3850 = vmul.f32 %v144, 256.0
        %v3851 = vmul.f32 %v145, 256.0
        %v3852 = vmul.f32 %v146, 256.0
        %v3853 = vmul.f32 %v147, 256.0
        %v3854 = vmul.f32 %v148, 256.0
        %v3855 = vand.u32 2147483647, %v3847
        %vm3856 = vcmp.le.f32.partialorder %v3855, 0.7853982
        %vm3857 = vcmp.lt.s32.totalorder %v3847, 0
        %v3858 = vand.u32 %v3847, 2139095040
        %v3859 = vshrl.u32 %v3858, 23
        %v3860 = vsub.s32 %v3859, 127
        %v3861 = vand.u32 2147483647, %v3847
        %v3862 = vand.u32 %v3861, 8388607
        %v3863 = vor.u32 %v3862, 8388608
        %v3864 = vsub.s32 0, %v3863
        %v3865 = vadd.s32 %v3860, 1
        %vm3866 = vcmp.gt.s32.totalorder %v3865, 0
        %v3867 = vsel %vm3866, %v3865, 0
        %v3868 = vshrl.u32 %v3867, 5
        %v3869 = vand.u32 %v3867, 31
        %v3870 = vsub.s32 32, %v3869
        %v3871 = vshrl.u32 683565275, %v3870
        %v3872 = vshll.u32 683565275, %v3869
        %v3873 = vshrl.u32 2475754826, %v3870
        %v3874 = vor.u32 %v3872, %v3873
        %v3875 = vshll.u32 2475754826, %v3869
        %v3876 = vshrl.u32 2131351028, %v3870
        %v3877 = vor.u32 %v3875, %v3876
        %v3878 = vshll.u32 2131351028, %v3869
        %v3879 = vshrl.u32 2102212464, %v3870
        %v3880 = vor.u32 %v3878, %v3879
        %v3881 = vshll.u32 2102212464, %v3869
        %v3882 = vshrl.u32 920167782, %v3870
        %v3883 = vor.u32 %v3881, %v3882
        %v3884 = vshll.u32 920167782, %v3869
        %v3885 = vshrl.u32 1326507024, %v3870
        %v3886 = vor.u32 %v3884, %v3885
        %vm3887 = vcmp.lt.s32.totalorder %v3868, 1
        %vm3888 = vcmp.lt.s32.totalorder %v3868, 2
        %vm3889 = vcmp.lt.s32.totalorder %v3868, 3
        %vm3890 = vcmp.lt.s32.totalorder %v3868, 4
        %v3891 = vsel %vm3887, %v3871, %v3874
        %v3892 = vsel %vm3890, %v3880, 2102212464
        %v3893 = vsel %vm3889, %v3877, %v3892
        %v3894 = vsel %vm3888, %v3891, %v3893
        %v3895 = vsel %vm3887, %v3874, %v3877
        %v3896 = vsel %vm3890, %v3883, 920167782
        %v3897 = vsel %vm3889, %v3880, %v3896
        %v3898 = vsel %vm3888, %v3895, %v3897
        %v3899 = vsel %vm3887, %v3877, %v3880
        %v3900 = vsel %vm3890, %v3886, 1326507024
        %v3901 = vsel %vm3889, %v3883, %v3900
        %v3902 = vsel %vm3888, %v3899, %v3901
        %v3903 = vshll.u32 %v3863, 8
        %v3904 = vmul.u32.u64.compose %v3903, %v3902
        %v3905 = vextract.low.u32 %v3904
        %v3906 = vextract.high.u32 %v3904
        %v3907 = vmul.u32.u64.compose %v3903, %v3898
        %v3908 = vextract.low.u32 %v3907
        %v3909 = vextract.high.u32 %v3907
        %v3910 = vmul.u32 %v3903, %v3894
        %v3911 = vadd.s32 %v3906, %v3908
        %vm3912 = vc.u32 %v3906, %v3908
        %v3913 = vadd.s32 %v3909, 1
        %v3914 = vsel %vm3912, %v3913, %v3909
        %v3915 = vadd.s32 %v3910, %v3914
        %v3916 = vadd.s32 %v3915, 536870912
        %v3917 = vshrl.u32 %v3916, 30
        %v3918 = vshll.u32 %v3917, 30
        %v3919 = vsub.s32 %v3915, %v3918
        %vm3920 = vcmp.lt.s32.totalorder %v3919, 0
        %v3921 = vsub.s32 0, %v3919
        %v3922 = vsel %vm3920, %v3921, %v3919
        %v3923 = vclz %v3922
        %v3924 = vsub.s32 %v3923, 2
        %vm3925 = vcmp.gt.s32.totalorder 0, %v3924
        %v3926 = vsel %vm3925, 0, %v3924
        %v3927 = vsub.s32 32, %v3926
        %v3928 = vshll.u32 %v3919, %v3926
        %v3929 = vshrl.u32 %v3911, %v3927
        %v3930 = vor.u32 %v3928, %v3929
        %v3931 = vsub.s32 4294967266, %v3926
        %v3932 = vadd.s32 %v3931, 127
        %v3933 = vshll.u32 %v3932, 23
        %v3934 = vor.u32 4788187, %v3933
        %v3935 = vand.u32 2147483647, %v3934
        %v3937 = vcvt.s32.f32 %v3930
        %v3938 = vmul.f32 %v3937, %v3935
        %v3939 = vxor.u32 %v3938, 2147483648
        %v3940 = vsel %vm3857, %v3939, %v3938
        %v3941 = vsub.s32 4, %v3917
        %v3942 = vsel %vm3857, %v3941, %v3917
        %v3943 = vsel %vm3856, %v3847, %v3940
        %v3944 = vsel %vm3856, 0, %v3942
        %v3945 = vcosq.f32.pop %v3943
        %v3946 = vsinq.f32.pop %v3943
        %vm3947 = vweird.f32 %v3847
        %v3948 = vadd.s32 %v3944, 3
        %v3949 = vand.u32 %v3948, 3
        %vm3950 = vcmp.lt.s32.totalorder %v3949, 2
        %vm3951 = vcmp.eq.s32.totalorder %v3949, 0
        %v3952 = vxor.u32 %v3946, 2147483648
        %v3953 = vsel %vm3951, %v3945, %v3952
        %vm3954 = vcmp.eq.s32.totalorder %v3949, 2
        %v3955 = vxor.u32 %v3945, 2147483648
        %v3956 = vsel %vm3954, %v3955, %v3946
        %v3957 = vsel %vm3950, %v3953, %v3956
        %v3958 = vsel %vm3947, nan, %v3957
        %v3959 = vand.u32 2147483647, %v3848
        %vm3960 = vcmp.le.f32.partialorder %v3959, 0.7853982
        %vm3961 = vcmp.lt.s32.totalorder %v3848, 0
        %v3962 = vand.u32 %v3848, 2139095040
        %v3963 = vshrl.u32 %v3962, 23
        %v3964 = vsub.s32 %v3963, 127
        %v3965 = vand.u32 2147483647, %v3848
        %v3966 = vand.u32 %v3965, 8388607
        %v3967 = vor.u32 %v3966, 8388608
        %v3968 = vsub.s32 0, %v3967
        %v3969 = vadd.s32 %v3964, 1
        %vm3970 = vcmp.gt.s32.totalorder %v3969, 0
        %v3971 = vsel %vm3970, %v3969, 0
        %v3972 = vshrl.u32 %v3971, 5
        %v3973 = vand.u32 %v3971, 31
        %v3974 = vsub.s32 32, %v3973
        %v3975 = vshrl.u32 683565275, %v3974
        %v3976 = vshll.u32 683565275, %v3973
        %v3977 = vshrl.u32 2475754826, %v3974
        %v3978 = vor.u32 %v3976, %v3977
        %v3979 = vshll.u32 2475754826, %v3973
        %v3980 = vshrl.u32 2131351028, %v3974
        %v3981 = vor.u32 %v3979, %v3980
        %v3982 = vshll.u32 2131351028, %v3973
        %v3983 = vshrl.u32 2102212464, %v3974
        %v3984 = vor.u32 %v3982, %v3983
        %v3985 = vshll.u32 2102212464, %v3973
        %v3986 = vshrl.u32 920167782, %v3974
        %v3987 = vor.u32 %v3985, %v3986
        %v3988 = vshll.u32 920167782, %v3973
        %v3989 = vshrl.u32 1326507024, %v3974
        %v3990 = vor.u32 %v3988, %v3989
        %vm3991 = vcmp.lt.s32.totalorder %v3972, 1
        %vm3992 = vcmp.lt.s32.totalorder %v3972, 2
        %vm3993 = vcmp.lt.s32.totalorder %v3972, 3
        %vm3994 = vcmp.lt.s32.totalorder %v3972, 4
        %v3995 = vsel %vm3991, %v3975, %v3978
        %v3996 = vsel %vm3994, %v3984, 2102212464
        %v3997 = vsel %vm3993, %v3981, %v3996
        %v3998 = vsel %vm3992, %v3995, %v3997
        %v3999 = vsel %vm3991, %v3978, %v3981
        %v4000 = vsel %vm3994, %v3987, 920167782
        %v4001 = vsel %vm3993, %v3984, %v4000
        %v4002 = vsel %vm3992, %v3999, %v4001
        %v4003 = vsel %vm3991, %v3981, %v3984
        %v4004 = vsel %vm3994, %v3990, 1326507024
        %v4005 = vsel %vm3993, %v3987, %v4004
        %v4006 = vsel %vm3992, %v4003, %v4005
        %v4007 = vshll.u32 %v3967, 8
        %v4008 = vmul.u32.u64.compose %v4007, %v4006
        %v4009 = vextract.low.u32 %v4008
        %v4010 = vextract.high.u32 %v4008
        %v4011 = vmul.u32.u64.compose %v4007, %v4002
        %v4012 = vextract.low.u32 %v4011
        %v4013 = vextract.high.u32 %v4011
        %v4014 = vmul.u32 %v4007, %v3998
        %v4015 = vadd.s32 %v4010, %v4012
        %vm4016 = vc.u32 %v4010, %v4012
        %v4017 = vadd.s32 %v4013, 1
        %v4018 = vsel %vm4016, %v4017, %v4013
        %v4019 = vadd.s32 %v4014, %v4018
        %v4020 = vadd.s32 %v4019, 536870912
        %v4021 = vshrl.u32 %v4020, 30
        %v4022 = vshll.u32 %v4021, 30
        %v4023 = vsub.s32 %v4019, %v4022
        %vm4024 = vcmp.lt.s32.totalorder %v4023, 0
        %v4025 = vsub.s32 0, %v4023
        %v4026 = vsel %vm4024, %v4025, %v4023
        %v4027 = vclz %v4026
        %v4028 = vsub.s32 %v4027, 2
        %vm4029 = vcmp.gt.s32.totalorder 0, %v4028
        %v4030 = vsel %vm4029, 0, %v4028
        %v4031 = vsub.s32 32, %v4030
        %v4032 = vshll.u32 %v4023, %v4030
        %v4033 = vshrl.u32 %v4015, %v4031
        %v4034 = vor.u32 %v4032, %v4033
        %v4035 = vsub.s32 4294967266, %v4030
        %v4036 = vadd.s32 %v4035, 127
        %v4037 = vshll.u32 %v4036, 23
        %v4038 = vor.u32 4788187, %v4037
        %v4039 = vand.u32 2147483647, %v4038
        %v4041 = vcvt.s32.f32 %v4034
        %v4042 = vmul.f32 %v4041, %v4039
        %v4043 = vxor.u32 %v4042, 2147483648
        %v4044 = vsel %vm3961, %v4043, %v4042
        %v4045 = vsub.s32 4, %v4021
        %v4046 = vsel %vm3961, %v4045, %v4021
        %v4047 = vsel %vm3960, %v3848, %v4044
        %v4048 = vsel %vm3960, 0, %v4046
        %v4049 = vcosq.f32.pop %v4047
        %v4050 = vsinq.f32.pop %v4047
        %vm4051 = vweird.f32 %v3848
        %v4052 = vadd.s32 %v4048, 3
        %v4053 = vand.u32 %v4052, 3
        %vm4054 = vcmp.lt.s32.totalorder %v4053, 2
        %vm4055 = vcmp.eq.s32.totalorder %v4053, 0
        %v4056 = vxor.u32 %v4050, 2147483648
        %v4057 = vsel %vm4055, %v4049, %v4056
        %vm4058 = vcmp.eq.s32.totalorder %v4053, 2
        %v4059 = vxor.u32 %v4049, 2147483648
        %v4060 = vsel %vm4058, %v4059, %v4050
        %v4061 = vsel %vm4054, %v4057, %v4060
        %v4062 = vsel %vm4051, nan, %v4061
        %v4063 = vand.u32 2147483647, %v3849
        %vm4064 = vcmp.le.f32.partialorder %v4063, 0.7853982
        %vm4065 = vcmp.lt.s32.totalorder %v3849, 0
        %v4066 = vand.u32 %v3849, 2139095040
        %v4067 = vshrl.u32 %v4066, 23
        %v4068 = vsub.s32 %v4067, 127
        %v4069 = vand.u32 2147483647, %v3849
        %v4070 = vand.u32 %v4069, 8388607
        %v4071 = vor.u32 %v4070, 8388608
        %v4072 = vsub.s32 0, %v4071
        %v4073 = vadd.s32 %v4068, 1
        %vm4074 = vcmp.gt.s32.totalorder %v4073, 0
        %v4075 = vsel %vm4074, %v4073, 0
        %v4076 = vshrl.u32 %v4075, 5
        %v4077 = vand.u32 %v4075, 31
        %v4078 = vsub.s32 32, %v4077
        %v4079 = vshrl.u32 683565275, %v4078
        %v4080 = vshll.u32 683565275, %v4077
        %v4081 = vshrl.u32 2475754826, %v4078
        %v4082 = vor.u32 %v4080, %v4081
        %v4083 = vshll.u32 2475754826, %v4077
        %v4084 = vshrl.u32 2131351028, %v4078
        %v4085 = vor.u32 %v4083, %v4084
        %v4086 = vshll.u32 2131351028, %v4077
        %v4087 = vshrl.u32 2102212464, %v4078
        %v4088 = vor.u32 %v4086, %v4087
        %v4089 = vshll.u32 2102212464, %v4077
        %v4090 = vshrl.u32 920167782, %v4078
        %v4091 = vor.u32 %v4089, %v4090
        %v4092 = vshll.u32 920167782, %v4077
        %v4093 = vshrl.u32 1326507024, %v4078
        %v4094 = vor.u32 %v4092, %v4093
        %vm4095 = vcmp.lt.s32.totalorder %v4076, 1
        %vm4096 = vcmp.lt.s32.totalorder %v4076, 2
        %vm4097 = vcmp.lt.s32.totalorder %v4076, 3
        %vm4098 = vcmp.lt.s32.totalorder %v4076, 4
        %v4099 = vsel %vm4095, %v4079, %v4082
        %v4100 = vsel %vm4098, %v4088, 2102212464
        %v4101 = vsel %vm4097, %v4085, %v4100
        %v4102 = vsel %vm4096, %v4099, %v4101
        %v4103 = vsel %vm4095, %v4082, %v4085
        %v4104 = vsel %vm4098, %v4091, 920167782
        %v4105 = vsel %vm4097, %v4088, %v4104
        %v4106 = vsel %vm4096, %v4103, %v4105
        %v4107 = vsel %vm4095, %v4085, %v4088
        %v4108 = vsel %vm4098, %v4094, 1326507024
        %v4109 = vsel %vm4097, %v4091, %v4108
        %v4110 = vsel %vm4096, %v4107, %v4109
        %v4111 = vshll.u32 %v4071, 8
        %v4112 = vmul.u32.u64.compose %v4111, %v4110
        %v4113 = vextract.low.u32 %v4112
        %v4114 = vextract.high.u32 %v4112
        %v4115 = vmul.u32.u64.compose %v4111, %v4106
        %v4116 = vextract.low.u32 %v4115
        %v4117 = vextract.high.u32 %v4115
        %v4118 = vmul.u32 %v4111, %v4102
        %v4119 = vadd.s32 %v4114, %v4116
        %vm4120 = vc.u32 %v4114, %v4116
        %v4121 = vadd.s32 %v4117, 1
        %v4122 = vsel %vm4120, %v4121, %v4117
        %v4123 = vadd.s32 %v4118, %v4122
        %v4124 = vadd.s32 %v4123, 536870912
        %v4125 = vshrl.u32 %v4124, 30
        %v4126 = vshll.u32 %v4125, 30
        %v4127 = vsub.s32 %v4123, %v4126
        %vm4128 = vcmp.lt.s32.totalorder %v4127, 0
        %v4129 = vsub.s32 0, %v4127
        %v4130 = vsel %vm4128, %v4129, %v4127
        %v4131 = vclz %v4130
        %v4132 = vsub.s32 %v4131, 2
        %vm4133 = vcmp.gt.s32.totalorder 0, %v4132
        %v4134 = vsel %vm4133, 0, %v4132
        %v4135 = vsub.s32 32, %v4134
        %v4136 = vshll.u32 %v4127, %v4134
        %v4137 = vshrl.u32 %v4119, %v4135
        %v4138 = vor.u32 %v4136, %v4137
        %v4139 = vsub.s32 4294967266, %v4134
        %v4140 = vadd.s32 %v4139, 127
        %v4141 = vshll.u32 %v4140, 23
        %v4142 = vor.u32 4788187, %v4141
        %v4143 = vand.u32 2147483647, %v4142
        %v4145 = vcvt.s32.f32 %v4138
        %v4146 = vmul.f32 %v4145, %v4143
        %v4147 = vxor.u32 %v4146, 2147483648
        %v4148 = vsel %vm4065, %v4147, %v4146
        %v4149 = vsub.s32 4, %v4125
        %v4150 = vsel %vm4065, %v4149, %v4125
        %v4151 = vsel %vm4064, %v3849, %v4148
        %v4152 = vsel %vm4064, 0, %v4150
        %v4153 = vcosq.f32.pop %v4151
        %v4154 = vsinq.f32.pop %v4151
        %vm4155 = vweird.f32 %v3849
        %v4156 = vadd.s32 %v4152, 3
        %v4157 = vand.u32 %v4156, 3
        %vm4158 = vcmp.lt.s32.totalorder %v4157, 2
        %vm4159 = vcmp.eq.s32.totalorder %v4157, 0
        %v4160 = vxor.u32 %v4154, 2147483648
        %v4161 = vsel %vm4159, %v4153, %v4160
        %vm4162 = vcmp.eq.s32.totalorder %v4157, 2
        %v4163 = vxor.u32 %v4153, 2147483648
        %v4164 = vsel %vm4162, %v4163, %v4154
        %v4165 = vsel %vm4158, %v4161, %v4164
        %v4166 = vsel %vm4155, nan, %v4165
        %v4167 = vand.u32 2147483647, %v3850
        %vm4168 = vcmp.le.f32.partialorder %v4167, 0.7853982
        %vm4169 = vcmp.lt.s32.totalorder %v3850, 0
        %v4170 = vand.u32 %v3850, 2139095040
        %v4171 = vshrl.u32 %v4170, 23
        %v4172 = vsub.s32 %v4171, 127
        %v4173 = vand.u32 2147483647, %v3850
        %v4174 = vand.u32 %v4173, 8388607
        %v4175 = vor.u32 %v4174, 8388608
        %v4176 = vsub.s32 0, %v4175
        %v4177 = vadd.s32 %v4172, 1
        %vm4178 = vcmp.gt.s32.totalorder %v4177, 0
        %v4179 = vsel %vm4178, %v4177, 0
        %v4180 = vshrl.u32 %v4179, 5
        %v4181 = vand.u32 %v4179, 31
        %v4182 = vsub.s32 32, %v4181
        %v4183 = vshrl.u32 683565275, %v4182
        %v4184 = vshll.u32 683565275, %v4181
        %v4185 = vshrl.u32 2475754826, %v4182
        %v4186 = vor.u32 %v4184, %v4185
        %v4187 = vshll.u32 2475754826, %v4181
        %v4188 = vshrl.u32 2131351028, %v4182
        %v4189 = vor.u32 %v4187, %v4188
        %v4190 = vshll.u32 2131351028, %v4181
        %v4191 = vshrl.u32 2102212464, %v4182
        %v4192 = vor.u32 %v4190, %v4191
        %v4193 = vshll.u32 2102212464, %v4181
        %v4194 = vshrl.u32 920167782, %v4182
        %v4195 = vor.u32 %v4193, %v4194
        %v4196 = vshll.u32 920167782, %v4181
        %v4197 = vshrl.u32 1326507024, %v4182
        %v4198 = vor.u32 %v4196, %v4197
        %vm4199 = vcmp.lt.s32.totalorder %v4180, 1
        %vm4200 = vcmp.lt.s32.totalorder %v4180, 2
        %vm4201 = vcmp.lt.s32.totalorder %v4180, 3
        %vm4202 = vcmp.lt.s32.totalorder %v4180, 4
        %v4203 = vsel %vm4199, %v4183, %v4186
        %v4204 = vsel %vm4202, %v4192, 2102212464
        %v4205 = vsel %vm4201, %v4189, %v4204
        %v4206 = vsel %vm4200, %v4203, %v4205
        %v4207 = vsel %vm4199, %v4186, %v4189
        %v4208 = vsel %vm4202, %v4195, 920167782
        %v4209 = vsel %vm4201, %v4192, %v4208
        %v4210 = vsel %vm4200, %v4207, %v4209
        %v4211 = vsel %vm4199, %v4189, %v4192
        %v4212 = vsel %vm4202, %v4198, 1326507024
        %v4213 = vsel %vm4201, %v4195, %v4212
        %v4214 = vsel %vm4200, %v4211, %v4213
        %v4215 = vshll.u32 %v4175, 8
        %v4216 = vmul.u32.u64.compose %v4215, %v4214
        %v4217 = vextract.low.u32 %v4216
        %v4218 = vextract.high.u32 %v4216
        %v4219 = vmul.u32.u64.compose %v4215, %v4210
        %v4220 = vextract.low.u32 %v4219
        %v4221 = vextract.high.u32 %v4219
        %v4222 = vmul.u32 %v4215, %v4206
        %v4223 = vadd.s32 %v4218, %v4220
        %vm4224 = vc.u32 %v4218, %v4220
        %v4225 = vadd.s32 %v4221, 1
        %v4226 = vsel %vm4224, %v4225, %v4221
        %v4227 = vadd.s32 %v4222, %v4226
        %v4228 = vadd.s32 %v4227, 536870912
        %v4229 = vshrl.u32 %v4228, 30
        %v4230 = vshll.u32 %v4229, 30
        %v4231 = vsub.s32 %v4227, %v4230
        %vm4232 = vcmp.lt.s32.totalorder %v4231, 0
        %v4233 = vsub.s32 0, %v4231
        %v4234 = vsel %vm4232, %v4233, %v4231
        %v4235 = vclz %v4234
        %v4236 = vsub.s32 %v4235, 2
        %vm4237 = vcmp.gt.s32.totalorder 0, %v4236
        %v4238 = vsel %vm4237, 0, %v4236
        %v4239 = vsub.s32 32, %v4238
        %v4240 = vshll.u32 %v4231, %v4238
        %v4241 = vshrl.u32 %v4223, %v4239
        %v4242 = vor.u32 %v4240, %v4241
        %v4243 = vsub.s32 4294967266, %v4238
        %v4244 = vadd.s32 %v4243, 127
        %v4245 = vshll.u32 %v4244, 23
        %v4246 = vor.u32 4788187, %v4245
        %v4247 = vand.u32 2147483647, %v4246
        %v4249 = vcvt.s32.f32 %v4242
        %v4250 = vmul.f32 %v4249, %v4247
        %v4251 = vxor.u32 %v4250, 2147483648
        %v4252 = vsel %vm4169, %v4251, %v4250
        %v4253 = vsub.s32 4, %v4229
        %v4254 = vsel %vm4169, %v4253, %v4229
        %v4255 = vsel %vm4168, %v3850, %v4252
        %v4256 = vsel %vm4168, 0, %v4254
        %v4257 = vcosq.f32.pop %v4255
        %v4258 = vsinq.f32.pop %v4255
        %vm4259 = vweird.f32 %v3850
        %v4260 = vadd.s32 %v4256, 3
        %v4261 = vand.u32 %v4260, 3
        %vm4262 = vcmp.lt.s32.totalorder %v4261, 2
        %vm4263 = vcmp.eq.s32.totalorder %v4261, 0
        %v4264 = vxor.u32 %v4258, 2147483648
        %v4265 = vsel %vm4263, %v4257, %v4264
        %vm4266 = vcmp.eq.s32.totalorder %v4261, 2
        %v4267 = vxor.u32 %v4257, 2147483648
        %v4268 = vsel %vm4266, %v4267, %v4258
        %v4269 = vsel %vm4262, %v4265, %v4268
        %v4270 = vsel %vm4259, nan, %v4269
        %v4271 = vand.u32 2147483647, %v3851
        %vm4272 = vcmp.le.f32.partialorder %v4271, 0.7853982
        %vm4273 = vcmp.lt.s32.totalorder %v3851, 0
        %v4274 = vand.u32 %v3851, 2139095040
        %v4275 = vshrl.u32 %v4274, 23
        %v4276 = vsub.s32 %v4275, 127
        %v4277 = vand.u32 2147483647, %v3851
        %v4278 = vand.u32 %v4277, 8388607
        %v4279 = vor.u32 %v4278, 8388608
        %v4280 = vsub.s32 0, %v4279
        %v4281 = vadd.s32 %v4276, 1
        %vm4282 = vcmp.gt.s32.totalorder %v4281, 0
        %v4283 = vsel %vm4282, %v4281, 0
        %v4284 = vshrl.u32 %v4283, 5
        %v4285 = vand.u32 %v4283, 31
        %v4286 = vsub.s32 32, %v4285
        %v4287 = vshrl.u32 683565275, %v4286
        %v4288 = vshll.u32 683565275, %v4285
        %v4289 = vshrl.u32 2475754826, %v4286
        %v4290 = vor.u32 %v4288, %v4289
        %v4291 = vshll.u32 2475754826, %v4285
        %v4292 = vshrl.u32 2131351028, %v4286
        %v4293 = vor.u32 %v4291, %v4292
        %v4294 = vshll.u32 2131351028, %v4285
        %v4295 = vshrl.u32 2102212464, %v4286
        %v4296 = vor.u32 %v4294, %v4295
        %v4297 = vshll.u32 2102212464, %v4285
        %v4298 = vshrl.u32 920167782, %v4286
        %v4299 = vor.u32 %v4297, %v4298
        %v4300 = vshll.u32 920167782, %v4285
        %v4301 = vshrl.u32 1326507024, %v4286
        %v4302 = vor.u32 %v4300, %v4301
        %vm4303 = vcmp.lt.s32.totalorder %v4284, 1
        %vm4304 = vcmp.lt.s32.totalorder %v4284, 2
        %vm4305 = vcmp.lt.s32.totalorder %v4284, 3
        %vm4306 = vcmp.lt.s32.totalorder %v4284, 4
        %v4307 = vsel %vm4303, %v4287, %v4290
        %v4308 = vsel %vm4306, %v4296, 2102212464
        %v4309 = vsel %vm4305, %v4293, %v4308
        %v4310 = vsel %vm4304, %v4307, %v4309
        %v4311 = vsel %vm4303, %v4290, %v4293
        %v4312 = vsel %vm4306, %v4299, 920167782
        %v4313 = vsel %vm4305, %v4296, %v4312
        %v4314 = vsel %vm4304, %v4311, %v4313
        %v4315 = vsel %vm4303, %v4293, %v4296
        %v4316 = vsel %vm4306, %v4302, 1326507024
        %v4317 = vsel %vm4305, %v4299, %v4316
        %v4318 = vsel %vm4304, %v4315, %v4317
        %v4319 = vshll.u32 %v4279, 8
        %v4320 = vmul.u32.u64.compose %v4319, %v4318
        %v4321 = vextract.low.u32 %v4320
        %v4322 = vextract.high.u32 %v4320
        %v4323 = vmul.u32.u64.compose %v4319, %v4314
        %v4324 = vextract.low.u32 %v4323
        %v4325 = vextract.high.u32 %v4323
        %v4326 = vmul.u32 %v4319, %v4310
        %v4327 = vadd.s32 %v4322, %v4324
        %vm4328 = vc.u32 %v4322, %v4324
        %v4329 = vadd.s32 %v4325, 1
        %v4330 = vsel %vm4328, %v4329, %v4325
        %v4331 = vadd.s32 %v4326, %v4330
        %v4332 = vadd.s32 %v4331, 536870912
        %v4333 = vshrl.u32 %v4332, 30
        %v4334 = vshll.u32 %v4333, 30
        %v4335 = vsub.s32 %v4331, %v4334
        %vm4336 = vcmp.lt.s32.totalorder %v4335, 0
        %v4337 = vsub.s32 0, %v4335
        %v4338 = vsel %vm4336, %v4337, %v4335
        %v4339 = vclz %v4338
        %v4340 = vsub.s32 %v4339, 2
        %vm4341 = vcmp.gt.s32.totalorder 0, %v4340
        %v4342 = vsel %vm4341, 0, %v4340
        %v4343 = vsub.s32 32, %v4342
        %v4344 = vshll.u32 %v4335, %v4342
        %v4345 = vshrl.u32 %v4327, %v4343
        %v4346 = vor.u32 %v4344, %v4345
        %v4347 = vsub.s32 4294967266, %v4342
        %v4348 = vadd.s32 %v4347, 127
        %v4349 = vshll.u32 %v4348, 23
        %v4350 = vor.u32 4788187, %v4349
        %v4351 = vand.u32 2147483647, %v4350
        %v4353 = vcvt.s32.f32 %v4346
        %v4354 = vmul.f32 %v4353, %v4351
        %v4355 = vxor.u32 %v4354, 2147483648
        %v4356 = vsel %vm4273, %v4355, %v4354
        %v4357 = vsub.s32 4, %v4333
        %v4358 = vsel %vm4273, %v4357, %v4333
        %v4359 = vsel %vm4272, %v3851, %v4356
        %v4360 = vsel %vm4272, 0, %v4358
        %v4361 = vcosq.f32.pop %v4359
        %v4362 = vsinq.f32.pop %v4359
        %vm4363 = vweird.f32 %v3851
        %v4364 = vadd.s32 %v4360, 3
        %v4365 = vand.u32 %v4364, 3
        %vm4366 = vcmp.lt.s32.totalorder %v4365, 2
        %vm4367 = vcmp.eq.s32.totalorder %v4365, 0
        %v4368 = vxor.u32 %v4362, 2147483648
        %v4369 = vsel %vm4367, %v4361, %v4368
        %vm4370 = vcmp.eq.s32.totalorder %v4365, 2
        %v4371 = vxor.u32 %v4361, 2147483648
        %v4372 = vsel %vm4370, %v4371, %v4362
        %v4373 = vsel %vm4366, %v4369, %v4372
        %v4374 = vsel %vm4363, nan, %v4373
        %v4375 = vand.u32 2147483647, %v3852
        %vm4376 = vcmp.le.f32.partialorder %v4375, 0.7853982
        %vm4377 = vcmp.lt.s32.totalorder %v3852, 0
        %v4378 = vand.u32 %v3852, 2139095040
        %v4379 = vshrl.u32 %v4378, 23
        %v4380 = vsub.s32 %v4379, 127
        %v4381 = vand.u32 2147483647, %v3852
        %v4382 = vand.u32 %v4381, 8388607
        %v4383 = vor.u32 %v4382, 8388608
        %v4384 = vsub.s32 0, %v4383
        %v4385 = vadd.s32 %v4380, 1
        %vm4386 = vcmp.gt.s32.totalorder %v4385, 0
        %v4387 = vsel %vm4386, %v4385, 0
        %v4388 = vshrl.u32 %v4387, 5
        %v4389 = vand.u32 %v4387, 31
        %v4390 = vsub.s32 32, %v4389
        %v4391 = vshrl.u32 683565275, %v4390
        %v4392 = vshll.u32 683565275, %v4389
        %v4393 = vshrl.u32 2475754826, %v4390
        %v4394 = vor.u32 %v4392, %v4393
        %v4395 = vshll.u32 2475754826, %v4389
        %v4396 = vshrl.u32 2131351028, %v4390
        %v4397 = vor.u32 %v4395, %v4396
        %v4398 = vshll.u32 2131351028, %v4389
        %v4399 = vshrl.u32 2102212464, %v4390
        %v4400 = vor.u32 %v4398, %v4399
        %v4401 = vshll.u32 2102212464, %v4389
        %v4402 = vshrl.u32 920167782, %v4390
        %v4403 = vor.u32 %v4401, %v4402
        %v4404 = vshll.u32 920167782, %v4389
        %v4405 = vshrl.u32 1326507024, %v4390
        %v4406 = vor.u32 %v4404, %v4405
        %vm4407 = vcmp.lt.s32.totalorder %v4388, 1
        %vm4408 = vcmp.lt.s32.totalorder %v4388, 2
        %vm4409 = vcmp.lt.s32.totalorder %v4388, 3
        %vm4410 = vcmp.lt.s32.totalorder %v4388, 4
        %v4411 = vsel %vm4407, %v4391, %v4394
        %v4412 = vsel %vm4410, %v4400, 2102212464
        %v4413 = vsel %vm4409, %v4397, %v4412
        %v4414 = vsel %vm4408, %v4411, %v4413
        %v4415 = vsel %vm4407, %v4394, %v4397
        %v4416 = vsel %vm4410, %v4403, 920167782
        %v4417 = vsel %vm4409, %v4400, %v4416
        %v4418 = vsel %vm4408, %v4415, %v4417
        %v4419 = vsel %vm4407, %v4397, %v4400
        %v4420 = vsel %vm4410, %v4406, 1326507024
        %v4421 = vsel %vm4409, %v4403, %v4420
        %v4422 = vsel %vm4408, %v4419, %v4421
        %v4423 = vshll.u32 %v4383, 8
        %v4424 = vmul.u32.u64.compose %v4423, %v4422
        %v4425 = vextract.low.u32 %v4424
        %v4426 = vextract.high.u32 %v4424
        %v4427 = vmul.u32.u64.compose %v4423, %v4418
        %v4428 = vextract.low.u32 %v4427
        %v4429 = vextract.high.u32 %v4427
        %v4430 = vmul.u32 %v4423, %v4414
        %v4431 = vadd.s32 %v4426, %v4428
        %vm4432 = vc.u32 %v4426, %v4428
        %v4433 = vadd.s32 %v4429, 1
        %v4434 = vsel %vm4432, %v4433, %v4429
        %v4435 = vadd.s32 %v4430, %v4434
        %v4436 = vadd.s32 %v4435, 536870912
        %v4437 = vshrl.u32 %v4436, 30
        %v4438 = vshll.u32 %v4437, 30
        %v4439 = vsub.s32 %v4435, %v4438
        %vm4440 = vcmp.lt.s32.totalorder %v4439, 0
        %v4441 = vsub.s32 0, %v4439
        %v4442 = vsel %vm4440, %v4441, %v4439
        %v4443 = vclz %v4442
        %v4444 = vsub.s32 %v4443, 2
        %vm4445 = vcmp.gt.s32.totalorder 0, %v4444
        %v4446 = vsel %vm4445, 0, %v4444
        %v4447 = vsub.s32 32, %v4446
        %v4448 = vshll.u32 %v4439, %v4446
        %v4449 = vshrl.u32 %v4431, %v4447
        %v4450 = vor.u32 %v4448, %v4449
        %v4451 = vsub.s32 4294967266, %v4446
        %v4452 = vadd.s32 %v4451, 127
        %v4453 = vshll.u32 %v4452, 23
        %v4454 = vor.u32 4788187, %v4453
        %v4455 = vand.u32 2147483647, %v4454
        %v4457 = vcvt.s32.f32 %v4450
        %v4458 = vmul.f32 %v4457, %v4455
        %v4459 = vxor.u32 %v4458, 2147483648
        %v4460 = vsel %vm4377, %v4459, %v4458
        %v4461 = vsub.s32 4, %v4437
        %v4462 = vsel %vm4377, %v4461, %v4437
        %v4463 = vsel %vm4376, %v3852, %v4460
        %v4464 = vsel %vm4376, 0, %v4462
        %v4465 = vcosq.f32.pop %v4463
        %v4466 = vsinq.f32.pop %v4463
        %vm4467 = vweird.f32 %v3852
        %v4468 = vadd.s32 %v4464, 3
        %v4469 = vand.u32 %v4468, 3
        %vm4470 = vcmp.lt.s32.totalorder %v4469, 2
        %vm4471 = vcmp.eq.s32.totalorder %v4469, 0
        %v4472 = vxor.u32 %v4466, 2147483648
        %v4473 = vsel %vm4471, %v4465, %v4472
        %vm4474 = vcmp.eq.s32.totalorder %v4469, 2
        %v4475 = vxor.u32 %v4465, 2147483648
        %v4476 = vsel %vm4474, %v4475, %v4466
        %v4477 = vsel %vm4470, %v4473, %v4476
        %v4478 = vsel %vm4467, nan, %v4477
        %v4479 = vand.u32 2147483647, %v3853
        %vm4480 = vcmp.le.f32.partialorder %v4479, 0.7853982
        %vm4481 = vcmp.lt.s32.totalorder %v3853, 0
        %v4482 = vand.u32 %v3853, 2139095040
        %v4483 = vshrl.u32 %v4482, 23
        %v4484 = vsub.s32 %v4483, 127
        %v4485 = vand.u32 2147483647, %v3853
        %v4486 = vand.u32 %v4485, 8388607
        %v4487 = vor.u32 %v4486, 8388608
        %v4488 = vsub.s32 0, %v4487
        %v4489 = vadd.s32 %v4484, 1
        %vm4490 = vcmp.gt.s32.totalorder %v4489, 0
        %v4491 = vsel %vm4490, %v4489, 0
        %v4492 = vshrl.u32 %v4491, 5
        %v4493 = vand.u32 %v4491, 31
        %v4494 = vsub.s32 32, %v4493
        %v4495 = vshrl.u32 683565275, %v4494
        %v4496 = vshll.u32 683565275, %v4493
        %v4497 = vshrl.u32 2475754826, %v4494
        %v4498 = vor.u32 %v4496, %v4497
        %v4499 = vshll.u32 2475754826, %v4493
        %v4500 = vshrl.u32 2131351028, %v4494
        %v4501 = vor.u32 %v4499, %v4500
        %v4502 = vshll.u32 2131351028, %v4493
        %v4503 = vshrl.u32 2102212464, %v4494
        %v4504 = vor.u32 %v4502, %v4503
        %v4505 = vshll.u32 2102212464, %v4493
        %v4506 = vshrl.u32 920167782, %v4494
        %v4507 = vor.u32 %v4505, %v4506
        %v4508 = vshll.u32 920167782, %v4493
        %v4509 = vshrl.u32 1326507024, %v4494
        %v4510 = vor.u32 %v4508, %v4509
        %vm4511 = vcmp.lt.s32.totalorder %v4492, 1
        %vm4512 = vcmp.lt.s32.totalorder %v4492, 2
        %vm4513 = vcmp.lt.s32.totalorder %v4492, 3
        %vm4514 = vcmp.lt.s32.totalorder %v4492, 4
        %v4515 = vsel %vm4511, %v4495, %v4498
        %v4516 = vsel %vm4514, %v4504, 2102212464
        %v4517 = vsel %vm4513, %v4501, %v4516
        %v4518 = vsel %vm4512, %v4515, %v4517
        %v4519 = vsel %vm4511, %v4498, %v4501
        %v4520 = vsel %vm4514, %v4507, 920167782
        %v4521 = vsel %vm4513, %v4504, %v4520
        %v4522 = vsel %vm4512, %v4519, %v4521
        %v4523 = vsel %vm4511, %v4501, %v4504
        %v4524 = vsel %vm4514, %v4510, 1326507024
        %v4525 = vsel %vm4513, %v4507, %v4524
        %v4526 = vsel %vm4512, %v4523, %v4525
        %v4527 = vshll.u32 %v4487, 8
        %v4528 = vmul.u32.u64.compose %v4527, %v4526
        %v4529 = vextract.low.u32 %v4528
        %v4530 = vextract.high.u32 %v4528
        %v4531 = vmul.u32.u64.compose %v4527, %v4522
        %v4532 = vextract.low.u32 %v4531
        %v4533 = vextract.high.u32 %v4531
        %v4534 = vmul.u32 %v4527, %v4518
        %v4535 = vadd.s32 %v4530, %v4532
        %vm4536 = vc.u32 %v4530, %v4532
        %v4537 = vadd.s32 %v4533, 1
        %v4538 = vsel %vm4536, %v4537, %v4533
        %v4539 = vadd.s32 %v4534, %v4538
        %v4540 = vadd.s32 %v4539, 536870912
        %v4541 = vshrl.u32 %v4540, 30
        %v4542 = vshll.u32 %v4541, 30
        %v4543 = vsub.s32 %v4539, %v4542
        %vm4544 = vcmp.lt.s32.totalorder %v4543, 0
        %v4545 = vsub.s32 0, %v4543
        %v4546 = vsel %vm4544, %v4545, %v4543
        %v4547 = vclz %v4546
        %v4548 = vsub.s32 %v4547, 2
        %vm4549 = vcmp.gt.s32.totalorder 0, %v4548
        %v4550 = vsel %vm4549, 0, %v4548
        %v4551 = vsub.s32 32, %v4550
        %v4552 = vshll.u32 %v4543, %v4550
        %v4553 = vshrl.u32 %v4535, %v4551
        %v4554 = vor.u32 %v4552, %v4553
        %v4555 = vsub.s32 4294967266, %v4550
        %v4556 = vadd.s32 %v4555, 127
        %v4557 = vshll.u32 %v4556, 23
        %v4558 = vor.u32 4788187, %v4557
        %v4559 = vand.u32 2147483647, %v4558
        %v4561 = vcvt.s32.f32 %v4554
        %v4562 = vmul.f32 %v4561, %v4559
        %v4563 = vxor.u32 %v4562, 2147483648
        %v4564 = vsel %vm4481, %v4563, %v4562
        %v4565 = vsub.s32 4, %v4541
        %v4566 = vsel %vm4481, %v4565, %v4541
        %v4567 = vsel %vm4480, %v3853, %v4564
        %v4568 = vsel %vm4480, 0, %v4566
        %v4569 = vcosq.f32.pop %v4567
        %v4570 = vsinq.f32.pop %v4567
        %vm4571 = vweird.f32 %v3853
        %v4572 = vadd.s32 %v4568, 3
        %v4573 = vand.u32 %v4572, 3
        %vm4574 = vcmp.lt.s32.totalorder %v4573, 2
        %vm4575 = vcmp.eq.s32.totalorder %v4573, 0
        %v4576 = vxor.u32 %v4570, 2147483648
        %v4577 = vsel %vm4575, %v4569, %v4576
        %vm4578 = vcmp.eq.s32.totalorder %v4573, 2
        %v4579 = vxor.u32 %v4569, 2147483648
        %v4580 = vsel %vm4578, %v4579, %v4570
        %v4581 = vsel %vm4574, %v4577, %v4580
        %v4582 = vsel %vm4571, nan, %v4581
        %v4583 = vand.u32 2147483647, %v3854
        %vm4584 = vcmp.le.f32.partialorder %v4583, 0.7853982
        %vm4585 = vcmp.lt.s32.totalorder %v3854, 0
        %v4586 = vand.u32 %v3854, 2139095040
        %v4587 = vshrl.u32 %v4586, 23
        %v4588 = vsub.s32 %v4587, 127
        %v4589 = vand.u32 2147483647, %v3854
        %v4590 = vand.u32 %v4589, 8388607
        %v4591 = vor.u32 %v4590, 8388608
        %v4592 = vsub.s32 0, %v4591
        %v4593 = vadd.s32 %v4588, 1
        %vm4594 = vcmp.gt.s32.totalorder %v4593, 0
        %v4595 = vsel %vm4594, %v4593, 0
        %v4596 = vshrl.u32 %v4595, 5
        %v4597 = vand.u32 %v4595, 31
        %v4598 = vsub.s32 32, %v4597
        %v4599 = vshrl.u32 683565275, %v4598
        %v4600 = vshll.u32 683565275, %v4597
        %v4601 = vshrl.u32 2475754826, %v4598
        %v4602 = vor.u32 %v4600, %v4601
        %v4603 = vshll.u32 2475754826, %v4597
        %v4604 = vshrl.u32 2131351028, %v4598
        %v4605 = vor.u32 %v4603, %v4604
        %v4606 = vshll.u32 2131351028, %v4597
        %v4607 = vshrl.u32 2102212464, %v4598
        %v4608 = vor.u32 %v4606, %v4607
        %v4609 = vshll.u32 2102212464, %v4597
        %v4610 = vshrl.u32 920167782, %v4598
        %v4611 = vor.u32 %v4609, %v4610
        %v4612 = vshll.u32 920167782, %v4597
        %v4613 = vshrl.u32 1326507024, %v4598
        %v4614 = vor.u32 %v4612, %v4613
        %vm4615 = vcmp.lt.s32.totalorder %v4596, 1
        %vm4616 = vcmp.lt.s32.totalorder %v4596, 2
        %vm4617 = vcmp.lt.s32.totalorder %v4596, 3
        %vm4618 = vcmp.lt.s32.totalorder %v4596, 4
        %v4619 = vsel %vm4615, %v4599, %v4602
        %v4620 = vsel %vm4618, %v4608, 2102212464
        %v4621 = vsel %vm4617, %v4605, %v4620
        %v4622 = vsel %vm4616, %v4619, %v4621
        %v4623 = vsel %vm4615, %v4602, %v4605
        %v4624 = vsel %vm4618, %v4611, 920167782
        %v4625 = vsel %vm4617, %v4608, %v4624
        %v4626 = vsel %vm4616, %v4623, %v4625
        %v4627 = vsel %vm4615, %v4605, %v4608
        %v4628 = vsel %vm4618, %v4614, 1326507024
        %v4629 = vsel %vm4617, %v4611, %v4628
        %v4630 = vsel %vm4616, %v4627, %v4629
        %v4631 = vshll.u32 %v4591, 8
        %v4632 = vmul.u32.u64.compose %v4631, %v4630
        %v4633 = vextract.low.u32 %v4632
        %v4634 = vextract.high.u32 %v4632
        %v4635 = vmul.u32.u64.compose %v4631, %v4626
        %v4636 = vextract.low.u32 %v4635
        %v4637 = vextract.high.u32 %v4635
        %v4638 = vmul.u32 %v4631, %v4622
        %v4639 = vadd.s32 %v4634, %v4636
        %vm4640 = vc.u32 %v4634, %v4636
        %v4641 = vadd.s32 %v4637, 1
        %v4642 = vsel %vm4640, %v4641, %v4637
        %v4643 = vadd.s32 %v4638, %v4642
        %v4644 = vadd.s32 %v4643, 536870912
        %v4645 = vshrl.u32 %v4644, 30
        %v4646 = vshll.u32 %v4645, 30
        %v4647 = vsub.s32 %v4643, %v4646
        %vm4648 = vcmp.lt.s32.totalorder %v4647, 0
        %v4649 = vsub.s32 0, %v4647
        %v4650 = vsel %vm4648, %v4649, %v4647
        %v4651 = vclz %v4650
        %v4652 = vsub.s32 %v4651, 2
        %vm4653 = vcmp.gt.s32.totalorder 0, %v4652
        %v4654 = vsel %vm4653, 0, %v4652
        %v4655 = vsub.s32 32, %v4654
        %v4656 = vshll.u32 %v4647, %v4654
        %v4657 = vshrl.u32 %v4639, %v4655
        %v4658 = vor.u32 %v4656, %v4657
        %v4659 = vsub.s32 4294967266, %v4654
        %v4660 = vadd.s32 %v4659, 127
        %v4661 = vshll.u32 %v4660, 23
        %v4662 = vor.u32 4788187, %v4661
        %v4663 = vand.u32 2147483647, %v4662
        %v4665 = vcvt.s32.f32 %v4658
        %v4666 = vmul.f32 %v4665, %v4663
        %v4667 = vxor.u32 %v4666, 2147483648
        %v4668 = vsel %vm4585, %v4667, %v4666
        %v4669 = vsub.s32 4, %v4645
        %v4670 = vsel %vm4585, %v4669, %v4645
        %v4671 = vsel %vm4584, %v3854, %v4668
        %v4672 = vsel %vm4584, 0, %v4670
        %v4673 = vcosq.f32.pop %v4671
        %v4674 = vsinq.f32.pop %v4671
        %vm4675 = vweird.f32 %v3854
        %v4676 = vadd.s32 %v4672, 3
        %v4677 = vand.u32 %v4676, 3
        %vm4678 = vcmp.lt.s32.totalorder %v4677, 2
        %vm4679 = vcmp.eq.s32.totalorder %v4677, 0
        %v4680 = vxor.u32 %v4674, 2147483648
        %v4681 = vsel %vm4679, %v4673, %v4680
        %vm4682 = vcmp.eq.s32.totalorder %v4677, 2
        %v4683 = vxor.u32 %v4673, 2147483648
        %v4684 = vsel %vm4682, %v4683, %v4674
        %v4685 = vsel %vm4678, %v4681, %v4684
        %v4686 = vsel %vm4675, nan, %v4685
        %v4687 = vand.u32 2147483647, %v3847
        %vm4688 = vcmp.le.f32.partialorder %v4687, 0.7853982
        %vm4689 = vcmp.lt.s32.totalorder %v3847, 0
        %v4690 = vand.u32 %v3847, 2139095040
        %v4691 = vshrl.u32 %v4690, 23
        %v4692 = vsub.s32 %v4691, 127
        %v4693 = vand.u32 2147483647, %v3847
        %v4694 = vand.u32 %v4693, 8388607
        %v4695 = vor.u32 %v4694, 8388608
        %v4696 = vsub.s32 0, %v4695
        %v4697 = vadd.s32 %v4692, 1
        %vm4698 = vcmp.gt.s32.totalorder %v4697, 0
        %v4699 = vsel %vm4698, %v4697, 0
        %v4700 = vshrl.u32 %v4699, 5
        %v4701 = vand.u32 %v4699, 31
        %v4702 = vsub.s32 32, %v4701
        %v4703 = vshrl.u32 683565275, %v4702
        %v4704 = vshll.u32 683565275, %v4701
        %v4705 = vshrl.u32 2475754826, %v4702
        %v4706 = vor.u32 %v4704, %v4705
        %v4707 = vshll.u32 2475754826, %v4701
        %v4708 = vshrl.u32 2131351028, %v4702
        %v4709 = vor.u32 %v4707, %v4708
        %v4710 = vshll.u32 2131351028, %v4701
        %v4711 = vshrl.u32 2102212464, %v4702
        %v4712 = vor.u32 %v4710, %v4711
        %v4713 = vshll.u32 2102212464, %v4701
        %v4714 = vshrl.u32 920167782, %v4702
        %v4715 = vor.u32 %v4713, %v4714
        %v4716 = vshll.u32 920167782, %v4701
        %v4717 = vshrl.u32 1326507024, %v4702
        %v4718 = vor.u32 %v4716, %v4717
        %vm4719 = vcmp.lt.s32.totalorder %v4700, 1
        %vm4720 = vcmp.lt.s32.totalorder %v4700, 2
        %vm4721 = vcmp.lt.s32.totalorder %v4700, 3
        %vm4722 = vcmp.lt.s32.totalorder %v4700, 4
        %v4723 = vsel %vm4719, %v4703, %v4706
        %v4724 = vsel %vm4722, %v4712, 2102212464
        %v4725 = vsel %vm4721, %v4709, %v4724
        %v4726 = vsel %vm4720, %v4723, %v4725
        %v4727 = vsel %vm4719, %v4706, %v4709
        %v4728 = vsel %vm4722, %v4715, 920167782
        %v4729 = vsel %vm4721, %v4712, %v4728
        %v4730 = vsel %vm4720, %v4727, %v4729
        %v4731 = vsel %vm4719, %v4709, %v4712
        %v4732 = vsel %vm4722, %v4718, 1326507024
        %v4733 = vsel %vm4721, %v4715, %v4732
        %v4734 = vsel %vm4720, %v4731, %v4733
        %v4735 = vshll.u32 %v4695, 8
        %v4736 = vmul.u32.u64.compose %v4735, %v4734
        %v4737 = vextract.low.u32 %v4736
        %v4738 = vextract.high.u32 %v4736
        %v4739 = vmul.u32.u64.compose %v4735, %v4730
        %v4740 = vextract.low.u32 %v4739
        %v4741 = vextract.high.u32 %v4739
        %v4742 = vmul.u32 %v4735, %v4726
        %v4743 = vadd.s32 %v4738, %v4740
        %vm4744 = vc.u32 %v4738, %v4740
        %v4745 = vadd.s32 %v4741, 1
        %v4746 = vsel %vm4744, %v4745, %v4741
        %v4747 = vadd.s32 %v4742, %v4746
        %v4748 = vadd.s32 %v4747, 536870912
        %v4749 = vshrl.u32 %v4748, 30
        %v4750 = vshll.u32 %v4749, 30
        %v4751 = vsub.s32 %v4747, %v4750
        %vm4752 = vcmp.lt.s32.totalorder %v4751, 0
        %v4753 = vsub.s32 0, %v4751
        %v4754 = vsel %vm4752, %v4753, %v4751
        %v4755 = vclz %v4754
        %v4756 = vsub.s32 %v4755, 2
        %vm4757 = vcmp.gt.s32.totalorder 0, %v4756
        %v4758 = vsel %vm4757, 0, %v4756
        %v4759 = vsub.s32 32, %v4758
        %v4760 = vshll.u32 %v4751, %v4758
        %v4761 = vshrl.u32 %v4743, %v4759
        %v4762 = vor.u32 %v4760, %v4761
        %v4763 = vsub.s32 4294967266, %v4758
        %v4764 = vadd.s32 %v4763, 127
        %v4765 = vshll.u32 %v4764, 23
        %v4766 = vor.u32 4788187, %v4765
        %v4767 = vand.u32 2147483647, %v4766
        %v4769 = vcvt.s32.f32 %v4762
        %v4770 = vmul.f32 %v4769, %v4767
        %v4771 = vxor.u32 %v4770, 2147483648
        %v4772 = vsel %vm4689, %v4771, %v4770
        %v4773 = vsub.s32 4, %v4749
        %v4774 = vsel %vm4689, %v4773, %v4749
        %v4775 = vsel %vm4688, %v3847, %v4772
        %v4776 = vsel %vm4688, 0, %v4774
        %v4777 = vcosq.f32.pop %v4775
        %v4778 = vsinq.f32.pop %v4775
        %vm4779 = vweird.f32 %v3847
        %v4780 = vand.u32 %v4776, 3
        %vm4781 = vcmp.lt.s32.totalorder %v4780, 2
        %vm4782 = vcmp.eq.s32.totalorder %v4780, 0
        %v4783 = vxor.u32 %v4778, 2147483648
        %v4784 = vsel %vm4782, %v4777, %v4783
        %vm4785 = vcmp.eq.s32.totalorder %v4780, 2
        %v4786 = vxor.u32 %v4777, 2147483648
        %v4787 = vsel %vm4785, %v4786, %v4778
        %v4788 = vsel %vm4781, %v4784, %v4787
        %v4789 = vsel %vm4779, nan, %v4788
        %v4790 = vand.u32 2147483647, %v3848
        %vm4791 = vcmp.le.f32.partialorder %v4790, 0.7853982
        %vm4792 = vcmp.lt.s32.totalorder %v3848, 0
        %v4793 = vand.u32 %v3848, 2139095040
        %v4794 = vshrl.u32 %v4793, 23
        %v4795 = vsub.s32 %v4794, 127
        %v4796 = vand.u32 2147483647, %v3848
        %v4797 = vand.u32 %v4796, 8388607
        %v4798 = vor.u32 %v4797, 8388608
        %v4799 = vsub.s32 0, %v4798
        %v4800 = vadd.s32 %v4795, 1
        %vm4801 = vcmp.gt.s32.totalorder %v4800, 0
        %v4802 = vsel %vm4801, %v4800, 0
        %v4803 = vshrl.u32 %v4802, 5
        %v4804 = vand.u32 %v4802, 31
        %v4805 = vsub.s32 32, %v4804
        %v4806 = vshrl.u32 683565275, %v4805
        %v4807 = vshll.u32 683565275, %v4804
        %v4808 = vshrl.u32 2475754826, %v4805
        %v4809 = vor.u32 %v4807, %v4808
        %v4810 = vshll.u32 2475754826, %v4804
        %v4811 = vshrl.u32 2131351028, %v4805
        %v4812 = vor.u32 %v4810, %v4811
        %v4813 = vshll.u32 2131351028, %v4804
        %v4814 = vshrl.u32 2102212464, %v4805
        %v4815 = vor.u32 %v4813, %v4814
        %v4816 = vshll.u32 2102212464, %v4804
        %v4817 = vshrl.u32 920167782, %v4805
        %v4818 = vor.u32 %v4816, %v4817
        %v4819 = vshll.u32 920167782, %v4804
        %v4820 = vshrl.u32 1326507024, %v4805
        %v4821 = vor.u32 %v4819, %v4820
        %vm4822 = vcmp.lt.s32.totalorder %v4803, 1
        %vm4823 = vcmp.lt.s32.totalorder %v4803, 2
        %vm4824 = vcmp.lt.s32.totalorder %v4803, 3
        %vm4825 = vcmp.lt.s32.totalorder %v4803, 4
        %v4826 = vsel %vm4822, %v4806, %v4809
        %v4827 = vsel %vm4825, %v4815, 2102212464
        %v4828 = vsel %vm4824, %v4812, %v4827
        %v4829 = vsel %vm4823, %v4826, %v4828
        %v4830 = vsel %vm4822, %v4809, %v4812
        %v4831 = vsel %vm4825, %v4818, 920167782
        %v4832 = vsel %vm4824, %v4815, %v4831
        %v4833 = vsel %vm4823, %v4830, %v4832
        %v4834 = vsel %vm4822, %v4812, %v4815
        %v4835 = vsel %vm4825, %v4821, 1326507024
        %v4836 = vsel %vm4824, %v4818, %v4835
        %v4837 = vsel %vm4823, %v4834, %v4836
        %v4838 = vshll.u32 %v4798, 8
        %v4839 = vmul.u32.u64.compose %v4838, %v4837
        %v4840 = vextract.low.u32 %v4839
        %v4841 = vextract.high.u32 %v4839
        %v4842 = vmul.u32.u64.compose %v4838, %v4833
        %v4843 = vextract.low.u32 %v4842
        %v4844 = vextract.high.u32 %v4842
        %v4845 = vmul.u32 %v4838, %v4829
        %v4846 = vadd.s32 %v4841, %v4843
        %vm4847 = vc.u32 %v4841, %v4843
        %v4848 = vadd.s32 %v4844, 1
        %v4849 = vsel %vm4847, %v4848, %v4844
        %v4850 = vadd.s32 %v4845, %v4849
        %v4851 = vadd.s32 %v4850, 536870912
        %v4852 = vshrl.u32 %v4851, 30
        %v4853 = vshll.u32 %v4852, 30
        %v4854 = vsub.s32 %v4850, %v4853
        %vm4855 = vcmp.lt.s32.totalorder %v4854, 0
        %v4856 = vsub.s32 0, %v4854
        %v4857 = vsel %vm4855, %v4856, %v4854
        %v4858 = vclz %v4857
        %v4859 = vsub.s32 %v4858, 2
        %vm4860 = vcmp.gt.s32.totalorder 0, %v4859
        %v4861 = vsel %vm4860, 0, %v4859
        %v4862 = vsub.s32 32, %v4861
        %v4863 = vshll.u32 %v4854, %v4861
        %v4864 = vshrl.u32 %v4846, %v4862
        %v4865 = vor.u32 %v4863, %v4864
        %v4866 = vsub.s32 4294967266, %v4861
        %v4867 = vadd.s32 %v4866, 127
        %v4868 = vshll.u32 %v4867, 23
        %v4869 = vor.u32 4788187, %v4868
        %v4870 = vand.u32 2147483647, %v4869
        %v4872 = vcvt.s32.f32 %v4865
        %v4873 = vmul.f32 %v4872, %v4870
        %v4874 = vxor.u32 %v4873, 2147483648
        %v4875 = vsel %vm4792, %v4874, %v4873
        %v4876 = vsub.s32 4, %v4852
        %v4877 = vsel %vm4792, %v4876, %v4852
        %v4878 = vsel %vm4791, %v3848, %v4875
        %v4879 = vsel %vm4791, 0, %v4877
        %v4880 = vcosq.f32.pop %v4878
        %v4881 = vsinq.f32.pop %v4878
        %vm4882 = vweird.f32 %v3848
        %v4883 = vand.u32 %v4879, 3
        %vm4884 = vcmp.lt.s32.totalorder %v4883, 2
        %vm4885 = vcmp.eq.s32.totalorder %v4883, 0
        %v4886 = vxor.u32 %v4881, 2147483648
        %v4887 = vsel %vm4885, %v4880, %v4886
        %vm4888 = vcmp.eq.s32.totalorder %v4883, 2
        %v4889 = vxor.u32 %v4880, 2147483648
        %v4890 = vsel %vm4888, %v4889, %v4881
        %v4891 = vsel %vm4884, %v4887, %v4890
        %v4892 = vsel %vm4882, nan, %v4891
        %v4893 = vand.u32 2147483647, %v3849
        %vm4894 = vcmp.le.f32.partialorder %v4893, 0.7853982
        %vm4895 = vcmp.lt.s32.totalorder %v3849, 0
        %v4896 = vand.u32 %v3849, 2139095040
        %v4897 = vshrl.u32 %v4896, 23
        %v4898 = vsub.s32 %v4897, 127
        %v4899 = vand.u32 2147483647, %v3849
        %v4900 = vand.u32 %v4899, 8388607
        %v4901 = vor.u32 %v4900, 8388608
        %v4902 = vsub.s32 0, %v4901
        %v4903 = vadd.s32 %v4898, 1
        %vm4904 = vcmp.gt.s32.totalorder %v4903, 0
        %v4905 = vsel %vm4904, %v4903, 0
        %v4906 = vshrl.u32 %v4905, 5
        %v4907 = vand.u32 %v4905, 31
        %v4908 = vsub.s32 32, %v4907
        %v4909 = vshrl.u32 683565275, %v4908
        %v4910 = vshll.u32 683565275, %v4907
        %v4911 = vshrl.u32 2475754826, %v4908
        %v4912 = vor.u32 %v4910, %v4911
        %v4913 = vshll.u32 2475754826, %v4907
        %v4914 = vshrl.u32 2131351028, %v4908
        %v4915 = vor.u32 %v4913, %v4914
        %v4916 = vshll.u32 2131351028, %v4907
        %v4917 = vshrl.u32 2102212464, %v4908
        %v4918 = vor.u32 %v4916, %v4917
        %v4919 = vshll.u32 2102212464, %v4907
        %v4920 = vshrl.u32 920167782, %v4908
        %v4921 = vor.u32 %v4919, %v4920
        %v4922 = vshll.u32 920167782, %v4907
        %v4923 = vshrl.u32 1326507024, %v4908
        %v4924 = vor.u32 %v4922, %v4923
        %vm4925 = vcmp.lt.s32.totalorder %v4906, 1
        %vm4926 = vcmp.lt.s32.totalorder %v4906, 2
        %vm4927 = vcmp.lt.s32.totalorder %v4906, 3
        %vm4928 = vcmp.lt.s32.totalorder %v4906, 4
        %v4929 = vsel %vm4925, %v4909, %v4912
        %v4930 = vsel %vm4928, %v4918, 2102212464
        %v4931 = vsel %vm4927, %v4915, %v4930
        %v4932 = vsel %vm4926, %v4929, %v4931
        %v4933 = vsel %vm4925, %v4912, %v4915
        %v4934 = vsel %vm4928, %v4921, 920167782
        %v4935 = vsel %vm4927, %v4918, %v4934
        %v4936 = vsel %vm4926, %v4933, %v4935
        %v4937 = vsel %vm4925, %v4915, %v4918
        %v4938 = vsel %vm4928, %v4924, 1326507024
        %v4939 = vsel %vm4927, %v4921, %v4938
        %v4940 = vsel %vm4926, %v4937, %v4939
        %v4941 = vshll.u32 %v4901, 8
        %v4942 = vmul.u32.u64.compose %v4941, %v4940
        %v4943 = vextract.low.u32 %v4942
        %v4944 = vextract.high.u32 %v4942
        %v4945 = vmul.u32.u64.compose %v4941, %v4936
        %v4946 = vextract.low.u32 %v4945
        %v4947 = vextract.high.u32 %v4945
        %v4948 = vmul.u32 %v4941, %v4932
        %v4949 = vadd.s32 %v4944, %v4946
        %vm4950 = vc.u32 %v4944, %v4946
        %v4951 = vadd.s32 %v4947, 1
        %v4952 = vsel %vm4950, %v4951, %v4947
        %v4953 = vadd.s32 %v4948, %v4952
        %v4954 = vadd.s32 %v4953, 536870912
        %v4955 = vshrl.u32 %v4954, 30
        %v4956 = vshll.u32 %v4955, 30
        %v4957 = vsub.s32 %v4953, %v4956
        %vm4958 = vcmp.lt.s32.totalorder %v4957, 0
        %v4959 = vsub.s32 0, %v4957
        %v4960 = vsel %vm4958, %v4959, %v4957
        %v4961 = vclz %v4960
        %v4962 = vsub.s32 %v4961, 2
        %vm4963 = vcmp.gt.s32.totalorder 0, %v4962
        %v4964 = vsel %vm4963, 0, %v4962
        %v4965 = vsub.s32 32, %v4964
        %v4966 = vshll.u32 %v4957, %v4964
        %v4967 = vshrl.u32 %v4949, %v4965
        %v4968 = vor.u32 %v4966, %v4967
        %v4969 = vsub.s32 4294967266, %v4964
        %v4970 = vadd.s32 %v4969, 127
        %v4971 = vshll.u32 %v4970, 23
        %v4972 = vor.u32 4788187, %v4971
        %v4973 = vand.u32 2147483647, %v4972
        %v4975 = vcvt.s32.f32 %v4968
        %v4976 = vmul.f32 %v4975, %v4973
        %v4977 = vxor.u32 %v4976, 2147483648
        %v4978 = vsel %vm4895, %v4977, %v4976
        %v4979 = vsub.s32 4, %v4955
        %v4980 = vsel %vm4895, %v4979, %v4955
        %v4981 = vsel %vm4894, %v3849, %v4978
        %v4982 = vsel %vm4894, 0, %v4980
        %v4983 = vcosq.f32.pop %v4981
        %v4984 = vsinq.f32.pop %v4981
        %vm4985 = vweird.f32 %v3849
        %v4986 = vand.u32 %v4982, 3
        %vm4987 = vcmp.lt.s32.totalorder %v4986, 2
        %vm4988 = vcmp.eq.s32.totalorder %v4986, 0
        %v4989 = vxor.u32 %v4984, 2147483648
        %v4990 = vsel %vm4988, %v4983, %v4989
        %vm4991 = vcmp.eq.s32.totalorder %v4986, 2
        %v4992 = vxor.u32 %v4983, 2147483648
        %v4993 = vsel %vm4991, %v4992, %v4984
        %v4994 = vsel %vm4987, %v4990, %v4993
        %v4995 = vsel %vm4985, nan, %v4994
        %v4996 = vand.u32 2147483647, %v3850
        %vm4997 = vcmp.le.f32.partialorder %v4996, 0.7853982
        %vm4998 = vcmp.lt.s32.totalorder %v3850, 0
        %v4999 = vand.u32 %v3850, 2139095040
        %v5000 = vshrl.u32 %v4999, 23
        %v5001 = vsub.s32 %v5000, 127
        %v5002 = vand.u32 2147483647, %v3850
        %v5003 = vand.u32 %v5002, 8388607
        %v5004 = vor.u32 %v5003, 8388608
        %v5005 = vsub.s32 0, %v5004
        %v5006 = vadd.s32 %v5001, 1
        %vm5007 = vcmp.gt.s32.totalorder %v5006, 0
        %v5008 = vsel %vm5007, %v5006, 0
        %v5009 = vshrl.u32 %v5008, 5
        %v5010 = vand.u32 %v5008, 31
        %v5011 = vsub.s32 32, %v5010
        %v5012 = vshrl.u32 683565275, %v5011
        %v5013 = vshll.u32 683565275, %v5010
        %v5014 = vshrl.u32 2475754826, %v5011
        %v5015 = vor.u32 %v5013, %v5014
        %v5016 = vshll.u32 2475754826, %v5010
        %v5017 = vshrl.u32 2131351028, %v5011
        %v5018 = vor.u32 %v5016, %v5017
        %v5019 = vshll.u32 2131351028, %v5010
        %v5020 = vshrl.u32 2102212464, %v5011
        %v5021 = vor.u32 %v5019, %v5020
        %v5022 = vshll.u32 2102212464, %v5010
        %v5023 = vshrl.u32 920167782, %v5011
        %v5024 = vor.u32 %v5022, %v5023
        %v5025 = vshll.u32 920167782, %v5010
        %v5026 = vshrl.u32 1326507024, %v5011
        %v5027 = vor.u32 %v5025, %v5026
        %vm5028 = vcmp.lt.s32.totalorder %v5009, 1
        %vm5029 = vcmp.lt.s32.totalorder %v5009, 2
        %vm5030 = vcmp.lt.s32.totalorder %v5009, 3
        %vm5031 = vcmp.lt.s32.totalorder %v5009, 4
        %v5032 = vsel %vm5028, %v5012, %v5015
        %v5033 = vsel %vm5031, %v5021, 2102212464
        %v5034 = vsel %vm5030, %v5018, %v5033
        %v5035 = vsel %vm5029, %v5032, %v5034
        %v5036 = vsel %vm5028, %v5015, %v5018
        %v5037 = vsel %vm5031, %v5024, 920167782
        %v5038 = vsel %vm5030, %v5021, %v5037
        %v5039 = vsel %vm5029, %v5036, %v5038
        %v5040 = vsel %vm5028, %v5018, %v5021
        %v5041 = vsel %vm5031, %v5027, 1326507024
        %v5042 = vsel %vm5030, %v5024, %v5041
        %v5043 = vsel %vm5029, %v5040, %v5042
        %v5044 = vshll.u32 %v5004, 8
        %v5045 = vmul.u32.u64.compose %v5044, %v5043
        %v5046 = vextract.low.u32 %v5045
        %v5047 = vextract.high.u32 %v5045
        %v5048 = vmul.u32.u64.compose %v5044, %v5039
        %v5049 = vextract.low.u32 %v5048
        %v5050 = vextract.high.u32 %v5048
        %v5051 = vmul.u32 %v5044, %v5035
        %v5052 = vadd.s32 %v5047, %v5049
        %vm5053 = vc.u32 %v5047, %v5049
        %v5054 = vadd.s32 %v5050, 1
        %v5055 = vsel %vm5053, %v5054, %v5050
        %v5056 = vadd.s32 %v5051, %v5055
        %v5057 = vadd.s32 %v5056, 536870912
        %v5058 = vshrl.u32 %v5057, 30
        %v5059 = vshll.u32 %v5058, 30
        %v5060 = vsub.s32 %v5056, %v5059
        %vm5061 = vcmp.lt.s32.totalorder %v5060, 0
        %v5062 = vsub.s32 0, %v5060
        %v5063 = vsel %vm5061, %v5062, %v5060
        %v5064 = vclz %v5063
        %v5065 = vsub.s32 %v5064, 2
        %vm5066 = vcmp.gt.s32.totalorder 0, %v5065
        %v5067 = vsel %vm5066, 0, %v5065
        %v5068 = vsub.s32 32, %v5067
        %v5069 = vshll.u32 %v5060, %v5067
        %v5070 = vshrl.u32 %v5052, %v5068
        %v5071 = vor.u32 %v5069, %v5070
        %v5072 = vsub.s32 4294967266, %v5067
        %v5073 = vadd.s32 %v5072, 127
        %v5074 = vshll.u32 %v5073, 23
        %v5075 = vor.u32 4788187, %v5074
        %v5076 = vand.u32 2147483647, %v5075
        %v5078 = vcvt.s32.f32 %v5071
        %v5079 = vmul.f32 %v5078, %v5076
        %v5080 = vxor.u32 %v5079, 2147483648
        %v5081 = vsel %vm4998, %v5080, %v5079
        %v5082 = vsub.s32 4, %v5058
        %v5083 = vsel %vm4998, %v5082, %v5058
        %v5084 = vsel %vm4997, %v3850, %v5081
        %v5085 = vsel %vm4997, 0, %v5083
        %v5086 = vcosq.f32.pop %v5084
        %v5087 = vsinq.f32.pop %v5084
        %vm5088 = vweird.f32 %v3850
        %v5089 = vand.u32 %v5085, 3
        %vm5090 = vcmp.lt.s32.totalorder %v5089, 2
        %vm5091 = vcmp.eq.s32.totalorder %v5089, 0
        %v5092 = vxor.u32 %v5087, 2147483648
        %v5093 = vsel %vm5091, %v5086, %v5092
        %vm5094 = vcmp.eq.s32.totalorder %v5089, 2
        %v5095 = vxor.u32 %v5086, 2147483648
        %v5096 = vsel %vm5094, %v5095, %v5087
        %v5097 = vsel %vm5090, %v5093, %v5096
        %v5098 = vsel %vm5088, nan, %v5097
        %v5099 = vand.u32 2147483647, %v3851
        %vm5100 = vcmp.le.f32.partialorder %v5099, 0.7853982
        %vm5101 = vcmp.lt.s32.totalorder %v3851, 0
        %v5102 = vand.u32 %v3851, 2139095040
        %v5103 = vshrl.u32 %v5102, 23
        %v5104 = vsub.s32 %v5103, 127
        %v5105 = vand.u32 2147483647, %v3851
        %v5106 = vand.u32 %v5105, 8388607
        %v5107 = vor.u32 %v5106, 8388608
        %v5108 = vsub.s32 0, %v5107
        %v5109 = vadd.s32 %v5104, 1
        %vm5110 = vcmp.gt.s32.totalorder %v5109, 0
        %v5111 = vsel %vm5110, %v5109, 0
        %v5112 = vshrl.u32 %v5111, 5
        %v5113 = vand.u32 %v5111, 31
        %v5114 = vsub.s32 32, %v5113
        %v5115 = vshrl.u32 683565275, %v5114
        %v5116 = vshll.u32 683565275, %v5113
        %v5117 = vshrl.u32 2475754826, %v5114
        %v5118 = vor.u32 %v5116, %v5117
        %v5119 = vshll.u32 2475754826, %v5113
        %v5120 = vshrl.u32 2131351028, %v5114
        %v5121 = vor.u32 %v5119, %v5120
        %v5122 = vshll.u32 2131351028, %v5113
        %v5123 = vshrl.u32 2102212464, %v5114
        %v5124 = vor.u32 %v5122, %v5123
        %v5125 = vshll.u32 2102212464, %v5113
        %v5126 = vshrl.u32 920167782, %v5114
        %v5127 = vor.u32 %v5125, %v5126
        %v5128 = vshll.u32 920167782, %v5113
        %v5129 = vshrl.u32 1326507024, %v5114
        %v5130 = vor.u32 %v5128, %v5129
        %vm5131 = vcmp.lt.s32.totalorder %v5112, 1
        %vm5132 = vcmp.lt.s32.totalorder %v5112, 2
        %vm5133 = vcmp.lt.s32.totalorder %v5112, 3
        %vm5134 = vcmp.lt.s32.totalorder %v5112, 4
        %v5135 = vsel %vm5131, %v5115, %v5118
        %v5136 = vsel %vm5134, %v5124, 2102212464
        %v5137 = vsel %vm5133, %v5121, %v5136
        %v5138 = vsel %vm5132, %v5135, %v5137
        %v5139 = vsel %vm5131, %v5118, %v5121
        %v5140 = vsel %vm5134, %v5127, 920167782
        %v5141 = vsel %vm5133, %v5124, %v5140
        %v5142 = vsel %vm5132, %v5139, %v5141
        %v5143 = vsel %vm5131, %v5121, %v5124
        %v5144 = vsel %vm5134, %v5130, 1326507024
        %v5145 = vsel %vm5133, %v5127, %v5144
        %v5146 = vsel %vm5132, %v5143, %v5145
        %v5147 = vshll.u32 %v5107, 8
        %v5148 = vmul.u32.u64.compose %v5147, %v5146
        %v5149 = vextract.low.u32 %v5148
        %v5150 = vextract.high.u32 %v5148
        %v5151 = vmul.u32.u64.compose %v5147, %v5142
        %v5152 = vextract.low.u32 %v5151
        %v5153 = vextract.high.u32 %v5151
        %v5154 = vmul.u32 %v5147, %v5138
        %v5155 = vadd.s32 %v5150, %v5152
        %vm5156 = vc.u32 %v5150, %v5152
        %v5157 = vadd.s32 %v5153, 1
        %v5158 = vsel %vm5156, %v5157, %v5153
        %v5159 = vadd.s32 %v5154, %v5158
        %v5160 = vadd.s32 %v5159, 536870912
        %v5161 = vshrl.u32 %v5160, 30
        %v5162 = vshll.u32 %v5161, 30
        %v5163 = vsub.s32 %v5159, %v5162
        %vm5164 = vcmp.lt.s32.totalorder %v5163, 0
        %v5165 = vsub.s32 0, %v5163
        %v5166 = vsel %vm5164, %v5165, %v5163
        %v5167 = vclz %v5166
        %v5168 = vsub.s32 %v5167, 2
        %vm5169 = vcmp.gt.s32.totalorder 0, %v5168
        %v5170 = vsel %vm5169, 0, %v5168
        %v5171 = vsub.s32 32, %v5170
        %v5172 = vshll.u32 %v5163, %v5170
        %v5173 = vshrl.u32 %v5155, %v5171
        %v5174 = vor.u32 %v5172, %v5173
        %v5175 = vsub.s32 4294967266, %v5170
        %v5176 = vadd.s32 %v5175, 127
        %v5177 = vshll.u32 %v5176, 23
        %v5178 = vor.u32 4788187, %v5177
        %v5179 = vand.u32 2147483647, %v5178
        %v5181 = vcvt.s32.f32 %v5174
        %v5182 = vmul.f32 %v5181, %v5179
        %v5183 = vxor.u32 %v5182, 2147483648
        %v5184 = vsel %vm5101, %v5183, %v5182
        %v5185 = vsub.s32 4, %v5161
        %v5186 = vsel %vm5101, %v5185, %v5161
        %v5187 = vsel %vm5100, %v3851, %v5184
        %v5188 = vsel %vm5100, 0, %v5186
        %v5189 = vcosq.f32.pop %v5187
        %v5190 = vsinq.f32.pop %v5187
        %vm5191 = vweird.f32 %v3851
        %v5192 = vand.u32 %v5188, 3
        %vm5193 = vcmp.lt.s32.totalorder %v5192, 2
        %vm5194 = vcmp.eq.s32.totalorder %v5192, 0
        %v5195 = vxor.u32 %v5190, 2147483648
        %v5196 = vsel %vm5194, %v5189, %v5195
        %vm5197 = vcmp.eq.s32.totalorder %v5192, 2
        %v5198 = vxor.u32 %v5189, 2147483648
        %v5199 = vsel %vm5197, %v5198, %v5190
        %v5200 = vsel %vm5193, %v5196, %v5199
        %v5201 = vsel %vm5191, nan, %v5200
        %v5202 = vand.u32 2147483647, %v3852
        %vm5203 = vcmp.le.f32.partialorder %v5202, 0.7853982
        %vm5204 = vcmp.lt.s32.totalorder %v3852, 0
        %v5205 = vand.u32 %v3852, 2139095040
        %v5206 = vshrl.u32 %v5205, 23
        %v5207 = vsub.s32 %v5206, 127
        %v5208 = vand.u32 2147483647, %v3852
        %v5209 = vand.u32 %v5208, 8388607
        %v5210 = vor.u32 %v5209, 8388608
        %v5211 = vsub.s32 0, %v5210
        %v5212 = vadd.s32 %v5207, 1
        %vm5213 = vcmp.gt.s32.totalorder %v5212, 0
        %v5214 = vsel %vm5213, %v5212, 0
        %v5215 = vshrl.u32 %v5214, 5
        %v5216 = vand.u32 %v5214, 31
        %v5217 = vsub.s32 32, %v5216
        %v5218 = vshrl.u32 683565275, %v5217
        %v5219 = vshll.u32 683565275, %v5216
        %v5220 = vshrl.u32 2475754826, %v5217
        %v5221 = vor.u32 %v5219, %v5220
        %v5222 = vshll.u32 2475754826, %v5216
        %v5223 = vshrl.u32 2131351028, %v5217
        %v5224 = vor.u32 %v5222, %v5223
        %v5225 = vshll.u32 2131351028, %v5216
        %v5226 = vshrl.u32 2102212464, %v5217
        %v5227 = vor.u32 %v5225, %v5226
        %v5228 = vshll.u32 2102212464, %v5216
        %v5229 = vshrl.u32 920167782, %v5217
        %v5230 = vor.u32 %v5228, %v5229
        %v5231 = vshll.u32 920167782, %v5216
        %v5232 = vshrl.u32 1326507024, %v5217
        %v5233 = vor.u32 %v5231, %v5232
        %vm5234 = vcmp.lt.s32.totalorder %v5215, 1
        %vm5235 = vcmp.lt.s32.totalorder %v5215, 2
        %vm5236 = vcmp.lt.s32.totalorder %v5215, 3
        %vm5237 = vcmp.lt.s32.totalorder %v5215, 4
        %v5238 = vsel %vm5234, %v5218, %v5221
        %v5239 = vsel %vm5237, %v5227, 2102212464
        %v5240 = vsel %vm5236, %v5224, %v5239
        %v5241 = vsel %vm5235, %v5238, %v5240
        %v5242 = vsel %vm5234, %v5221, %v5224
        %v5243 = vsel %vm5237, %v5230, 920167782
        %v5244 = vsel %vm5236, %v5227, %v5243
        %v5245 = vsel %vm5235, %v5242, %v5244
        %v5246 = vsel %vm5234, %v5224, %v5227
        %v5247 = vsel %vm5237, %v5233, 1326507024
        %v5248 = vsel %vm5236, %v5230, %v5247
        %v5249 = vsel %vm5235, %v5246, %v5248
        %v5250 = vshll.u32 %v5210, 8
        %v5251 = vmul.u32.u64.compose %v5250, %v5249
        %v5252 = vextract.low.u32 %v5251
        %v5253 = vextract.high.u32 %v5251
        %v5254 = vmul.u32.u64.compose %v5250, %v5245
        %v5255 = vextract.low.u32 %v5254
        %v5256 = vextract.high.u32 %v5254
        %v5257 = vmul.u32 %v5250, %v5241
        %v5258 = vadd.s32 %v5253, %v5255
        %vm5259 = vc.u32 %v5253, %v5255
        %v5260 = vadd.s32 %v5256, 1
        %v5261 = vsel %vm5259, %v5260, %v5256
        %v5262 = vadd.s32 %v5257, %v5261
        %v5263 = vadd.s32 %v5262, 536870912
        %v5264 = vshrl.u32 %v5263, 30
        %v5265 = vshll.u32 %v5264, 30
        %v5266 = vsub.s32 %v5262, %v5265
        %vm5267 = vcmp.lt.s32.totalorder %v5266, 0
        %v5268 = vsub.s32 0, %v5266
        %v5269 = vsel %vm5267, %v5268, %v5266
        %v5270 = vclz %v5269
        %v5271 = vsub.s32 %v5270, 2
        %vm5272 = vcmp.gt.s32.totalorder 0, %v5271
        %v5273 = vsel %vm5272, 0, %v5271
        %v5274 = vsub.s32 32, %v5273
        %v5275 = vshll.u32 %v5266, %v5273
        %v5276 = vshrl.u32 %v5258, %v5274
        %v5277 = vor.u32 %v5275, %v5276
        %v5278 = vsub.s32 4294967266, %v5273
        %v5279 = vadd.s32 %v5278, 127
        %v5280 = vshll.u32 %v5279, 23
        %v5281 = vor.u32 4788187, %v5280
        %v5282 = vand.u32 2147483647, %v5281
        %v5284 = vcvt.s32.f32 %v5277
        %v5285 = vmul.f32 %v5284, %v5282
        %v5286 = vxor.u32 %v5285, 2147483648
        %v5287 = vsel %vm5204, %v5286, %v5285
        %v5288 = vsub.s32 4, %v5264
        %v5289 = vsel %vm5204, %v5288, %v5264
        %v5290 = vsel %vm5203, %v3852, %v5287
        %v5291 = vsel %vm5203, 0, %v5289
        %v5292 = vcosq.f32.pop %v5290
        %v5293 = vsinq.f32.pop %v5290
        %vm5294 = vweird.f32 %v3852
        %v5295 = vand.u32 %v5291, 3
        %vm5296 = vcmp.lt.s32.totalorder %v5295, 2
        %vm5297 = vcmp.eq.s32.totalorder %v5295, 0
        %v5298 = vxor.u32 %v5293, 2147483648
        %v5299 = vsel %vm5297, %v5292, %v5298
        %vm5300 = vcmp.eq.s32.totalorder %v5295, 2
        %v5301 = vxor.u32 %v5292, 2147483648
        %v5302 = vsel %vm5300, %v5301, %v5293
        %v5303 = vsel %vm5296, %v5299, %v5302
        %v5304 = vsel %vm5294, nan, %v5303
        %v5305 = vand.u32 2147483647, %v3853
        %vm5306 = vcmp.le.f32.partialorder %v5305, 0.7853982
        %vm5307 = vcmp.lt.s32.totalorder %v3853, 0
        %v5308 = vand.u32 %v3853, 2139095040
        %v5309 = vshrl.u32 %v5308, 23
        %v5310 = vsub.s32 %v5309, 127
        %v5311 = vand.u32 2147483647, %v3853
        %v5312 = vand.u32 %v5311, 8388607
        %v5313 = vor.u32 %v5312, 8388608
        %v5314 = vsub.s32 0, %v5313
        %v5315 = vadd.s32 %v5310, 1
        %vm5316 = vcmp.gt.s32.totalorder %v5315, 0
        %v5317 = vsel %vm5316, %v5315, 0
        %v5318 = vshrl.u32 %v5317, 5
        %v5319 = vand.u32 %v5317, 31
        %v5320 = vsub.s32 32, %v5319
        %v5321 = vshrl.u32 683565275, %v5320
        %v5322 = vshll.u32 683565275, %v5319
        %v5323 = vshrl.u32 2475754826, %v5320
        %v5324 = vor.u32 %v5322, %v5323
        %v5325 = vshll.u32 2475754826, %v5319
        %v5326 = vshrl.u32 2131351028, %v5320
        %v5327 = vor.u32 %v5325, %v5326
        %v5328 = vshll.u32 2131351028, %v5319
        %v5329 = vshrl.u32 2102212464, %v5320
        %v5330 = vor.u32 %v5328, %v5329
        %v5331 = vshll.u32 2102212464, %v5319
        %v5332 = vshrl.u32 920167782, %v5320
        %v5333 = vor.u32 %v5331, %v5332
        %v5334 = vshll.u32 920167782, %v5319
        %v5335 = vshrl.u32 1326507024, %v5320
        %v5336 = vor.u32 %v5334, %v5335
        %vm5337 = vcmp.lt.s32.totalorder %v5318, 1
        %vm5338 = vcmp.lt.s32.totalorder %v5318, 2
        %vm5339 = vcmp.lt.s32.totalorder %v5318, 3
        %vm5340 = vcmp.lt.s32.totalorder %v5318, 4
        %v5341 = vsel %vm5337, %v5321, %v5324
        %v5342 = vsel %vm5340, %v5330, 2102212464
        %v5343 = vsel %vm5339, %v5327, %v5342
        %v5344 = vsel %vm5338, %v5341, %v5343
        %v5345 = vsel %vm5337, %v5324, %v5327
        %v5346 = vsel %vm5340, %v5333, 920167782
        %v5347 = vsel %vm5339, %v5330, %v5346
        %v5348 = vsel %vm5338, %v5345, %v5347
        %v5349 = vsel %vm5337, %v5327, %v5330
        %v5350 = vsel %vm5340, %v5336, 1326507024
        %v5351 = vsel %vm5339, %v5333, %v5350
        %v5352 = vsel %vm5338, %v5349, %v5351
        %v5353 = vshll.u32 %v5313, 8
        %v5354 = vmul.u32.u64.compose %v5353, %v5352
        %v5355 = vextract.low.u32 %v5354
        %v5356 = vextract.high.u32 %v5354
        %v5357 = vmul.u32.u64.compose %v5353, %v5348
        %v5358 = vextract.low.u32 %v5357
        %v5359 = vextract.high.u32 %v5357
        %v5360 = vmul.u32 %v5353, %v5344
        %v5361 = vadd.s32 %v5356, %v5358
        %vm5362 = vc.u32 %v5356, %v5358
        %v5363 = vadd.s32 %v5359, 1
        %v5364 = vsel %vm5362, %v5363, %v5359
        %v5365 = vadd.s32 %v5360, %v5364
        %v5366 = vadd.s32 %v5365, 536870912
        %v5367 = vshrl.u32 %v5366, 30
        %v5368 = vshll.u32 %v5367, 30
        %v5369 = vsub.s32 %v5365, %v5368
        %vm5370 = vcmp.lt.s32.totalorder %v5369, 0
        %v5371 = vsub.s32 0, %v5369
        %v5372 = vsel %vm5370, %v5371, %v5369
        %v5373 = vclz %v5372
        %v5374 = vsub.s32 %v5373, 2
        %vm5375 = vcmp.gt.s32.totalorder 0, %v5374
        %v5376 = vsel %vm5375, 0, %v5374
        %v5377 = vsub.s32 32, %v5376
        %v5378 = vshll.u32 %v5369, %v5376
        %v5379 = vshrl.u32 %v5361, %v5377
        %v5380 = vor.u32 %v5378, %v5379
        %v5381 = vsub.s32 4294967266, %v5376
        %v5382 = vadd.s32 %v5381, 127
        %v5383 = vshll.u32 %v5382, 23
        %v5384 = vor.u32 4788187, %v5383
        %v5385 = vand.u32 2147483647, %v5384
        %v5387 = vcvt.s32.f32 %v5380
        %v5388 = vmul.f32 %v5387, %v5385
        %v5389 = vxor.u32 %v5388, 2147483648
        %v5390 = vsel %vm5307, %v5389, %v5388
        %v5391 = vsub.s32 4, %v5367
        %v5392 = vsel %vm5307, %v5391, %v5367
        %v5393 = vsel %vm5306, %v3853, %v5390
        %v5394 = vsel %vm5306, 0, %v5392
        %v5395 = vcosq.f32.pop %v5393
        %v5396 = vsinq.f32.pop %v5393
        %vm5397 = vweird.f32 %v3853
        %v5398 = vand.u32 %v5394, 3
        %vm5399 = vcmp.lt.s32.totalorder %v5398, 2
        %vm5400 = vcmp.eq.s32.totalorder %v5398, 0
        %v5401 = vxor.u32 %v5396, 2147483648
        %v5402 = vsel %vm5400, %v5395, %v5401
        %vm5403 = vcmp.eq.s32.totalorder %v5398, 2
        %v5404 = vxor.u32 %v5395, 2147483648
        %v5405 = vsel %vm5403, %v5404, %v5396
        %v5406 = vsel %vm5399, %v5402, %v5405
        %v5407 = vsel %vm5397, nan, %v5406
        %v5408 = vand.u32 2147483647, %v3854
        %vm5409 = vcmp.le.f32.partialorder %v5408, 0.7853982
        %vm5410 = vcmp.lt.s32.totalorder %v3854, 0
        %v5411 = vand.u32 %v3854, 2139095040
        %v5412 = vshrl.u32 %v5411, 23
        %v5413 = vsub.s32 %v5412, 127
        %v5414 = vand.u32 2147483647, %v3854
        %v5415 = vand.u32 %v5414, 8388607
        %v5416 = vor.u32 %v5415, 8388608
        %v5417 = vsub.s32 0, %v5416
        %v5418 = vadd.s32 %v5413, 1
        %vm5419 = vcmp.gt.s32.totalorder %v5418, 0
        %v5420 = vsel %vm5419, %v5418, 0
        %v5421 = vshrl.u32 %v5420, 5
        %v5422 = vand.u32 %v5420, 31
        %v5423 = vsub.s32 32, %v5422
        %v5424 = vshrl.u32 683565275, %v5423
        %v5425 = vshll.u32 683565275, %v5422
        %v5426 = vshrl.u32 2475754826, %v5423
        %v5427 = vor.u32 %v5425, %v5426
        %v5428 = vshll.u32 2475754826, %v5422
        %v5429 = vshrl.u32 2131351028, %v5423
        %v5430 = vor.u32 %v5428, %v5429
        %v5431 = vshll.u32 2131351028, %v5422
        %v5432 = vshrl.u32 2102212464, %v5423
        %v5433 = vor.u32 %v5431, %v5432
        %v5434 = vshll.u32 2102212464, %v5422
        %v5435 = vshrl.u32 920167782, %v5423
        %v5436 = vor.u32 %v5434, %v5435
        %v5437 = vshll.u32 920167782, %v5422
        %v5438 = vshrl.u32 1326507024, %v5423
        %v5439 = vor.u32 %v5437, %v5438
        %vm5440 = vcmp.lt.s32.totalorder %v5421, 1
        %vm5441 = vcmp.lt.s32.totalorder %v5421, 2
        %vm5442 = vcmp.lt.s32.totalorder %v5421, 3
        %vm5443 = vcmp.lt.s32.totalorder %v5421, 4
        %v5444 = vsel %vm5440, %v5424, %v5427
        %v5445 = vsel %vm5443, %v5433, 2102212464
        %v5446 = vsel %vm5442, %v5430, %v5445
        %v5447 = vsel %vm5441, %v5444, %v5446
        %v5448 = vsel %vm5440, %v5427, %v5430
        %v5449 = vsel %vm5443, %v5436, 920167782
        %v5450 = vsel %vm5442, %v5433, %v5449
        %v5451 = vsel %vm5441, %v5448, %v5450
        %v5452 = vsel %vm5440, %v5430, %v5433
        %v5453 = vsel %vm5443, %v5439, 1326507024
        %v5454 = vsel %vm5442, %v5436, %v5453
        %v5455 = vsel %vm5441, %v5452, %v5454
        %v5456 = vshll.u32 %v5416, 8
        %v5457 = vmul.u32.u64.compose %v5456, %v5455
        %v5458 = vextract.low.u32 %v5457
        %v5459 = vextract.high.u32 %v5457
        %v5460 = vmul.u32.u64.compose %v5456, %v5451
        %v5461 = vextract.low.u32 %v5460
        %v5462 = vextract.high.u32 %v5460
        %v5463 = vmul.u32 %v5456, %v5447
        %v5464 = vadd.s32 %v5459, %v5461
        %vm5465 = vc.u32 %v5459, %v5461
        %v5466 = vadd.s32 %v5462, 1
        %v5467 = vsel %vm5465, %v5466, %v5462
        %v5468 = vadd.s32 %v5463, %v5467
        %v5469 = vadd.s32 %v5468, 536870912
        %v5470 = vshrl.u32 %v5469, 30
        %v5471 = vshll.u32 %v5470, 30
        %v5472 = vsub.s32 %v5468, %v5471
        %vm5473 = vcmp.lt.s32.totalorder %v5472, 0
        %v5474 = vsub.s32 0, %v5472
        %v5475 = vsel %vm5473, %v5474, %v5472
        %v5476 = vclz %v5475
        %v5477 = vsub.s32 %v5476, 2
        %vm5478 = vcmp.gt.s32.totalorder 0, %v5477
        %v5479 = vsel %vm5478, 0, %v5477
        %v5480 = vsub.s32 32, %v5479
        %v5481 = vshll.u32 %v5472, %v5479
        %v5482 = vshrl.u32 %v5464, %v5480
        %v5483 = vor.u32 %v5481, %v5482
        %v5484 = vsub.s32 4294967266, %v5479
        %v5485 = vadd.s32 %v5484, 127
        %v5486 = vshll.u32 %v5485, 23
        %v5487 = vor.u32 4788187, %v5486
        %v5488 = vand.u32 2147483647, %v5487
        %v5490 = vcvt.s32.f32 %v5483
        %v5491 = vmul.f32 %v5490, %v5488
        %v5492 = vxor.u32 %v5491, 2147483648
        %v5493 = vsel %vm5410, %v5492, %v5491
        %v5494 = vsub.s32 4, %v5470
        %v5495 = vsel %vm5410, %v5494, %v5470
        %v5496 = vsel %vm5409, %v3854, %v5493
        %v5497 = vsel %vm5409, 0, %v5495
        %v5498 = vcosq.f32.pop %v5496
        %v5499 = vsinq.f32.pop %v5496
        %vm5500 = vweird.f32 %v3854
        %v5501 = vand.u32 %v5497, 3
        %vm5502 = vcmp.lt.s32.totalorder %v5501, 2
        %vm5503 = vcmp.eq.s32.totalorder %v5501, 0
        %v5504 = vxor.u32 %v5499, 2147483648
        %v5505 = vsel %vm5503, %v5498, %v5504
        %vm5506 = vcmp.eq.s32.totalorder %v5501, 2
        %v5507 = vxor.u32 %v5498, 2147483648
        %v5508 = vsel %vm5506, %v5507, %v5499
        %v5509 = vsel %vm5502, %v5505, %v5508
        %v5510 = vsel %vm5500, nan, %v5509
        %s5511 = sadd.s32 %s138, 136
        %s5512 = smul.addr %s5511, 8
        %s5513 = scalar_lea.vmem %s135, %s5512 [#allocation5]
        %5514 = vst [vmem:[%s5513] sm:$0xff] %v3958
        %5515 = vst [vmem:[%s5513 + $0x8] sm:$0xff] %v4062
        %5516 = vst [vmem:[%s5513 + $0x10] sm:$0xff] %v4166
        %5517 = vst [vmem:[%s5513 + $0x18] sm:$0xff] %v4270
        %5518 = vst [vmem:[%s5513 + $0x20] sm:$0xff] %v4374
        %5519 = vst [vmem:[%s5513 + $0x28] sm:$0xff] %v4478
        %5520 = vst [vmem:[%s5513 + $0x30] sm:$0xff] %v4582
        %5521 = vst [vmem:[%s5513 + $0x38] sm:$0xff] %v4686
        %s5522 = sadd.s32 %s138, 144
        %s5523 = smul.addr %s5522, 8
        %s5524 = scalar_lea.vmem %s135, %s5523 [#allocation5]
        %5525 = vst [vmem:[%s5524] sm:$0xff] %v4789
        %5526 = vst [vmem:[%s5524 + $0x8] sm:$0xff] %v4892
        %5527 = vst [vmem:[%s5524 + $0x10] sm:$0xff] %v4995
        %5528 = vst [vmem:[%s5524 + $0x18] sm:$0xff] %v5098
        %5529 = vst [vmem:[%s5524 + $0x20] sm:$0xff] %v5201
        %5530 = vst [vmem:[%s5524 + $0x28] sm:$0xff] %v5304
        %5531 = vst [vmem:[%s5524 + $0x30] sm:$0xff] %v5407
        %5532 = vst [vmem:[%s5524 + $0x38] sm:$0xff] %v5510
        %v5533 = vmul.f32 %v3958, 2.0
        %v5534 = vmul.f32 %v4062, 2.0
        %v5535 = vmul.f32 %v4166, 2.0
        %v5536 = vmul.f32 %v4270, 2.0
        %v5537 = vmul.f32 %v4374, 2.0
        %v5538 = vmul.f32 %v4478, 2.0
        %v5539 = vmul.f32 %v4582, 2.0
        %v5540 = vmul.f32 %v4686, 2.0
        %v5541 = vmul.f32 %v5533, %v4789
        %v5542 = vmul.f32 %v5534, %v4892
        %v5543 = vmul.f32 %v5535, %v4995
        %v5544 = vmul.f32 %v5536, %v5098
        %v5545 = vmul.f32 %v5537, %v5201
        %v5546 = vmul.f32 %v5538, %v5304
        %v5547 = vmul.f32 %v5539, %v5407
        %v5548 = vmul.f32 %v5540, %v5510
        %v5549 = vmul.f32 %v5533, %v3958
        %v5550 = vmul.f32 %v5534, %v4062
        %v5551 = vmul.f32 %v5535, %v4166
        %v5552 = vmul.f32 %v5536, %v4270
        %v5553 = vmul.f32 %v5537, %v4374
        %v5554 = vmul.f32 %v5538, %v4478
        %v5555 = vmul.f32 %v5539, %v4582
        %v5556 = vmul.f32 %v5540, %v4686
        %v5557 = vsub.f32 1.0, %v5549
        %v5558 = vsub.f32 1.0, %v5550
        %v5559 = vsub.f32 1.0, %v5551
        %v5560 = vsub.f32 1.0, %v5552
        %v5561 = vsub.f32 1.0, %v5553
        %v5562 = vsub.f32 1.0, %v5554
        %v5563 = vsub.f32 1.0, %v5555
        %v5564 = vsub.f32 1.0, %v5556
        %s5565 = sadd.s32 %s138, 152
        %s5566 = smul.addr %s5565, 8
        %s5567 = scalar_lea.vmem %s135, %s5566 [#allocation5]
        %5568 = vst [vmem:[%s5567] sm:$0xff] %v5541
        %5569 = vst [vmem:[%s5567 + $0x8] sm:$0xff] %v5542
        %5570 = vst [vmem:[%s5567 + $0x10] sm:$0xff] %v5543
        %5571 = vst [vmem:[%s5567 + $0x18] sm:$0xff] %v5544
        %5572 = vst [vmem:[%s5567 + $0x20] sm:$0xff] %v5545
        %5573 = vst [vmem:[%s5567 + $0x28] sm:$0xff] %v5546
        %5574 = vst [vmem:[%s5567 + $0x30] sm:$0xff] %v5547
        %5575 = vst [vmem:[%s5567 + $0x38] sm:$0xff] %v5548
        %s5576 = sadd.s32 %s138, 160
        %s5577 = smul.addr %s5576, 8
        %s5578 = scalar_lea.vmem %s135, %s5577 [#allocation5]
        %5579 = vst [vmem:[%s5578] sm:$0xff] %v5557
        %5580 = vst [vmem:[%s5578 + $0x8] sm:$0xff] %v5558
        %5581 = vst [vmem:[%s5578 + $0x10] sm:$0xff] %v5559
        %5582 = vst [vmem:[%s5578 + $0x18] sm:$0xff] %v5560
        %5583 = vst [vmem:[%s5578 + $0x20] sm:$0xff] %v5561
        %5584 = vst [vmem:[%s5578 + $0x28] sm:$0xff] %v5562
        %5585 = vst [vmem:[%s5578 + $0x30] sm:$0xff] %v5563
        %5586 = vst [vmem:[%s5578 + $0x38] sm:$0xff] %v5564
        %s5587 = sand.u32 %s52, 1
        %s5588 = scalar_lea.sflag [#allocation4], %s5587
        %s5589 = sand.u32 %s52, 1
        %s5590 = smul.addr %s5589, 1344
        %s5591 = scalar_lea.vmem [#allocation5], %s5590
        // Predicated region
        $region29: #{tpu_custom_call.1} parent=23 // pred_check
          %p5592 = pneg %p62
        $region30: #{tpu_custom_call.1} parent=23 // pred_check_branch
          %5594 = sbr.rel (%p5592) target = $region32
        $region31: #{tpu_custom_call.1} parent=23 // pred_region
          #allocation7 [shape = 'u32[6]{0}', space=smem, size = 0x18, scoped, tag = 'DMA stride descriptor']
          %s5595 = smul.u32 2, %s18
          %s5597 = ssub.s32 21504, 21504
          %5598 = vsyncadd %s5588, %s5597
          %s5599 = smul.addr %s5595, 4
          %s5600 = smul.addr %s5599, 128
          %s5601 = scalar_lea.hbm %s1, %s5600
          %s5603 = sshll.u32 1, 14
          %s5604 = sxor.u32 4294967295, %s5603
          %s5607 = sshll.u32 7, 18
          %s5608 = sxor.u32 4294967295, %s5607
          %s5609 = sand.u32 0, %s5608
          %s5611 = sor.u32 %s5609, 0
          %s5612 = sshll.u32 %s5591, 4
          %s5613 = int_to_ptr.vmem [resolvable:$true] %s5612
          %5619 = sst [smem:[#allocation7]] 1024
          %s5620 = scalar_lea.smem [#allocation7], 1
          %5621 = sst [smem:[%s5620]] 2048
          %s5622 = scalar_lea.smem [#allocation7], 2
          %5623 = sst [smem:[%s5622]] 2
          %s5624 = scalar_lea.smem [#allocation7], 3
          %5625 = sst [smem:[%s5624]] 512
          %s5626 = scalar_lea.smem [#allocation7], 4
          %5627 = sst [smem:[%s5626]] 512
          %s5628 = scalar_lea.smem [#allocation7], 5
          %5629 = sst [smem:[%s5628]] 32
          %5631 = dma.general %s5613, 21504, %s5601, %s5588, 131072, [#allocation7], %s5611, 0
        $region32: #{tpu_custom_call.1} parent=23 // pred_fallthru
          _
      $region24: #{tpu_custom_call.1} parent=5 // pred_fallthru
        _
      %p5632 = scmp.le.s32.totalorder 2, %s13
      // Predicated region
      $region33: #{tpu_custom_call.1} parent=5 // pred_check
        %p5633 = pneg %p5632
      $region34: #{tpu_custom_call.1} parent=5 // pred_check_branch
        %5635 = sbr.rel (%p5633) target = $region36
      $region35: #{tpu_custom_call.1} parent=5 // pred_region
        %s5636 = ssub.s32 %s13, 2
        // Predicated region
        $region37: #{tpu_custom_call.1} parent=35 // pred_check
          %p5637 = pneg %p68
        $region38: #{tpu_custom_call.1} parent=35 // pred_check_branch
          %5639 = sbr.rel (%p5637) target = $region40
        $region39: #{tpu_custom_call.1} parent=35 // pred_region
          %s5640 = sand.u32 %s53, 1
          %s5641 = scalar_lea.sflag [#allocation4], %s5640
          %s5642 = sand.u32 %s53, 1
          %s5643 = smul.addr %s5642, 1344
          %s5644 = scalar_lea.vmem [#allocation5], %s5643
          %5645 = dma.done %s5641, 21504
        $region40: #{tpu_custom_call.1} parent=35 // pred_fallthru
          _
      $region36: #{tpu_custom_call.1} parent=5 // pred_fallthru
        _
    $region6: #{tpu_custom_call.1} parent=1 // loop_footer
      %s17 = sadd.s32 1, %s13
    $region7: #{tpu_custom_call.1} parent=1 // loop_footer_branch
      %12 = sbr.rel target = $region3
    $region8: #{tpu_custom_call.1} parent=1 // loop_exit
      _
    %5646 = vsyncpa [#allocation3], 1
    %s5647 = scalar_lea.sflag [#allocation3], 1
    %5648 = vsyncpa %s5647, 1
    %5649 = vsyncpa [#allocation4], 1
    %s5650 = scalar_lea.sflag [#allocation4], 1
    %5651 = vsyncpa %s5650, 1

</llo_original>
